<compile_context>
chip_gen: v7x
topology: tpu7x:2x2x1
jax: 0.10.0
libtpu: 0.0.40
codegen_flags: <defaults>
</compile_context>

<pallas_src>
import functools
import math

import jax
import jax.numpy as jnp
from jax.experimental import pallas as pl
from jax.experimental.pallas import tpu as pltpu


# -----------------------------------------------------------------------------
# Model configuration (standard YOLOv3 / Darknet-53 layout, i.e. what the
# PyTorch module reads from `config.MODEL_CONFIG`).
# -----------------------------------------------------------------------------
MODEL_CONFIG = [
    # backbone: (out_channels, kernel_size, stride) or ("res", num_blocks)
    [
        (32, 3, 1),
        (64, 3, 2),
        ("res", 1),
        (128, 3, 2),
        ("res", 2),
        (256, 3, 2),
        ("res", 8),
        (512, 3, 2),
        ("res", 8),
        (1024, 3, 2),
        ("res", 4),
    ],
    # head: ("conv", out, k, stride) / ("convblock", n) / ("upsample", sf, cat_ch)
    #       / ("detection",)
    [
        ("conv", 512, 1, 1),
        ("convblock", 1),
        ("detection",),
        ("conv", 256, 1, 1),
        ("upsample", 2, 512),
        ("conv", 256, 1, 1),
        ("convblock", 1),
        ("detection",),
        ("conv", 128, 1, 1),
        ("upsample", 2, 256),
        ("conv", 128, 1, 1),
        ("convblock", 1),
        ("detection",),
    ],
]

BN_EPS = 1e-5
LEAKY_SLOPE = 0.1
VMEM_LIMIT_BYTES = 64 * 1024 * 1024   # explicit scoped-VMEM limit (v5e default is 16 MiB)


def _round_up(v, m):
    return ((v + m - 1) // m) * m


def _pick_tile(dim, cap):
    """Largest 128-multiple <= cap that divides dim; dim itself if not 128-mult."""
    if dim % 128 != 0:
        return dim
    c = (cap // 128) * 128
    while c >= 128:
        if dim % c == 0:
            return c
        c -= 128
    return 128


# -----------------------------------------------------------------------------
# Pallas kernel 1: fused GEMM (+bias, +LeakyReLU, +residual).
# Grid = (M tiles, N tiles, K tiles); K is the reduction axis (last,
# "arbitrary"); partial products accumulate into an f32 VMEM scratch and are
# cast to bf16 only in the final-K epilogue.
# -----------------------------------------------------------------------------
def _gemm_kernel(*refs, leaky, has_res):
    if has_res:
        x_ref, w_ref, b_ref, r_ref, o_ref, acc_ref = refs
    else:
        x_ref, w_ref, b_ref, o_ref, acc_ref = refs
        r_ref = None

    kk = pl.program_id(2)

    @pl.when(kk == 0)
    def _():
        acc_ref[...] = jnp.zeros_like(acc_ref)

    acc_ref[...] += jnp.dot(x_ref[...], w_ref[...],
                            preferred_element_type=jnp.float32)

    @pl.when(kk == pl.num_programs(2) - 1)
    def _():
        y = acc_ref[...] + b_ref[...]
        if leaky:
            y = jnp.where(y > 0, y, LEAKY_SLOPE * y)
        if has_res:
            y = y + r_ref[...].astype(jnp.float32)
        o_ref[...] = y.astype(o_ref.dtype)


def fused_gemm(x, w, bias, *, leaky, residual=None):
    """out = act(x @ w + bias) (+ residual).  x:(M,K) bf16, w:(K,N) bf16 with
    BN scale pre-folded, bias:(1,N) f32, residual:(M,N) bf16.  Returns bf16."""
    M, K = x.shape
    N = w.shape[1]

    tk = _pick_tile(K, 1024)          # divisor of K -> no K over-padding
    tn = _pick_tile(N, 512)
    tm = min(M, 1024)
    # v7x: keep >= 2 blocks across the parallel axes so both TensorCores get
    # work; harmless (slightly smaller tiles) on single-core v5e/v6e.
    if (M // tm) * (N // tn) < 2:
        if tm >= 512 and tm % 16 == 0:
            tm //= 2
        elif tn > 128 and tn % 256 == 0:
            tn //= 2

    Mp = _round_up(M, tm)
    if Mp != M:
        x = jnp.pad(x, ((0, Mp - M), (0, 0)))
        if residual is not None:
            residual = jnp.pad(residual, ((0, Mp - M), (0, 0)))

    has_res = residual is not None
    inputs = [x, w, bias]
    in_specs = [
        pl.BlockSpec((tm, tk), lambda i, j, kk: (i, kk)),
        pl.BlockSpec((tk, tn), lambda i, j, kk: (kk, j)),
        pl.BlockSpec((1, tn), lambda i, j, kk: (0, j)),
    ]
    if has_res:
        inputs.append(residual)                       # bf16, fetched once per (i,j)
        in_specs.append(pl.BlockSpec((tm, tn), lambda i, j, kk: (i, j)))

    grid = (Mp // tm, N // tn, K // tk)
    out = pl.pallas_call(
        functools.partial(_gemm_kernel, leaky=leaky, has_res=has_res),
        out_shape=jax.ShapeDtypeStruct((Mp, N), jnp.bfloat16),
        grid_spec=pltpu.PrefetchScalarGridSpec(
            num_scalar_prefetch=0,
            grid=grid,
            in_specs=in_specs,
            out_specs=pl.BlockSpec((tm, tn), lambda i, j, kk: (i, j)),
            scratch_shapes=[pltpu.VMEM((tm, tn), jnp.float32)],
        ),
        compiler_params=pltpu.CompilerParams(
            dimension_semantics=("parallel", "parallel", "arbitrary"),
            vmem_limit_bytes=VMEM_LIMIT_BYTES),
    )(*inputs)
    if Mp != M:
        out = out[:M]
    return out


# -----------------------------------------------------------------------------
# Pallas kernel 2: direct (implicit-im2col) stride-1 convolution.
# Grid = (batch, Cout tiles, Cin tiles); Cin is the reduction axis (last,
# "arbitrary").  The kernel holds the padded spatial slab for one batch /
# Cin tile; W tap shifts are one hoisted W-strip slice per kw, H tap shifts are
# layout-free slices; partials accumulate into an f32 VMEM scratch.
# -----------------------------------------------------------------------------
def _direct_conv_kernel(*refs, keff, Ho, Wo, leaky, has_res):
    if has_res:
        x_ref, w_ref, b_ref, r_ref, o_ref, acc_ref = refs
    else:
        x_ref, w_ref, b_ref, o_ref, acc_ref = refs
        r_ref = None

    ci = pl.program_id(2)

    @pl.when(ci == 0)
    def _():
        acc_ref[...] = jnp.zeros_like(acc_ref)

    cin_t = x_ref.shape[3]
    M = Ho * Wo
    acc = None
    for j in range(keff):
        # ONE sublane-misaligned W-strip slice per kw column (hoisted out of
        # the kh loop: keff relayouts per Cin tile instead of keff**2).
        xj = x_ref[:, :, j:j + Wo, :]                  # (1, Hp, Wo, cin_t)
        for i in range(keff):
            # H slice + reshape are layout-free because Wo % 8 == 0.
            xs = xj[:, i:i + Ho].reshape(M, cin_t)
            part = jnp.dot(xs, w_ref[i * keff + j],
                           preferred_element_type=jnp.float32)
            acc = part if acc is None else acc + part
    acc_ref[...] += acc

    @pl.when(ci == pl.num_programs(2) - 1)
    def _():
        y = acc_ref[...] + b_ref[...]
        if leaky:
            y = jnp.where(y > 0, y, LEAKY_SLOPE * y)
        if has_res:
            y = y + r_ref[...].astype(jnp.float32)
        o_ref[...] = y.astype(o_ref.dtype)


def direct_conv(xp, w_taps, bias, Ho, Wo, keff, *, leaky, residual=None):
    """xp: (B, Ho+keff-1, Wo+keff-1, Cin) bf16 (already spatially padded /
    space-to-depth'd).  w_taps: (keff*keff, Cin, Cout) bf16 (scale folded).
    bias: (1, Cout) f32.  residual: (B*Ho*Wo, Cout) bf16.
    Returns (B*Ho*Wo, Cout) bf16."""
    B, Hp, Wp, Cin = xp.shape
    T, _, Cout = w_taps.shape
    Msub = Ho * Wo
    M = B * Msub

    cin_t = _pick_tile(Cin, 512)
    cout_t = _pick_tile(Cout, 512)
    n_ci = Cin // cin_t
    n_co = Cout // cout_t

    has_res = residual is not None
    inputs = [xp, w_taps, bias]
    in_specs = [
        pl.BlockSpec((1, Hp, Wp, cin_t), lambda b, co, ci: (b, 0, 0, ci)),
        pl.BlockSpec((T, cin_t, cout_t), lambda b, co, ci: (0, ci, co)),
        pl.BlockSpec((1, cout_t), lambda b, co, ci: (0, co)),
    ]
    if has_res:
        inputs.append(residual)                        # bf16
        in_specs.append(pl.BlockSpec((Msub, cout_t), lambda b, co, ci: (b, co)))

    out = pl.pallas_call(
        functools.partial(_direct_conv_kernel, keff=keff, Ho=Ho, Wo=Wo,
                          leaky=leaky, has_res=has_res),
        out_shape=jax.ShapeDtypeStruct((M, Cout), jnp.bfloat16),
        grid_spec=pltpu.PrefetchScalarGridSpec(
            num_scalar_prefetch=0,
            grid=(B, n_co, n_ci),
            in_specs=in_specs,
            out_specs=pl.BlockSpec((Msub, cout_t), lambda b, co, ci: (b, co)),
            scratch_shapes=[pltpu.VMEM((Msub, cout_t), jnp.float32)],
        ),
        compiler_params=pltpu.CompilerParams(
            dimension_semantics=("parallel", "parallel", "arbitrary"),
            vmem_limit_bytes=VMEM_LIMIT_BYTES),
    )(*inputs)
    return out


# -----------------------------------------------------------------------------
# Glue: im2col (only for tiny small-spatial layers / the 3-channel stem conv)
# and the per-layer conv wrapper.
# -----------------------------------------------------------------------------
def _im2col(x, kh, kw, stride, padding):
    """x: (B,H,W,C) -> patches (B*Ho*Wo, kh*kw*C), Ho, Wo (tap-major cols)."""
    B, H, W, C = x.shape
    if padding > 0:
        x = jnp.pad(x, ((0, 0), (padding, padding), (padding, padding), (0, 0)))
    Ho = (H + 2 * padding - kh) // stride + 1
    Wo = (W + 2 * padding - kw) // stride + 1
    cols = []
    for i in range(kh):
        for j in range(kw):
            cols.append(
                x[:, i:i + stride * Ho:stride, j:j + stride * Wo:stride, :])
    p = jnp.stack(cols, axis=3)  # (B, Ho, Wo, kh*kw, C)
    return p.reshape(B * Ho * Wo, kh * kw * C), Ho, Wo


def conv_forward(x, p, residual=None):
    """x: (B,H,W,Cin) bf16 NHWC.  Residual (NHWC, bf16) is added after the
    activation.  Returns bf16 NHWC."""
    B, H, W, C = x.shape
    k, s, pad = p["k"], p["stride"], p["pad"]
    Ho = (H + 2 * pad - k) // s + 1
    Wo = (W + 2 * pad - k) // s + 1
    cout = p["cout"]
    res2d = None if residual is None else residual.reshape(B * Ho * Wo, cout)

    if p["mode"] == "direct":
        xp = x
        if pad:
            # TODO(synk): fold this halo pad (and the s2d relayout below) into
            # the producing kernel's out_spec to save an activation round trip.
            xp = jnp.pad(xp, ((0, 0), (pad, pad), (pad, pad), (0, 0)))
        if p["s2d"]:
            # stride-2 3x3 conv -> stride-1 2x2 conv via space-to-depth.
            _, Hp, Wp, Cp = xp.shape
            xp = xp.reshape(B, Hp // 2, 2, Wp // 2, 2, Cp)
            xp = jnp.transpose(xp, (0, 1, 3, 2, 4, 5))
            xp = xp.reshape(B, Hp // 2, Wp // 2, 4 * Cp)
            keff = 2
        else:
            keff = k
        out2d = direct_conv(xp, p["w_taps"], p["bias"], Ho, Wo, keff,
                            leaky=p["leaky"], residual=res2d)
    else:
        if k == 1 and s == 1 and pad == 0:
            patches = x.reshape(B * H * W, C)
        else:
            patches, _, _ = _im2col(x, k, k, s, pad)
        out2d = fused_gemm(patches, p["w_mat"], p["bias"],
                           leaky=p["leaky"], residual=res2d)

    cv = p["cout_valid"]
    if cv != cout:                      # lane-padded detection head -> slice back
        out2d = out2d[:, :cv]
    return out2d.reshape(B, Ho, Wo, cv)


# -----------------------------------------------------------------------------
# Parameter construction: deterministic init, BN folding, weight packing.
# -----------------------------------------------------------------------------
def _pack_s2d(w):
    """(Cout, Cin, 3, 3) -> (4, 4*Cin, Cout) for the space-to-depth form."""
    cout, cin = w.shape[:2]
    wp = jnp.zeros((2, 2, 2, 2, cin, cout), w.dtype)  # (di, dj, p, q, cin, cout)
    for di in range(2):
        for dj in range(2):
            for p_ in range(2):
                for q in range(2):
                    i, j = 2 * di + p_, 2 * dj + q
                    if i < 3 and j < 3:
                        wp = wp.at[di, dj, p_, q].set(
                            jnp.transpose(w[:, :, i, j], (1, 0)))
    return wp.reshape(4, 4 * cin, cout)


def _make_conv_params(w_folded, bias, cin, cout, k, stride, padding, hw, leaky):
    h, w_sp = hw
    wo = (w_sp + 2 * padding - k) // stride + 1
    cin_eff = cin if stride == 1 else 4 * cin
    params = {"cin": cin, "cout": cout, "cout_valid": cout, "k": k,
              "stride": stride, "pad": padding, "leaky": leaky,
              "bias": bias, "s2d": False}

    use_direct = (
        k == 3 and cin_eff >= 16 and wo % 8 == 0 and
        (stride == 1 or (stride == 2 and padding == 1
                         and h % 2 == 0 and w_sp % 2 == 0))
    )
    if use_direct:
        params["mode"] = "direct"
        if stride == 1:
            params["w_taps"] = (jnp.transpose(w_folded, (2, 3, 1, 0))
                                .reshape(k * k, cin, cout)
                                .astype(jnp.bfloat16))
        else:
            params["s2d"] = True
            params["w_taps"] = _pack_s2d(w_folded).astype(jnp.bfloat16)
    else:
        params["mode"] = "gemm"
        params["w_mat"] = (jnp.transpose(w_folded, (2, 3, 1, 0))
                           .reshape(k * k * cin, cout)
                           .astype(jnp.bfloat16))
    return params


def init_conv_layer(key, cin, cout, k, stride, padding, hw):
    k1, k2, k3, k4, k5 = jax.random.split(key, 5)
    fan_in = cin * k * k
    weight = jax.random.normal(k1, (cout, cin, k, k), jnp.float32) * math.sqrt(2.0 / fan_in)
    gamma = jax.random.uniform(k2, (cout,), minval=0.8, maxval=1.2)
    beta = jax.random.normal(k3, (cout,), jnp.float32) * 0.05
    running_mean = jax.random.normal(k4, (cout,), jnp.float32) * 0.05
    running_var = jax.random.uniform(k5, (cout,), minval=0.9, maxval=1.1)
    scale = gamma / jnp.sqrt(running_var + BN_EPS)          # eval-mode BN fold
    bias = (beta - running_mean * scale).reshape(1, cout).astype(jnp.float32)
    w_folded = weight * scale[:, None, None, None]
    return _make_conv_params(w_folded, bias, cin, cout, k, stride, padding, hw,
                             leaky=True)


def init_pred_layer(key, cin, cout, hw):
    kw, kb = jax.random.split(key)
    weight = jax.random.normal(kw, (cout, cin, 1, 1), jnp.float32) * math.sqrt(1.0 / cin)
    bias = jax.random.normal(kb, (cout,), jnp.float32) * 0.01
    # Lane-dense head: pad Cout (e.g. 21) up to 128 at pack time so the GEMM's
    # output stores are unmasked; the extra channels are sliced off afterwards.
    cout_p = max(_round_up(cout, 128), 128)
    if cout_p != cout:
        weight = jnp.pad(weight, ((0, cout_p - cout), (0, 0), (0, 0), (0, 0)))
        bias = jnp.pad(bias, (0, cout_p - cout))
    params = _make_conv_params(weight, bias.reshape(1, cout_p).astype(jnp.float32),
                               cin, cout_p, 1, 1, 0, hw, leaky=False)
    params["cout_valid"] = cout
    return params


def build_yolov3(key, num_anchors, num_classes, input_hw=(64, 64)):
    h, w = input_hw

    backbone = []
    in_ch = 3
    for layer in MODEL_CONFIG[0]:
        key, sub = jax.random.split(key)
        if layer[0] == "res":
            nb = layer[1]
            blocks = []
            for s_ in jax.random.split(sub, nb):
                k1, k2 = jax.random.split(s_)
                p1 = init_conv_layer(k1, in_ch, in_ch // 2, 1, 1, 0, (h, w))
                p2 = init_conv_layer(k2, in_ch // 2, in_ch, 3, 1, 1, (h, w))
                blocks.append((p1, p2))
            backbone.append(("res", nb, blocks))
        else:
            cout, k, s = layer
            backbone.append(("conv", init_conv_layer(sub, in_ch, cout, k, s, 1, (h, w))))
            in_ch = cout
            h, w = h // s, w // s

    head = []
    in_ch = 1024
    for layer in MODEL_CONFIG[1]:
        key, sub = jax.random.split(key)
        if layer[0] == "conv":
            _, cout, k, s = layer
            head.append(("conv", init_conv_layer(sub, in_ch, cout, k, s, 0, (h, w))))
            in_ch = cout
        elif layer[0] == "convblock":
            for s_ in jax.random.split(sub, layer[1]):
                k1, k2 = jax.random.split(s_)
                p1 = init_conv_layer(k1, in_ch, in_ch // 2, 1, 1, 0, (h, w))
                p2 = init_conv_layer(k2, in_ch // 2, in_ch, 3, 1, 1, (h, w))
                head.append(("convblock", (p1, p2)))
        elif layer[0] == "upsample":
            head.append(("upsample", layer[1]))
            h, w = h * layer[1], w * layer[1]
            in_ch += layer[2]
        elif layer[0] == "detection":
            head.append(("detection",
                         init_pred_layer(sub, in_ch,
                                         num_anchors * (num_classes + 5), (h, w))))
    return backbone, head


# -----------------------------------------------------------------------------
# Forward pass (mirrors YOLOv3.forward).
# -----------------------------------------------------------------------------
def yolov3_forward(x_nchw, backbone, head, num_anchors, num_classes):
    pred_vec = num_classes + 5
    # Single f32->bf16 cast at the input; all activations stay bf16 end to end.
    x = jnp.transpose(x_nchw, (0, 2, 3, 1)).astype(jnp.bfloat16)  # NHWC

    res_conn = []
    for item in backbone:
        if item[0] == "conv":
            x = conv_forward(x, item[1])
        else:  # residual block
            _, num_block, blocks = item
            for (p1, p2) in blocks:
                y = conv_forward(x, p1)
                x = conv_forward(y, p2, residual=x)   # fused "block(x) + x"
            if num_block == 8:
                res_conn.append(x)

    detections = []
    res_idx = 1
    for item in head:
        kind = item[0]
        if kind == "detection":
            out = conv_forward(x, item[1])            # (B, H, W, A*V)
            B, H, W, _ = out.shape
            out = out.reshape(B, H, W, num_anchors, pred_vec)
            detections.append(
                jnp.transpose(out, (0, 3, 1, 2, 4)).astype(jnp.float32))  # b a h w v
        elif kind == "conv":
            x = conv_forward(x, item[1])
        elif kind == "convblock":
            p1, p2 = item[1]
            x = conv_forward(x, p1)
            x = conv_forward(x, p2)
        else:  # upsample (nearest) then channel concat with the skip tensor
            sf = item[1]
            x = jnp.repeat(jnp.repeat(x, sf, axis=1), sf, axis=2)
            x = jnp.concatenate([x, res_conn[res_idx]], axis=-1)
            res_idx -= 1
    return detections


if __name__ == "__main__":
    num_anchors, num_classes = 3, 2
    key = jax.random.PRNGKey(0)
    pkey, xkey = jax.random.split(key)

    H = W = 64   # spatial divisible by 32 -> detection grids 2x2, 4x4, 8x8
    backbone, head = build_yolov3(pkey, num_anchors, num_classes, input_hw=(H, W))

    x = jax.random.normal(xkey, (2, 3, H, W), jnp.float32)   # NCHW like PyTorch

    dets = yolov3_forward(x, backbone, head, num_anchors, num_classes)
    for d in dets:
        jax.block_until_ready(d)

    expected = [(2, 3, 2, 2, 7), (2, 3, 4, 4, 7), (2, 3, 8, 8, 7)]
    assert [tuple(d.shape) for d in dets] == expected, [d.shape for d in dets]
    assert all(bool(jnp.isfinite(d).all()) for d in dets)
    print("KERNEL_OK")
</pallas_src>

<mosaic_0001>
module attributes {stable_mosaic.version = 11 : i64} {
  func.func @_gemm_kernel(%arg0: i32, %arg1: i32, %arg2: i32, %arg3: memref<1024x27xbf16, #tpu.memory_space<vmem>>, %arg4: memref<27x32xbf16, #tpu.memory_space<vmem>>, %arg5: memref<1x32xf32, #tpu.memory_space<vmem>>, %arg6: memref<1024x32xbf16, #tpu.memory_space<vmem>>, %arg7: memref<1024x32xf32, #tpu.memory_space<vmem>>) attributes {dimension_semantics = [#tpu.dimension_semantics<parallel>, #tpu.dimension_semantics<parallel>, #tpu.dimension_semantics<arbitrary>], iteration_bounds = array<i64: 8, 1, 1>, scalar_prefetch = 0 : i64, scratch_operands = 1 : i64, tpu.core_type = #tpu.core_type<tc>, window_params = [{transform_indices = @transform_0, window_bounds = array<i64: 1024, 27>}, {transform_indices = @transform_1, window_bounds = array<i64: 27, 32>}, {transform_indices = @transform_2, window_bounds = array<i64: 1, 32>}, {transform_indices = @transform_3, window_bounds = array<i64: 1024, 32>}]} {
    %c0_i32 = arith.constant 0 : i32
    %0 = arith.cmpi eq, %arg2, %c0_i32 : i32
    %1 = arith.extui %0 : i1 to i32
    %c0_i32_0 = arith.constant 0 : i32
    %2 = arith.cmpi ne, %1, %c0_i32_0 : i32
    scf.if %2 {
      %cst_10 = arith.constant 0.000000e+00 : f32
      %12 = vector.broadcast %cst_10 : f32 to vector<1024x32xf32>
      %c0_11 = arith.constant 0 : index
      %c0_12 = arith.constant 0 : index
      %13 = vector.load %arg7[%c0_11, %c0_12] : memref<1024x32xf32, #tpu.memory_space<vmem>>, vector<1024x32xf32>
      tpu.vector_store %arg7[%c0_11, %c0_12], %12 {strides = array<i32>} : memref<1024x32xf32, #tpu.memory_space<vmem>>, vector<1024x32xf32>,
    } else {
    }
    %c0 = arith.constant 0 : index
    %c0_1 = arith.constant 0 : index
    %3 = vector.load %arg7[%c0, %c0_1] : memref<1024x32xf32, #tpu.memory_space<vmem>>, vector<1024x32xf32>
    %c0_2 = arith.constant 0 : index
    %c0_3 = arith.constant 0 : index
    %4 = vector.load %arg3[%c0_2, %c0_3] : memref<1024x27xbf16, #tpu.memory_space<vmem>>, vector<1024x27xbf16>
    %c0_4 = arith.constant 0 : index
    %c0_5 = arith.constant 0 : index
    %5 = vector.load %arg4[%c0_4, %c0_5] : memref<27x32xbf16, #tpu.memory_space<vmem>>, vector<27x32xbf16>
    %cst = arith.constant dense<0.000000e+00> : vector<1024x32xf32>
    %6 = tpu.matmul %4, %5, %cst {dimension_numbers = #tpu.dot_dimension_numbers<[1], [0], [0], [1], [0, 0, 1, 1], [], []>} : vector<1024x27xbf16>, vector<27x32xbf16>, vector<1024x32xf32> -> vector<1024x32xf32>
    %7 = arith.addf %3, %6 : vector<1024x32xf32>
    %c0_6 = arith.constant 0 : index
    %c0_7 = arith.constant 0 : index
    %8 = vector.load %arg7[%c0_6, %c0_7] : memref<1024x32xf32, #tpu.memory_space<vmem>>, vector<1024x32xf32>
    tpu.vector_store %arg7[%c0_6, %c0_7], %7 {strides = array<i32>} : memref<1024x32xf32, #tpu.memory_space<vmem>>, vector<1024x32xf32>,
    %c0_i32_8 = arith.constant 0 : i32
    %9 = arith.cmpi eq, %arg2, %c0_i32_8 : i32
    %10 = arith.extui %9 : i1 to i32
    %c0_i32_9 = arith.constant 0 : i32
    %11 = arith.cmpi ne, %10, %c0_i32_9 : i32
    scf.if %11 {
      %c0_10 = arith.constant 0 : index
      %c0_11 = arith.constant 0 : index
      %12 = vector.load %arg7[%c0_10, %c0_11] : memref<1024x32xf32, #tpu.memory_space<vmem>>, vector<1024x32xf32>
      %c0_12 = arith.constant 0 : index
      %c0_13 = arith.constant 0 : index
      %13 = vector.load %arg5[%c0_12, %c0_13] : memref<1x32xf32, #tpu.memory_space<vmem>>, vector<1x32xf32>
      %14 = vector.broadcast %13 : vector<1x32xf32> to vector<1024x32xf32>
      %15 = arith.addf %12, %14 : vector<1024x32xf32>
      %cst_14 = arith.constant 0.000000e+00 : f32
      %16 = vector.broadcast %cst_14 : f32 to vector<1024x32xf32>
      %17 = arith.cmpf ogt, %15, %16 : vector<1024x32xf32>
      %cst_15 = arith.constant 1.000000e-01 : f32
      %18 = vector.broadcast %cst_15 : f32 to vector<1024x32xf32>
      %19 = arith.mulf %18, %15 : vector<1024x32xf32>
      %20 = arith.select %17, %15, %19 : vector<1024x32xi1>, vector<1024x32xf32>
      %21 = arith.truncf %20 : vector<1024x32xf32> to vector<1024x32xbf16>
      %c0_16 = arith.constant 0 : index
      %c0_17 = arith.constant 0 : index
      %22 = vector.load %arg6[%c0_16, %c0_17] : memref<1024x32xbf16, #tpu.memory_space<vmem>>, vector<1024x32xbf16>
      tpu.vector_store %arg6[%c0_16, %c0_17], %21 {strides = array<i32>} : memref<1024x32xbf16, #tpu.memory_space<vmem>>, vector<1024x32xbf16>,
    } else {
    }
    return
  }
  func.func @transform_0(%arg0: i32, %arg1: i32, %arg2: i32) -> (i32, i32) {
    %c0_i32 = arith.constant 0 : i32
    return %arg0, %arg2 : i32, i32
  }
  func.func @transform_1(%arg0: i32, %arg1: i32, %arg2: i32) -> (i32, i32) {
    %c0_i32 = arith.constant 0 : i32
    return %arg2, %arg1 : i32, i32
  }
  func.func @transform_2(%arg0: i32, %arg1: i32, %arg2: i32) -> (i32, i32) {
    %c0_i32 = arith.constant 0 : i32
    %c0_i32_0 = arith.constant 0 : i32
    return %c0_i32, %arg1 : i32, i32
  }
  func.func @transform_3(%arg0: i32, %arg1: i32, %arg2: i32) -> (i32, i32) {
    %c0_i32 = arith.constant 0 : i32
    return %arg0, %arg1 : i32, i32
  }
}

</mosaic_0001>

<llo_original>
// kernel: tpu_custom_call.1
$region0: #{tpu_custom_call.1}
  #allocation0 [shape = 'u32[]', space=smem, size = 0x4, offset = 0x4, fixed_abs, tag = 'smem constant byte address 0x4 - core index']
  #allocation1 [shape = 'u32[144,128]{1,0:T(1,128)}', space=vmem, size = 0x12000, scoped, tag = 'internal scratch']
  #allocation2 [shape = 'f32[1024,32]{1,0:T(8,128)}', space=vmem, size = 0x80000, scoped, tag = 'scratch operand']
  %s0 = inlined_call_operand.hbm [shape: bf16[8192,27], index: 0, kind: input, shape index: {}]
  %s1 = inlined_call_operand.hbm [shape: bf16[27,32], index: 1, kind: input, shape index: {}]
  %s2 = inlined_call_operand.hbm [shape: f32[1,32], index: 2, kind: input, shape index: {}]
  %s3 = inlined_call_operand.hbm [shape: bf16[8192,32], index: 3, kind: output, shape index: {}]
  %s4 = sld [smem:[#allocation0]]
  $region65: #{tpu_custom_call.1} parent=0
    _
  %s6 = ssub.s32 1, %s4
  %s7 = scalar_select 0, %s6, %s4
  $region1: #{tpu_custom_call.1} parent=0
    #allocation3 [shape = 'u8[524288]{0}', space=vmem, size = 0x80000, scoped, tag = 'input window, operand 0']
    #allocation4 [shape = 's32[2]{0}', space=sflag, size = 0x8, scoped, tag = 'scoped memory for tpu_custom_call.1']
    #allocation5 [shape = 's32[2]{0}', space=sflag, size = 0x8, scoped, tag = 'scoped memory for tpu_custom_call.1']
    #allocation6 [shape = 'u8[8192]{0}', space=vmem, size = 0x2000, scoped, tag = 'input window, operand 1, single buffered']
    #allocation7 [shape = 's32[1]{0}', space=sflag, size = 0x4, scoped, tag = 'scoped memory for tpu_custom_call.1']
    #allocation8 [shape = 'u8[512]{0}', space=vmem, size = 0x400, scoped, tag = 'input window, operand 2, single buffered']
    #allocation9 [shape = 'u8[524288]{0}', space=vmem, size = 0x80000, scoped, tag = 'output window, operand 0']
    %8 = vsyncpa [#allocation4], 0
    %s9 = scalar_lea.sflag [#allocation4], 1
    %10 = vsyncpa %s9, 0
    %11 = vsyncpa [#allocation7], 0
    %12 = vsyncpa [#allocation5], 0
    %s13 = scalar_lea.sflag [#allocation5], 1
    %14 = vsyncpa %s13, 0
    loop: start=0, step=1, limit=10
    $region2: #{tpu_custom_call.1} parent=1 // loop_pre_header
      _
    $region3: #{tpu_custom_call.1} parent=1 // loop_header
      %s16 = sphi 0, %s20
      %p17 = scmp.ge.s32.totalorder %s16, 10
      %s23 = sphi 0, %s42
      %s24 = sphi 0, %s38
      %s25 = sphi 0, %s34
      %s26 = sphi 0, %s23
      %s27 = sphi 0, %s24
      %s28 = sphi 0, %s25
      %s29 = sphi 0, %s26
      %s30 = sphi 0, %s27
      %s31 = sphi 0, %s28
      %s47 = sphi 0, %s49
      %s50 = sphi 0, %s47
      %s51 = sphi 0, %s50
      %s67 = sphi 0, %s51
      %s75 = sphi 0, %s77
      %s78 = sphi 0, %s75
      %s79 = sphi 0, %s78
      %s95 = sphi 0, %s79
      %s101 = sphi 0, %s103
      %s104 = sphi 0, %s101
      %s105 = sphi 0, %s104
      %s121 = sphi 0, %s105
      %s129 = sphi 0, %s131
      %s132 = sphi 0, %s129
      %s133 = sphi 0, %s132
      %s149 = sphi 0, %s133
    $region4: #{tpu_custom_call.1} parent=1 // loop_header_branch
      %19 = sbr.rel (%p17) target = $region8
    $region5: #{tpu_custom_call.1} parent=1 // loop_body
      %s21 = ssub.s32 %s16, 1
      %s22 = ssub.s32 %s16, 2
      %s32 = sadd.s32 1, %s25
      %p33 = scmp.ge.s32.totalorder %s32, 1
      %s34 = scalar_select %p33, 0, %s32
      %s35 = sadd.s32 1, %s24
      %s36 = scalar_select %p33, %s35, %s24
      %p37 = scmp.ge.s32.totalorder %s36, 1
      %s38 = scalar_select %p37, 0, %s36
      %s39 = sadd.s32 1, %s23
      %s40 = scalar_select %p37, %s39, %s23
      %p41 = scmp.ge.s32.totalorder %s40, 8
      %s42 = scalar_select %p41, 0, %s40
      %s43 = ssub.s32 %s23, %s42
      %s44 = ssub.s32 %s25, %s34
      %s45 = sor.u32 %s43, %s44
      %p46 = scmp.eq.s32.totalorder %s45, 0
      %s48 = sadd.s32 %s47, 1
      %s49 = scalar_select %p46, %s47, %s48
      %p52 = pneg %p46
      %p53 = scmp.eq.s32.totalorder %s16, 7
      %p54 = por %p52, %p53
      %p55 = scmp.ne.s32.totalorder %s47, %s50
      %p56 = scmp.eq.s32.totalorder %s16, 0
      %p57 = por %p55, %p56
      %p58 = scmp.ne.s32.totalorder %s47, %s50
      %p59 = scmp.eq.s32.totalorder %s21, 7
      %p60 = por %p58, %p59
      %p61 = scmp.ne.s32.totalorder %s50, %s51
      %p62 = scmp.eq.s32.totalorder %s21, 0
      %p63 = por %p61, %p62
      %p64 = scmp.ne.s32.totalorder %s50, %s51
      %p65 = scmp.eq.s32.totalorder %s22, 7
      %p66 = por %p64, %p65
      %p68 = scmp.ne.s32.totalorder %s51, %s67
      %p69 = scmp.eq.s32.totalorder %s22, 0
      %p70 = por %p68, %p69
      %s71 = ssub.s32 %s25, %s34
      %s72 = ssub.s32 %s24, %s38
      %s73 = sor.u32 %s71, %s72
      %p74 = scmp.eq.s32.totalorder %s73, 0
      %s76 = sadd.s32 %s75, 1
      %s77 = scalar_select %p74, %s75, %s76
      %p80 = pneg %p74
      %p81 = scmp.eq.s32.totalorder %s16, 7
      %p82 = por %p80, %p81
      %p83 = scmp.ne.s32.totalorder %s75, %s78
      %p84 = scmp.eq.s32.totalorder %s16, 0
      %p85 = por %p83, %p84
      %p86 = scmp.ne.s32.totalorder %s75, %s78
      %p87 = scmp.eq.s32.totalorder %s21, 7
      %p88 = por %p86, %p87
      %p89 = scmp.ne.s32.totalorder %s78, %s79
      %p90 = scmp.eq.s32.totalorder %s21, 0
      %p91 = por %p89, %p90
      %p92 = scmp.ne.s32.totalorder %s78, %s79
      %p93 = scmp.eq.s32.totalorder %s22, 7
      %p94 = por %p92, %p93
      %p96 = scmp.ne.s32.totalorder %s79, %s95
      %p97 = scmp.eq.s32.totalorder %s22, 0
      %p98 = por %p96, %p97
      %s99 = ssub.s32 %s24, %s38
      %p100 = scmp.eq.s32.totalorder %s99, 0
      %s102 = sadd.s32 %s101, 1
      %s103 = scalar_select %p100, %s101, %s102
      %p106 = pneg %p100
      %p107 = scmp.eq.s32.totalorder %s16, 7
      %p108 = por %p106, %p107
      %p109 = scmp.ne.s32.totalorder %s101, %s104
      %p110 = scmp.eq.s32.totalorder %s16, 0
      %p111 = por %p109, %p110
      %p112 = scmp.ne.s32.totalorder %s101, %s104
      %p113 = scmp.eq.s32.totalorder %s21, 7
      %p114 = por %p112, %p113
      %p115 = scmp.ne.s32.totalorder %s104, %s105
      %p116 = scmp.eq.s32.totalorder %s21, 0
      %p117 = por %p115, %p116
      %p118 = scmp.ne.s32.totalorder %s104, %s105
      %p119 = scmp.eq.s32.totalorder %s22, 7
      %p120 = por %p118, %p119
      %p122 = scmp.ne.s32.totalorder %s105, %s121
      %p123 = scmp.eq.s32.totalorder %s22, 0
      %p124 = por %p122, %p123
      %s125 = ssub.s32 %s23, %s42
      %s126 = ssub.s32 %s24, %s38
      %s127 = sor.u32 %s125, %s126
      %p128 = scmp.eq.s32.totalorder %s127, 0
      %s130 = sadd.s32 %s129, 1
      %s131 = scalar_select %p128, %s129, %s130
      %p134 = pneg %p128
      %p135 = scmp.eq.s32.totalorder %s16, 7
      %p136 = por %p134, %p135
      %p137 = scmp.ne.s32.totalorder %s129, %s132
      %p138 = scmp.eq.s32.totalorder %s16, 0
      %p139 = por %p137, %p138
      %p140 = scmp.ne.s32.totalorder %s129, %s132
      %p141 = scmp.eq.s32.totalorder %s21, 7
      %p142 = por %p140, %p141
      %p143 = scmp.ne.s32.totalorder %s132, %s133
      %p144 = scmp.eq.s32.totalorder %s21, 0
      %p145 = por %p143, %p144
      %p146 = scmp.ne.s32.totalorder %s132, %s133
      %p147 = scmp.eq.s32.totalorder %s22, 7
      %p148 = por %p146, %p147
      %p150 = scmp.ne.s32.totalorder %s133, %s149
      %p151 = scmp.eq.s32.totalorder %s22, 0
      %p152 = por %p150, %p151
      %p153 = scmp.le.s32.totalorder 1, %s16
      %p154 = scmp.lt.s32.totalorder %s16, 9
      %p155 = pnand %p153, %p154
      %p156 = pneg %p155
      // Predicated region
      $region9: #{tpu_custom_call.1} parent=5 // pred_check
        _
      $region10: #{tpu_custom_call.1} parent=5 // pred_check_branch
        %158 = sbr.rel (%p155) target = $region12
      $region11: #{tpu_custom_call.1} parent=5 // pred_region
        %s159 = ssub.s32 %s16, 1
        // Predicated region
        $region13: #{tpu_custom_call.1} parent=11 // pred_check
          %p160 = pneg %p91
        $region14: #{tpu_custom_call.1} parent=11 // pred_check_branch
          %162 = sbr.rel (%p160) target = $region16
        $region15: #{tpu_custom_call.1} parent=11 // pred_region
          %s163 = smul.u32 4, %s28
          %s165 = ssub.s32 256, 256
          %166 = vsyncadd [#allocation7], %s165
          %s167 = sadd.s32 %s27, %s163
          %s168 = smul.addr %s167, 64
          %s169 = scalar_lea.hbm %s1, %s168
          %s170 = sshll.u32 [#allocation6], 4
          %s171 = int_to_ptr.vmem [resolvable:$true] %s170
          %176 = dma.hbm_to_vmem [thread:$0]  %s169, 256, %s171, [#allocation7], 64, 64, 4
        $region16: #{tpu_custom_call.1} parent=11 // pred_fallthru
          _
        // Predicated region
        $region17: #{tpu_custom_call.1} parent=11 // pred_check
          %p177 = pneg %p117
        $region18: #{tpu_custom_call.1} parent=11 // pred_check_branch
          %179 = sbr.rel (%p177) target = $region20
        $region19: #{tpu_custom_call.1} parent=11 // pred_region
          %s181 = ssub.s32 16, 16
          %182 = vsyncadd [#allocation7], %s181
          %s183 = smul.addr %s27, 16
          %s184 = scalar_lea.hbm %s2, %s183
          %s186 = sshll.u32 [#allocation8], 4
          %s187 = int_to_ptr.vmem [resolvable:$true] %s186
          %189 = dma.hbm_to_vmem [thread:$0]  %s184, 16, %s187, [#allocation7]
        $region20: #{tpu_custom_call.1} parent=11 // pred_fallthru
          _
      $region12: #{tpu_custom_call.1} parent=5 // pred_fallthru
        _
      %p190 = scmp.lt.s32.totalorder %s16, 8
      // Predicated region
      $region21: #{tpu_custom_call.1} parent=5 // pred_check
        %p191 = pneg %p190
      $region22: #{tpu_custom_call.1} parent=5 // pred_check_branch
        %193 = sbr.rel (%p191) target = $region24
      $region23: #{tpu_custom_call.1} parent=5 // pred_region
        // Predicated region
        $region25: #{tpu_custom_call.1} parent=23 // pred_check
          %p194 = pneg %p57
        $region26: #{tpu_custom_call.1} parent=23 // pred_check_branch
          %196 = sbr.rel (%p194) target = $region28
        $region27: #{tpu_custom_call.1} parent=23 // pred_region
          %s197 = sand.u32 %s47, 1
          %s198 = scalar_lea.sflag [#allocation4], %s197
          %s199 = sand.u32 %s47, 1
          %s200 = smul.addr %s199, 512
          %s201 = scalar_lea.vmem [#allocation3], %s200
          %s202 = smul.u32 128, %s23
          %s204 = ssub.s32 8192, 8192
          %205 = vsyncadd %s198, %s204
          %s206 = sadd.s32 %s25, %s202
          %s207 = smul.addr %s206, 64
          %s208 = scalar_lea.hbm %s0, %s207
          %s209 = sshll.u32 %s201, 4
          %s210 = int_to_ptr.vmem [resolvable:$true] %s209
          %215 = dma.hbm_to_vmem [thread:$0]  %s208, 8192, %s210, %s198, 64, 64, 4
        $region28: #{tpu_custom_call.1} parent=23 // pred_fallthru
          _
      $region24: #{tpu_custom_call.1} parent=5 // pred_fallthru
        _
      %p216 = scmp.le.s32.totalorder 1, %s16
      %p217 = scmp.lt.s32.totalorder %s16, 9
      %p218 = pnand %p216, %p217
      %p219 = pneg %p218
      // Predicated region
      $region29: #{tpu_custom_call.1} parent=5 // pred_check
        _
      $region30: #{tpu_custom_call.1} parent=5 // pred_check_branch
        %221 = sbr.rel (%p218) target = $region32
      $region31: #{tpu_custom_call.1} parent=5 // pred_region
        %s222 = ssub.s32 %s16, 1
        %s223 = sand.u32 %s50, 1
        %s224 = scalar_lea.sflag [#allocation4], %s223
        %s225 = sand.u32 %s50, 1
        %s226 = smul.addr %s225, 512
        %s227 = scalar_lea.vmem [#allocation3], %s226
        // Predicated region
        $region33: #{tpu_custom_call.1} parent=31 // pred_check
          %p228 = pneg %p63
        $region34: #{tpu_custom_call.1} parent=31 // pred_check_branch
          %230 = sbr.rel (%p228) target = $region36
        $region35: #{tpu_custom_call.1} parent=31 // pred_region
          %231 = dma.done %s224, 8192
        $region36: #{tpu_custom_call.1} parent=31 // pred_fallthru
          _
        // Predicated region
        $region37: #{tpu_custom_call.1} parent=31 // pred_check
          %p232 = pneg %p91
        $region38: #{tpu_custom_call.1} parent=31 // pred_check_branch
          %234 = sbr.rel (%p232) target = $region40
        $region39: #{tpu_custom_call.1} parent=31 // pred_region
          %235 = dma.done [#allocation7], 256
        $region40: #{tpu_custom_call.1} parent=31 // pred_fallthru
          _
        // Predicated region
        $region41: #{tpu_custom_call.1} parent=31 // pred_check
          %p236 = pneg %p117
        $region42: #{tpu_custom_call.1} parent=31 // pred_check_branch
          %238 = sbr.rel (%p236) target = $region44
        $region43: #{tpu_custom_call.1} parent=31 // pred_region
          %239 = dma.done [#allocation7], 16
        $region44: #{tpu_custom_call.1} parent=31 // pred_fallthru
          _
        %s240 = sand.u32 %s50, 1
        %s241 = scalar_lea.sflag [#allocation4], %s240
        %s242 = sand.u32 %s50, 1
        %s243 = smul.addr %s242, 512
        %s244 = scalar_lea.vmem [#allocation3], %s243
        %p245 = pneg %p63
        %p246 = pneg %p60
        %p247 = pneg %p91
        %p248 = pneg %p88
        %p249 = pneg %p117
        %p250 = pneg %p114
        %p251 = pneg %p145
        %p252 = pneg %p142
        %s253 = sand.u32 %s132, 1
        %s254 = scalar_lea.sflag [#allocation5], %s253
        %s255 = sand.u32 %s132, 1
        %s256 = smul.addr %s255, 512
        %s257 = scalar_lea.vmem [#allocation9], %s256
        %s258 = smul.u32 128, %s26
        %s259 = smul.u32 4, %s28
        %s260 = smul.u32 128, %s26
        %p262 = scmp.eq.s32.totalorder %s28, 0
        // Predicated region
        $region45: #{tpu_custom_call.1} parent=31 // pred_check
          %p263 = pneg %p262
        $region46: #{tpu_custom_call.1} parent=31 // pred_check_branch
          %265 = sbr.rel (%p263) target = $region48
        $region47: #{tpu_custom_call.1} parent=31 // pred_region
          %vm266 = vcmask 261120
          %267 = vst.msk [vmem:[#allocation2] sm:$0xff] %vm266, 0.0
          %268 = vst.msk [vmem:[#allocation2 + $0x8] sm:$0xff] %vm266, 0.0
          %269 = vst.msk [vmem:[#allocation2 + $0x10] sm:$0xff] %vm266, 0.0
          %270 = vst.msk [vmem:[#allocation2 + $0x18] sm:$0xff] %vm266, 0.0
          %271 = vst.msk [vmem:[#allocation2 + $0x20] sm:$0xff] %vm266, 0.0
          %272 = vst.msk [vmem:[#allocation2 + $0x28] sm:$0xff] %vm266, 0.0
          %273 = vst.msk [vmem:[#allocation2 + $0x30] sm:$0xff] %vm266, 0.0
          %274 = vst.msk [vmem:[#allocation2 + $0x38] sm:$0xff] %vm266, 0.0
          %275 = vst.msk [vmem:[#allocation2 + $0x40] sm:$0xff] %vm266, 0.0
          %276 = vst.msk [vmem:[#allocation2 + $0x48] sm:$0xff] %vm266, 0.0
          %277 = vst.msk [vmem:[#allocation2 + $0x50] sm:$0xff] %vm266, 0.0
          %278 = vst.msk [vmem:[#allocation2 + $0x58] sm:$0xff] %vm266, 0.0
          %279 = vst.msk [vmem:[#allocation2 + $0x60] sm:$0xff] %vm266, 0.0
          %280 = vst.msk [vmem:[#allocation2 + $0x68] sm:$0xff] %vm266, 0.0
          %281 = vst.msk [vmem:[#allocation2 + $0x70] sm:$0xff] %vm266, 0.0
          %282 = vst.msk [vmem:[#allocation2 + $0x78] sm:$0xff] %vm266, 0.0
          %283 = vst.msk [vmem:[#allocation2 + $0x80] sm:$0xff] %vm266, 0.0
          %284 = vst.msk [vmem:[#allocation2 + $0x88] sm:$0xff] %vm266, 0.0
          %285 = vst.msk [vmem:[#allocation2 + $0x90] sm:$0xff] %vm266, 0.0
          %286 = vst.msk [vmem:[#allocation2 + $0x98] sm:$0xff] %vm266, 0.0
          %287 = vst.msk [vmem:[#allocation2 + $0xa0] sm:$0xff] %vm266, 0.0
          %288 = vst.msk [vmem:[#allocation2 + $0xa8] sm:$0xff] %vm266, 0.0
          %289 = vst.msk [vmem:[#allocation2 + $0xb0] sm:$0xff] %vm266, 0.0
          %290 = vst.msk [vmem:[#allocation2 + $0xb8] sm:$0xff] %vm266, 0.0
          %291 = vst.msk [vmem:[#allocation2 + $0xc0] sm:$0xff] %vm266, 0.0
          %292 = vst.msk [vmem:[#allocation2 + $0xc8] sm:$0xff] %vm266, 0.0
          %293 = vst.msk [vmem:[#allocation2 + $0xd0] sm:$0xff] %vm266, 0.0
          %294 = vst.msk [vmem:[#allocation2 + $0xd8] sm:$0xff] %vm266, 0.0
          %295 = vst.msk [vmem:[#allocation2 + $0xe0] sm:$0xff] %vm266, 0.0
          %296 = vst.msk [vmem:[#allocation2 + $0xe8] sm:$0xff] %vm266, 0.0
          %297 = vst.msk [vmem:[#allocation2 + $0xf0] sm:$0xff] %vm266, 0.0
          %298 = vst.msk [vmem:[#allocation2 + $0xf8] sm:$0xff] %vm266, 0.0
          %299 = vst.msk [vmem:[#allocation2 + $0x100] sm:$0xff] %vm266, 0.0
          %300 = vst.msk [vmem:[#allocation2 + $0x108] sm:$0xff] %vm266, 0.0
          %301 = vst.msk [vmem:[#allocation2 + $0x110] sm:$0xff] %vm266, 0.0
          %302 = vst.msk [vmem:[#allocation2 + $0x118] sm:$0xff] %vm266, 0.0
          %303 = vst.msk [vmem:[#allocation2 + $0x120] sm:$0xff] %vm266, 0.0
          %304 = vst.msk [vmem:[#allocation2 + $0x128] sm:$0xff] %vm266, 0.0
          %305 = vst.msk [vmem:[#allocation2 + $0x130] sm:$0xff] %vm266, 0.0
          %306 = vst.msk [vmem:[#allocation2 + $0x138] sm:$0xff] %vm266, 0.0
          %307 = vst.msk [vmem:[#allocation2 + $0x140] sm:$0xff] %vm266, 0.0
          %308 = vst.msk [vmem:[#allocation2 + $0x148] sm:$0xff] %vm266, 0.0
          %309 = vst.msk [vmem:[#allocation2 + $0x150] sm:$0xff] %vm266, 0.0
          %310 = vst.msk [vmem:[#allocation2 + $0x158] sm:$0xff] %vm266, 0.0
          %311 = vst.msk [vmem:[#allocation2 + $0x160] sm:$0xff] %vm266, 0.0
          %312 = vst.msk [vmem:[#allocation2 + $0x168] sm:$0xff] %vm266, 0.0
          %313 = vst.msk [vmem:[#allocation2 + $0x170] sm:$0xff] %vm266, 0.0
          %314 = vst.msk [vmem:[#allocation2 + $0x178] sm:$0xff] %vm266, 0.0
          %315 = vst.msk [vmem:[#allocation2 + $0x180] sm:$0xff] %vm266, 0.0
          %316 = vst.msk [vmem:[#allocation2 + $0x188] sm:$0xff] %vm266, 0.0
          %317 = vst.msk [vmem:[#allocation2 + $0x190] sm:$0xff] %vm266, 0.0
          %318 = vst.msk [vmem:[#allocation2 + $0x198] sm:$0xff] %vm266, 0.0
          %319 = vst.msk [vmem:[#allocation2 + $0x1a0] sm:$0xff] %vm266, 0.0
          %320 = vst.msk [vmem:[#allocation2 + $0x1a8] sm:$0xff] %vm266, 0.0
          %321 = vst.msk [vmem:[#allocation2 + $0x1b0] sm:$0xff] %vm266, 0.0
          %322 = vst.msk [vmem:[#allocation2 + $0x1b8] sm:$0xff] %vm266, 0.0
          %323 = vst.msk [vmem:[#allocation2 + $0x1c0] sm:$0xff] %vm266, 0.0
          %324 = vst.msk [vmem:[#allocation2 + $0x1c8] sm:$0xff] %vm266, 0.0
          %325 = vst.msk [vmem:[#allocation2 + $0x1d0] sm:$0xff] %vm266, 0.0
          %326 = vst.msk [vmem:[#allocation2 + $0x1d8] sm:$0xff] %vm266, 0.0
          %327 = vst.msk [vmem:[#allocation2 + $0x1e0] sm:$0xff] %vm266, 0.0
          %328 = vst.msk [vmem:[#allocation2 + $0x1e8] sm:$0xff] %vm266, 0.0
          %329 = vst.msk [vmem:[#allocation2 + $0x1f0] sm:$0xff] %vm266, 0.0
          %330 = vst.msk [vmem:[#allocation2 + $0x1f8] sm:$0xff] %vm266, 0.0
          %331 = vst.msk [vmem:[#allocation2 + $0x200] sm:$0xff] %vm266, 0.0
          %332 = vst.msk [vmem:[#allocation2 + $0x208] sm:$0xff] %vm266, 0.0
          %333 = vst.msk [vmem:[#allocation2 + $0x210] sm:$0xff] %vm266, 0.0
          %334 = vst.msk [vmem:[#allocation2 + $0x218] sm:$0xff] %vm266, 0.0
          %335 = vst.msk [vmem:[#allocation2 + $0x220] sm:$0xff] %vm266, 0.0
          %336 = vst.msk [vmem:[#allocation2 + $0x228] sm:$0xff] %vm266, 0.0
          %337 = vst.msk [vmem:[#allocation2 + $0x230] sm:$0xff] %vm266, 0.0
          %338 = vst.msk [vmem:[#allocation2 + $0x238] sm:$0xff] %vm266, 0.0
          %339 = vst.msk [vmem:[#allocation2 + $0x240] sm:$0xff] %vm266, 0.0
          %340 = vst.msk [vmem:[#allocation2 + $0x248] sm:$0xff] %vm266, 0.0
          %341 = vst.msk [vmem:[#allocation2 + $0x250] sm:$0xff] %vm266, 0.0
          %342 = vst.msk [vmem:[#allocation2 + $0x258] sm:$0xff] %vm266, 0.0
          %343 = vst.msk [vmem:[#allocation2 + $0x260] sm:$0xff] %vm266, 0.0
          %344 = vst.msk [vmem:[#allocation2 + $0x268] sm:$0xff] %vm266, 0.0
          %345 = vst.msk [vmem:[#allocation2 + $0x270] sm:$0xff] %vm266, 0.0
          %346 = vst.msk [vmem:[#allocation2 + $0x278] sm:$0xff] %vm266, 0.0
          %347 = vst.msk [vmem:[#allocation2 + $0x280] sm:$0xff] %vm266, 0.0
          %348 = vst.msk [vmem:[#allocation2 + $0x288] sm:$0xff] %vm266, 0.0
          %349 = vst.msk [vmem:[#allocation2 + $0x290] sm:$0xff] %vm266, 0.0
          %350 = vst.msk [vmem:[#allocation2 + $0x298] sm:$0xff] %vm266, 0.0
          %351 = vst.msk [vmem:[#allocation2 + $0x2a0] sm:$0xff] %vm266, 0.0
          %352 = vst.msk [vmem:[#allocation2 + $0x2a8] sm:$0xff] %vm266, 0.0
          %353 = vst.msk [vmem:[#allocation2 + $0x2b0] sm:$0xff] %vm266, 0.0
          %354 = vst.msk [vmem:[#allocation2 + $0x2b8] sm:$0xff] %vm266, 0.0
          %355 = vst.msk [vmem:[#allocation2 + $0x2c0] sm:$0xff] %vm266, 0.0
          %356 = vst.msk [vmem:[#allocation2 + $0x2c8] sm:$0xff] %vm266, 0.0
          %357 = vst.msk [vmem:[#allocation2 + $0x2d0] sm:$0xff] %vm266, 0.0
          %358 = vst.msk [vmem:[#allocation2 + $0x2d8] sm:$0xff] %vm266, 0.0
          %359 = vst.msk [vmem:[#allocation2 + $0x2e0] sm:$0xff] %vm266, 0.0
          %360 = vst.msk [vmem:[#allocation2 + $0x2e8] sm:$0xff] %vm266, 0.0
          %361 = vst.msk [vmem:[#allocation2 + $0x2f0] sm:$0xff] %vm266, 0.0
          %362 = vst.msk [vmem:[#allocation2 + $0x2f8] sm:$0xff] %vm266, 0.0
          %363 = vst.msk [vmem:[#allocation2 + $0x300] sm:$0xff] %vm266, 0.0
          %364 = vst.msk [vmem:[#allocation2 + $0x308] sm:$0xff] %vm266, 0.0
          %365 = vst.msk [vmem:[#allocation2 + $0x310] sm:$0xff] %vm266, 0.0
          %366 = vst.msk [vmem:[#allocation2 + $0x318] sm:$0xff] %vm266, 0.0
          %367 = vst.msk [vmem:[#allocation2 + $0x320] sm:$0xff] %vm266, 0.0
          %368 = vst.msk [vmem:[#allocation2 + $0x328] sm:$0xff] %vm266, 0.0
          %369 = vst.msk [vmem:[#allocation2 + $0x330] sm:$0xff] %vm266, 0.0
          %370 = vst.msk [vmem:[#allocation2 + $0x338] sm:$0xff] %vm266, 0.0
          %371 = vst.msk [vmem:[#allocation2 + $0x340] sm:$0xff] %vm266, 0.0
          %372 = vst.msk [vmem:[#allocation2 + $0x348] sm:$0xff] %vm266, 0.0
          %373 = vst.msk [vmem:[#allocation2 + $0x350] sm:$0xff] %vm266, 0.0
          %374 = vst.msk [vmem:[#allocation2 + $0x358] sm:$0xff] %vm266, 0.0
          %375 = vst.msk [vmem:[#allocation2 + $0x360] sm:$0xff] %vm266, 0.0
          %376 = vst.msk [vmem:[#allocation2 + $0x368] sm:$0xff] %vm266, 0.0
          %377 = vst.msk [vmem:[#allocation2 + $0x370] sm:$0xff] %vm266, 0.0
          %378 = vst.msk [vmem:[#allocation2 + $0x378] sm:$0xff] %vm266, 0.0
          %379 = vst.msk [vmem:[#allocation2 + $0x380] sm:$0xff] %vm266, 0.0
          %380 = vst.msk [vmem:[#allocation2 + $0x388] sm:$0xff] %vm266, 0.0
          %381 = vst.msk [vmem:[#allocation2 + $0x390] sm:$0xff] %vm266, 0.0
          %382 = vst.msk [vmem:[#allocation2 + $0x398] sm:$0xff] %vm266, 0.0
          %383 = vst.msk [vmem:[#allocation2 + $0x3a0] sm:$0xff] %vm266, 0.0
          %384 = vst.msk [vmem:[#allocation2 + $0x3a8] sm:$0xff] %vm266, 0.0
          %385 = vst.msk [vmem:[#allocation2 + $0x3b0] sm:$0xff] %vm266, 0.0
          %386 = vst.msk [vmem:[#allocation2 + $0x3b8] sm:$0xff] %vm266, 0.0
          %387 = vst.msk [vmem:[#allocation2 + $0x3c0] sm:$0xff] %vm266, 0.0
          %388 = vst.msk [vmem:[#allocation2 + $0x3c8] sm:$0xff] %vm266, 0.0
          %389 = vst.msk [vmem:[#allocation2 + $0x3d0] sm:$0xff] %vm266, 0.0
          %390 = vst.msk [vmem:[#allocation2 + $0x3d8] sm:$0xff] %vm266, 0.0
          %391 = vst.msk [vmem:[#allocation2 + $0x3e0] sm:$0xff] %vm266, 0.0
          %392 = vst.msk [vmem:[#allocation2 + $0x3e8] sm:$0xff] %vm266, 0.0
          %393 = vst.msk [vmem:[#allocation2 + $0x3f0] sm:$0xff] %vm266, 0.0
          %394 = vst.msk [vmem:[#allocation2 + $0x3f8] sm:$0xff] %vm266, 0.0
        $region48: #{tpu_custom_call.1} parent=31 // pred_fallthru
          _
        %v395 = vld [vmem:[#allocation2] sm:$0xff]
        %v396 = vld [vmem:[#allocation2 + $0x8] sm:$0xff]
        %v397 = vld [vmem:[#allocation2 + $0x10] sm:$0xff]
        %v398 = vld [vmem:[#allocation2 + $0x18] sm:$0xff]
        %v399 = vld [vmem:[#allocation2 + $0x20] sm:$0xff]
        %v400 = vld [vmem:[#allocation2 + $0x28] sm:$0xff]
        %v401 = vld [vmem:[#allocation2 + $0x30] sm:$0xff]
        %v402 = vld [vmem:[#allocation2 + $0x38] sm:$0xff]
        %v403 = vld [vmem:[#allocation2 + $0x40] sm:$0xff]
        %v404 = vld [vmem:[#allocation2 + $0x48] sm:$0xff]
        %v405 = vld [vmem:[#allocation2 + $0x50] sm:$0xff]
        %v406 = vld [vmem:[#allocation2 + $0x58] sm:$0xff]
        %v407 = vld [vmem:[#allocation2 + $0x60] sm:$0xff]
        %v408 = vld [vmem:[#allocation2 + $0x68] sm:$0xff]
        %v409 = vld [vmem:[#allocation2 + $0x70] sm:$0xff]
        %v410 = vld [vmem:[#allocation2 + $0x78] sm:$0xff]
        %v411 = vld [vmem:[#allocation2 + $0x80] sm:$0xff]
        %v412 = vld [vmem:[#allocation2 + $0x88] sm:$0xff]
        %v413 = vld [vmem:[#allocation2 + $0x90] sm:$0xff]
        %v414 = vld [vmem:[#allocation2 + $0x98] sm:$0xff]
        %v415 = vld [vmem:[#allocation2 + $0xa0] sm:$0xff]
        %v416 = vld [vmem:[#allocation2 + $0xa8] sm:$0xff]
        %v417 = vld [vmem:[#allocation2 + $0xb0] sm:$0xff]
        %v418 = vld [vmem:[#allocation2 + $0xb8] sm:$0xff]
        %v419 = vld [vmem:[#allocation2 + $0xc0] sm:$0xff]
        %v420 = vld [vmem:[#allocation2 + $0xc8] sm:$0xff]
        %v421 = vld [vmem:[#allocation2 + $0xd0] sm:$0xff]
        %v422 = vld [vmem:[#allocation2 + $0xd8] sm:$0xff]
        %v423 = vld [vmem:[#allocation2 + $0xe0] sm:$0xff]
        %v424 = vld [vmem:[#allocation2 + $0xe8] sm:$0xff]
        %v425 = vld [vmem:[#allocation2 + $0xf0] sm:$0xff]
        %v426 = vld [vmem:[#allocation2 + $0xf8] sm:$0xff]
        %v427 = vld [vmem:[#allocation2 + $0x100] sm:$0xff]
        %v428 = vld [vmem:[#allocation2 + $0x108] sm:$0xff]
        %v429 = vld [vmem:[#allocation2 + $0x110] sm:$0xff]
        %v430 = vld [vmem:[#allocation2 + $0x118] sm:$0xff]
        %v431 = vld [vmem:[#allocation2 + $0x120] sm:$0xff]
        %v432 = vld [vmem:[#allocation2 + $0x128] sm:$0xff]
        %v433 = vld [vmem:[#allocation2 + $0x130] sm:$0xff]
        %v434 = vld [vmem:[#allocation2 + $0x138] sm:$0xff]
        %v435 = vld [vmem:[#allocation2 + $0x140] sm:$0xff]
        %v436 = vld [vmem:[#allocation2 + $0x148] sm:$0xff]
        %v437 = vld [vmem:[#allocation2 + $0x150] sm:$0xff]
        %v438 = vld [vmem:[#allocation2 + $0x158] sm:$0xff]
        %v439 = vld [vmem:[#allocation2 + $0x160] sm:$0xff]
        %v440 = vld [vmem:[#allocation2 + $0x168] sm:$0xff]
        %v441 = vld [vmem:[#allocation2 + $0x170] sm:$0xff]
        %v442 = vld [vmem:[#allocation2 + $0x178] sm:$0xff]
        %v443 = vld [vmem:[#allocation2 + $0x180] sm:$0xff]
        %v444 = vld [vmem:[#allocation2 + $0x188] sm:$0xff]
        %v445 = vld [vmem:[#allocation2 + $0x190] sm:$0xff]
        %v446 = vld [vmem:[#allocation2 + $0x198] sm:$0xff]
        %v447 = vld [vmem:[#allocation2 + $0x1a0] sm:$0xff]
        %v448 = vld [vmem:[#allocation2 + $0x1a8] sm:$0xff]
        %v449 = vld [vmem:[#allocation2 + $0x1b0] sm:$0xff]
        %v450 = vld [vmem:[#allocation2 + $0x1b8] sm:$0xff]
        %v451 = vld [vmem:[#allocation2 + $0x1c0] sm:$0xff]
        %v452 = vld [vmem:[#allocation2 + $0x1c8] sm:$0xff]
        %v453 = vld [vmem:[#allocation2 + $0x1d0] sm:$0xff]
        %v454 = vld [vmem:[#allocation2 + $0x1d8] sm:$0xff]
        %v455 = vld [vmem:[#allocation2 + $0x1e0] sm:$0xff]
        %v456 = vld [vmem:[#allocation2 + $0x1e8] sm:$0xff]
        %v457 = vld [vmem:[#allocation2 + $0x1f0] sm:$0xff]
        %v458 = vld [vmem:[#allocation2 + $0x1f8] sm:$0xff]
        %v459 = vld [vmem:[#allocation2 + $0x200] sm:$0xff]
        %v460 = vld [vmem:[#allocation2 + $0x208] sm:$0xff]
        %v461 = vld [vmem:[#allocation2 + $0x210] sm:$0xff]
        %v462 = vld [vmem:[#allocation2 + $0x218] sm:$0xff]
        %v463 = vld [vmem:[#allocation2 + $0x220] sm:$0xff]
        %v464 = vld [vmem:[#allocation2 + $0x228] sm:$0xff]
        %v465 = vld [vmem:[#allocation2 + $0x230] sm:$0xff]
        %v466 = vld [vmem:[#allocation2 + $0x238] sm:$0xff]
        %v467 = vld [vmem:[#allocation2 + $0x240] sm:$0xff]
        %v468 = vld [vmem:[#allocation2 + $0x248] sm:$0xff]
        %v469 = vld [vmem:[#allocation2 + $0x250] sm:$0xff]
        %v470 = vld [vmem:[#allocation2 + $0x258] sm:$0xff]
        %v471 = vld [vmem:[#allocation2 + $0x260] sm:$0xff]
        %v472 = vld [vmem:[#allocation2 + $0x268] sm:$0xff]
        %v473 = vld [vmem:[#allocation2 + $0x270] sm:$0xff]
        %v474 = vld [vmem:[#allocation2 + $0x278] sm:$0xff]
        %v475 = vld [vmem:[#allocation2 + $0x280] sm:$0xff]
        %v476 = vld [vmem:[#allocation2 + $0x288] sm:$0xff]
        %v477 = vld [vmem:[#allocation2 + $0x290] sm:$0xff]
        %v478 = vld [vmem:[#allocation2 + $0x298] sm:$0xff]
        %v479 = vld [vmem:[#allocation2 + $0x2a0] sm:$0xff]
        %v480 = vld [vmem:[#allocation2 + $0x2a8] sm:$0xff]
        %v481 = vld [vmem:[#allocation2 + $0x2b0] sm:$0xff]
        %v482 = vld [vmem:[#allocation2 + $0x2b8] sm:$0xff]
        %v483 = vld [vmem:[#allocation2 + $0x2c0] sm:$0xff]
        %v484 = vld [vmem:[#allocation2 + $0x2c8] sm:$0xff]
        %v485 = vld [vmem:[#allocation2 + $0x2d0] sm:$0xff]
        %v486 = vld [vmem:[#allocation2 + $0x2d8] sm:$0xff]
        %v487 = vld [vmem:[#allocation2 + $0x2e0] sm:$0xff]
        %v488 = vld [vmem:[#allocation2 + $0x2e8] sm:$0xff]
        %v489 = vld [vmem:[#allocation2 + $0x2f0] sm:$0xff]
        %v490 = vld [vmem:[#allocation2 + $0x2f8] sm:$0xff]
        %v491 = vld [vmem:[#allocation2 + $0x300] sm:$0xff]
        %v492 = vld [vmem:[#allocation2 + $0x308] sm:$0xff]
        %v493 = vld [vmem:[#allocation2 + $0x310] sm:$0xff]
        %v494 = vld [vmem:[#allocation2 + $0x318] sm:$0xff]
        %v495 = vld [vmem:[#allocation2 + $0x320] sm:$0xff]
        %v496 = vld [vmem:[#allocation2 + $0x328] sm:$0xff]
        %v497 = vld [vmem:[#allocation2 + $0x330] sm:$0xff]
        %v498 = vld [vmem:[#allocation2 + $0x338] sm:$0xff]
        %v499 = vld [vmem:[#allocation2 + $0x340] sm:$0xff]
        %v500 = vld [vmem:[#allocation2 + $0x348] sm:$0xff]
        %v501 = vld [vmem:[#allocation2 + $0x350] sm:$0xff]
        %v502 = vld [vmem:[#allocation2 + $0x358] sm:$0xff]
        %v503 = vld [vmem:[#allocation2 + $0x360] sm:$0xff]
        %v504 = vld [vmem:[#allocation2 + $0x368] sm:$0xff]
        %v505 = vld [vmem:[#allocation2 + $0x370] sm:$0xff]
        %v506 = vld [vmem:[#allocation2 + $0x378] sm:$0xff]
        %v507 = vld [vmem:[#allocation2 + $0x380] sm:$0xff]
        %v508 = vld [vmem:[#allocation2 + $0x388] sm:$0xff]
        %v509 = vld [vmem:[#allocation2 + $0x390] sm:$0xff]
        %v510 = vld [vmem:[#allocation2 + $0x398] sm:$0xff]
        %v511 = vld [vmem:[#allocation2 + $0x3a0] sm:$0xff]
        %v512 = vld [vmem:[#allocation2 + $0x3a8] sm:$0xff]
        %v513 = vld [vmem:[#allocation2 + $0x3b0] sm:$0xff]
        %v514 = vld [vmem:[#allocation2 + $0x3b8] sm:$0xff]
        %v515 = vld [vmem:[#allocation2 + $0x3c0] sm:$0xff]
        %v516 = vld [vmem:[#allocation2 + $0x3c8] sm:$0xff]
        %v517 = vld [vmem:[#allocation2 + $0x3d0] sm:$0xff]
        %v518 = vld [vmem:[#allocation2 + $0x3d8] sm:$0xff]
        %v519 = vld [vmem:[#allocation2 + $0x3e0] sm:$0xff]
        %v520 = vld [vmem:[#allocation2 + $0x3e8] sm:$0xff]
        %v521 = vld [vmem:[#allocation2 + $0x3f0] sm:$0xff]
        %v522 = vld [vmem:[#allocation2 + $0x3f8] sm:$0xff]
        %v523 = vld [vmem:[%s227] sm:$0xf]
        %v524 = vld [vmem:[%s227 + $0x4] sm:$0xf]
        %v525 = vld [vmem:[%s227 + $0x8] sm:$0xf]
        %v526 = vld [vmem:[%s227 + $0xc] sm:$0xf]
        %v527 = vld [vmem:[%s227 + $0x10] sm:$0xf]
        %v528 = vld [vmem:[%s227 + $0x14] sm:$0xf]
        %v529 = vld [vmem:[%s227 + $0x18] sm:$0xf]
        %v530 = vld [vmem:[%s227 + $0x1c] sm:$0xf]
        %v531 = vld [vmem:[%s227 + $0x20] sm:$0xf]
        %v532 = vld [vmem:[%s227 + $0x24] sm:$0xf]
        %v533 = vld [vmem:[%s227 + $0x28] sm:$0xf]
        %v534 = vld [vmem:[%s227 + $0x2c] sm:$0xf]
        %v535 = vld [vmem:[%s227 + $0x30] sm:$0xf]
        %v536 = vld [vmem:[%s227 + $0x34] sm:$0xf]
        %v537 = vld [vmem:[%s227 + $0x38] sm:$0xf]
        %v538 = vld [vmem:[%s227 + $0x3c] sm:$0xf]
        %v539 = vld [vmem:[%s227 + $0x40] sm:$0xf]
        %v540 = vld [vmem:[%s227 + $0x44] sm:$0xf]
        %v541 = vld [vmem:[%s227 + $0x48] sm:$0xf]
        %v542 = vld [vmem:[%s227 + $0x4c] sm:$0xf]
        %v543 = vld [vmem:[%s227 + $0x50] sm:$0xf]
        %v544 = vld [vmem:[%s227 + $0x54] sm:$0xf]
        %v545 = vld [vmem:[%s227 + $0x58] sm:$0xf]
        %v546 = vld [vmem:[%s227 + $0x5c] sm:$0xf]
        %v547 = vld [vmem:[%s227 + $0x60] sm:$0xf]
        %v548 = vld [vmem:[%s227 + $0x64] sm:$0xf]
        %v549 = vld [vmem:[%s227 + $0x68] sm:$0xf]
        %v550 = vld [vmem:[%s227 + $0x6c] sm:$0xf]
        %v551 = vld [vmem:[%s227 + $0x70] sm:$0xf]
        %v552 = vld [vmem:[%s227 + $0x74] sm:$0xf]
        %v553 = vld [vmem:[%s227 + $0x78] sm:$0xf]
        %v554 = vld [vmem:[%s227 + $0x7c] sm:$0xf]
        %v555 = vld [vmem:[%s227 + $0x80] sm:$0xf]
        %v556 = vld [vmem:[%s227 + $0x84] sm:$0xf]
        %v557 = vld [vmem:[%s227 + $0x88] sm:$0xf]
        %v558 = vld [vmem:[%s227 + $0x8c] sm:$0xf]
        %v559 = vld [vmem:[%s227 + $0x90] sm:$0xf]
        %v560 = vld [vmem:[%s227 + $0x94] sm:$0xf]
        %v561 = vld [vmem:[%s227 + $0x98] sm:$0xf]
        %v562 = vld [vmem:[%s227 + $0x9c] sm:$0xf]
        %v563 = vld [vmem:[%s227 + $0xa0] sm:$0xf]
        %v564 = vld [vmem:[%s227 + $0xa4] sm:$0xf]
        %v565 = vld [vmem:[%s227 + $0xa8] sm:$0xf]
        %v566 = vld [vmem:[%s227 + $0xac] sm:$0xf]
        %v567 = vld [vmem:[%s227 + $0xb0] sm:$0xf]
        %v568 = vld [vmem:[%s227 + $0xb4] sm:$0xf]
        %v569 = vld [vmem:[%s227 + $0xb8] sm:$0xf]
        %v570 = vld [vmem:[%s227 + $0xbc] sm:$0xf]
        %v571 = vld [vmem:[%s227 + $0xc0] sm:$0xf]
        %v572 = vld [vmem:[%s227 + $0xc4] sm:$0xf]
        %v573 = vld [vmem:[%s227 + $0xc8] sm:$0xf]
        %v574 = vld [vmem:[%s227 + $0xcc] sm:$0xf]
        %v575 = vld [vmem:[%s227 + $0xd0] sm:$0xf]
        %v576 = vld [vmem:[%s227 + $0xd4] sm:$0xf]
        %v577 = vld [vmem:[%s227 + $0xd8] sm:$0xf]
        %v578 = vld [vmem:[%s227 + $0xdc] sm:$0xf]
        %v579 = vld [vmem:[%s227 + $0xe0] sm:$0xf]
        %v580 = vld [vmem:[%s227 + $0xe4] sm:$0xf]
        %v581 = vld [vmem:[%s227 + $0xe8] sm:$0xf]
        %v582 = vld [vmem:[%s227 + $0xec] sm:$0xf]
        %v583 = vld [vmem:[%s227 + $0xf0] sm:$0xf]
        %v584 = vld [vmem:[%s227 + $0xf4] sm:$0xf]
        %v585 = vld [vmem:[%s227 + $0xf8] sm:$0xf]
        %v586 = vld [vmem:[%s227 + $0xfc] sm:$0xf]
        %v587 = vld [vmem:[%s227 + $0x100] sm:$0xf]
        %v588 = vld [vmem:[%s227 + $0x104] sm:$0xf]
        %v589 = vld [vmem:[%s227 + $0x108] sm:$0xf]
        %v590 = vld [vmem:[%s227 + $0x10c] sm:$0xf]
        %v591 = vld [vmem:[%s227 + $0x110] sm:$0xf]
        %v592 = vld [vmem:[%s227 + $0x114] sm:$0xf]
        %v593 = vld [vmem:[%s227 + $0x118] sm:$0xf]
        %v594 = vld [vmem:[%s227 + $0x11c] sm:$0xf]
        %v595 = vld [vmem:[%s227 + $0x120] sm:$0xf]
        %v596 = vld [vmem:[%s227 + $0x124] sm:$0xf]
        %v597 = vld [vmem:[%s227 + $0x128] sm:$0xf]
        %v598 = vld [vmem:[%s227 + $0x12c] sm:$0xf]
        %v599 = vld [vmem:[%s227 + $0x130] sm:$0xf]
        %v600 = vld [vmem:[%s227 + $0x134] sm:$0xf]
        %v601 = vld [vmem:[%s227 + $0x138] sm:$0xf]
        %v602 = vld [vmem:[%s227 + $0x13c] sm:$0xf]
        %v603 = vld [vmem:[%s227 + $0x140] sm:$0xf]
        %v604 = vld [vmem:[%s227 + $0x144] sm:$0xf]
        %v605 = vld [vmem:[%s227 + $0x148] sm:$0xf]
        %v606 = vld [vmem:[%s227 + $0x14c] sm:$0xf]
        %v607 = vld [vmem:[%s227 + $0x150] sm:$0xf]
        %v608 = vld [vmem:[%s227 + $0x154] sm:$0xf]
        %v609 = vld [vmem:[%s227 + $0x158] sm:$0xf]
        %v610 = vld [vmem:[%s227 + $0x15c] sm:$0xf]
        %v611 = vld [vmem:[%s227 + $0x160] sm:$0xf]
        %v612 = vld [vmem:[%s227 + $0x164] sm:$0xf]
        %v613 = vld [vmem:[%s227 + $0x168] sm:$0xf]
        %v614 = vld [vmem:[%s227 + $0x16c] sm:$0xf]
        %v615 = vld [vmem:[%s227 + $0x170] sm:$0xf]
        %v616 = vld [vmem:[%s227 + $0x174] sm:$0xf]
        %v617 = vld [vmem:[%s227 + $0x178] sm:$0xf]
        %v618 = vld [vmem:[%s227 + $0x17c] sm:$0xf]
        %v619 = vld [vmem:[%s227 + $0x180] sm:$0xf]
        %v620 = vld [vmem:[%s227 + $0x184] sm:$0xf]
        %v621 = vld [vmem:[%s227 + $0x188] sm:$0xf]
        %v622 = vld [vmem:[%s227 + $0x18c] sm:$0xf]
        %v623 = vld [vmem:[%s227 + $0x190] sm:$0xf]
        %v624 = vld [vmem:[%s227 + $0x194] sm:$0xf]
        %v625 = vld [vmem:[%s227 + $0x198] sm:$0xf]
        %v626 = vld [vmem:[%s227 + $0x19c] sm:$0xf]
        %v627 = vld [vmem:[%s227 + $0x1a0] sm:$0xf]
        %v628 = vld [vmem:[%s227 + $0x1a4] sm:$0xf]
        %v629 = vld [vmem:[%s227 + $0x1a8] sm:$0xf]
        %v630 = vld [vmem:[%s227 + $0x1ac] sm:$0xf]
        %v631 = vld [vmem:[%s227 + $0x1b0] sm:$0xf]
        %v632 = vld [vmem:[%s227 + $0x1b4] sm:$0xf]
        %v633 = vld [vmem:[%s227 + $0x1b8] sm:$0xf]
        %v634 = vld [vmem:[%s227 + $0x1bc] sm:$0xf]
        %v635 = vld [vmem:[%s227 + $0x1c0] sm:$0xf]
        %v636 = vld [vmem:[%s227 + $0x1c4] sm:$0xf]
        %v637 = vld [vmem:[%s227 + $0x1c8] sm:$0xf]
        %v638 = vld [vmem:[%s227 + $0x1cc] sm:$0xf]
        %v639 = vld [vmem:[%s227 + $0x1d0] sm:$0xf]
        %v640 = vld [vmem:[%s227 + $0x1d4] sm:$0xf]
        %v641 = vld [vmem:[%s227 + $0x1d8] sm:$0xf]
        %v642 = vld [vmem:[%s227 + $0x1dc] sm:$0xf]
        %v643 = vld [vmem:[%s227 + $0x1e0] sm:$0xf]
        %v644 = vld [vmem:[%s227 + $0x1e4] sm:$0xf]
        %v645 = vld [vmem:[%s227 + $0x1e8] sm:$0xf]
        %v646 = vld [vmem:[%s227 + $0x1ec] sm:$0xf]
        %v647 = vld [vmem:[%s227 + $0x1f0] sm:$0xf]
        %v648 = vld [vmem:[%s227 + $0x1f4] sm:$0xf]
        %v649 = vld [vmem:[%s227 + $0x1f8] sm:$0xf]
        %v650 = vld [vmem:[%s227 + $0x1fc] sm:$0xf]
        %v651 = vld [vmem:[#allocation6] sm:$0xf]
        %v652 = vld [vmem:[#allocation6 + $0x4] sm:$0xf]
        %v653 = vld [vmem:[#allocation6 + $0x8] sm:$0xf]
        %v654 = vld [vmem:[#allocation6 + $0xc] sm:$0x3]
        %v783 = vunpack.c.l.b16 %v523
        %v784 = vunpack.c.l.b16 %v524
        %v785 = vunpack.c.l.b16 %v525
        %v786 = vunpack.c.l.b16 %v526
        %v787 = vunpack.c.l.b16 %v527
        %v788 = vunpack.c.l.b16 %v528
        %v789 = vunpack.c.l.b16 %v529
        %v790 = vunpack.c.l.b16 %v530
        %v791 = vunpack.c.l.b16 %v531
        %v792 = vunpack.c.l.b16 %v532
        %v793 = vunpack.c.l.b16 %v533
        %v794 = vunpack.c.l.b16 %v534
        %v795 = vunpack.c.l.b16 %v535
        %v796 = vunpack.c.l.b16 %v536
        %v797 = vunpack.c.l.b16 %v537
        %v798 = vunpack.c.l.b16 %v538
        %v799 = vunpack.c.l.b16 %v539
        %v800 = vunpack.c.l.b16 %v540
        %v801 = vunpack.c.l.b16 %v541
        %v802 = vunpack.c.l.b16 %v542
        %v803 = vunpack.c.l.b16 %v543
        %v804 = vunpack.c.l.b16 %v544
        %v805 = vunpack.c.l.b16 %v545
        %v806 = vunpack.c.l.b16 %v546
        %v807 = vunpack.c.l.b16 %v547
        %v808 = vunpack.c.l.b16 %v548
        %v809 = vunpack.c.l.b16 %v549
        %v810 = vunpack.c.l.b16 %v550
        %v811 = vunpack.c.l.b16 %v551
        %v812 = vunpack.c.l.b16 %v552
        %v813 = vunpack.c.l.b16 %v553
        %v814 = vunpack.c.l.b16 %v554
        %v815 = vunpack.c.l.b16 %v555
        %v816 = vunpack.c.l.b16 %v556
        %v817 = vunpack.c.l.b16 %v557
        %v818 = vunpack.c.l.b16 %v558
        %v819 = vunpack.c.l.b16 %v559
        %v820 = vunpack.c.l.b16 %v560
        %v821 = vunpack.c.l.b16 %v561
        %v822 = vunpack.c.l.b16 %v562
        %v823 = vunpack.c.l.b16 %v563
        %v824 = vunpack.c.l.b16 %v564
        %v825 = vunpack.c.l.b16 %v565
        %v826 = vunpack.c.l.b16 %v566
        %v827 = vunpack.c.l.b16 %v567
        %v828 = vunpack.c.l.b16 %v568
        %v829 = vunpack.c.l.b16 %v569
        %v830 = vunpack.c.l.b16 %v570
        %v831 = vunpack.c.l.b16 %v571
        %v832 = vunpack.c.l.b16 %v572
        %v833 = vunpack.c.l.b16 %v573
        %v834 = vunpack.c.l.b16 %v574
        %v835 = vunpack.c.l.b16 %v575
        %v836 = vunpack.c.l.b16 %v576
        %v837 = vunpack.c.l.b16 %v577
        %v838 = vunpack.c.l.b16 %v578
        %v839 = vunpack.c.l.b16 %v579
        %v840 = vunpack.c.l.b16 %v580
        %v841 = vunpack.c.l.b16 %v581
        %v842 = vunpack.c.l.b16 %v582
        %v843 = vunpack.c.l.b16 %v583
        %v844 = vunpack.c.l.b16 %v584
        %v845 = vunpack.c.l.b16 %v585
        %v846 = vunpack.c.l.b16 %v586
        %v847 = vunpack.c.l.b16 %v587
        %v848 = vunpack.c.l.b16 %v588
        %v849 = vunpack.c.l.b16 %v589
        %v850 = vunpack.c.l.b16 %v590
        %v851 = vunpack.c.l.b16 %v591
        %v852 = vunpack.c.l.b16 %v592
        %v853 = vunpack.c.l.b16 %v593
        %v854 = vunpack.c.l.b16 %v594
        %v855 = vunpack.c.l.b16 %v595
        %v856 = vunpack.c.l.b16 %v596
        %v857 = vunpack.c.l.b16 %v597
        %v858 = vunpack.c.l.b16 %v598
        %v859 = vunpack.c.l.b16 %v599
        %v860 = vunpack.c.l.b16 %v600
        %v861 = vunpack.c.l.b16 %v601
        %v862 = vunpack.c.l.b16 %v602
        %v863 = vunpack.c.l.b16 %v603
        %v864 = vunpack.c.l.b16 %v604
        %v865 = vunpack.c.l.b16 %v605
        %v866 = vunpack.c.l.b16 %v606
        %v867 = vunpack.c.l.b16 %v607
        %v868 = vunpack.c.l.b16 %v608
        %v869 = vunpack.c.l.b16 %v609
        %v870 = vunpack.c.l.b16 %v610
        %v871 = vunpack.c.l.b16 %v611
        %v872 = vunpack.c.l.b16 %v612
        %v873 = vunpack.c.l.b16 %v613
        %v874 = vunpack.c.l.b16 %v614
        %v875 = vunpack.c.l.b16 %v615
        %v876 = vunpack.c.l.b16 %v616
        %v877 = vunpack.c.l.b16 %v617
        %v878 = vunpack.c.l.b16 %v618
        %v879 = vunpack.c.l.b16 %v619
        %v880 = vunpack.c.l.b16 %v620
        %v881 = vunpack.c.l.b16 %v621
        %v882 = vunpack.c.l.b16 %v622
        %v883 = vunpack.c.l.b16 %v623
        %v884 = vunpack.c.l.b16 %v624
        %v885 = vunpack.c.l.b16 %v625
        %v886 = vunpack.c.l.b16 %v626
        %v887 = vunpack.c.l.b16 %v627
        %v888 = vunpack.c.l.b16 %v628
        %v889 = vunpack.c.l.b16 %v629
        %v890 = vunpack.c.l.b16 %v630
        %v891 = vunpack.c.l.b16 %v631
        %v892 = vunpack.c.l.b16 %v632
        %v893 = vunpack.c.l.b16 %v633
        %v894 = vunpack.c.l.b16 %v634
        %v895 = vunpack.c.l.b16 %v635
        %v896 = vunpack.c.l.b16 %v636
        %v897 = vunpack.c.l.b16 %v637
        %v898 = vunpack.c.l.b16 %v638
        %v899 = vunpack.c.l.b16 %v639
        %v900 = vunpack.c.l.b16 %v640
        %v901 = vunpack.c.l.b16 %v641
        %v902 = vunpack.c.l.b16 %v642
        %v903 = vunpack.c.l.b16 %v643
        %v904 = vunpack.c.l.b16 %v644
        %v905 = vunpack.c.l.b16 %v645
        %v906 = vunpack.c.l.b16 %v646
        %v907 = vunpack.c.l.b16 %v647
        %v908 = vunpack.c.l.b16 %v648
        %v909 = vunpack.c.l.b16 %v649
        %v910 = vunpack.c.l.b16 %v650
        %v911 = vpack.c.b16 %v784, %v783
        %v912 = vpack.c.b16 %v786, %v785
        %v913 = vpack.c.b16 %v788, %v787
        %v914 = vpack.c.b16 %v790, %v789
        %v915 = vpack.c.b16 %v792, %v791
        %v916 = vpack.c.b16 %v794, %v793
        %v917 = vpack.c.b16 %v796, %v795
        %v918 = vpack.c.b16 %v798, %v797
        %v919 = vpack.c.b16 %v800, %v799
        %v920 = vpack.c.b16 %v802, %v801
        %v921 = vpack.c.b16 %v804, %v803
        %v922 = vpack.c.b16 %v806, %v805
        %v923 = vpack.c.b16 %v808, %v807
        %v924 = vpack.c.b16 %v810, %v809
        %v925 = vpack.c.b16 %v812, %v811
        %v926 = vpack.c.b16 %v814, %v813
        %v927 = vpack.c.b16 %v816, %v815
        %v928 = vpack.c.b16 %v818, %v817
        %v929 = vpack.c.b16 %v820, %v819
        %v930 = vpack.c.b16 %v822, %v821
        %v931 = vpack.c.b16 %v824, %v823
        %v932 = vpack.c.b16 %v826, %v825
        %v933 = vpack.c.b16 %v828, %v827
        %v934 = vpack.c.b16 %v830, %v829
        %v935 = vpack.c.b16 %v832, %v831
        %v936 = vpack.c.b16 %v834, %v833
        %v937 = vpack.c.b16 %v836, %v835
        %v938 = vpack.c.b16 %v838, %v837
        %v939 = vpack.c.b16 %v840, %v839
        %v940 = vpack.c.b16 %v842, %v841
        %v941 = vpack.c.b16 %v844, %v843
        %v942 = vpack.c.b16 %v846, %v845
        %v943 = vpack.c.b16 %v848, %v847
        %v944 = vpack.c.b16 %v850, %v849
        %v945 = vpack.c.b16 %v852, %v851
        %v946 = vpack.c.b16 %v854, %v853
        %v947 = vpack.c.b16 %v856, %v855
        %v948 = vpack.c.b16 %v858, %v857
        %v949 = vpack.c.b16 %v860, %v859
        %v950 = vpack.c.b16 %v862, %v861
        %v951 = vpack.c.b16 %v864, %v863
        %v952 = vpack.c.b16 %v866, %v865
        %v953 = vpack.c.b16 %v868, %v867
        %v954 = vpack.c.b16 %v870, %v869
        %v955 = vpack.c.b16 %v872, %v871
        %v956 = vpack.c.b16 %v874, %v873
        %v957 = vpack.c.b16 %v876, %v875
        %v958 = vpack.c.b16 %v878, %v877
        %v959 = vpack.c.b16 %v880, %v879
        %v960 = vpack.c.b16 %v882, %v881
        %v961 = vpack.c.b16 %v884, %v883
        %v962 = vpack.c.b16 %v886, %v885
        %v963 = vpack.c.b16 %v888, %v887
        %v964 = vpack.c.b16 %v890, %v889
        %v965 = vpack.c.b16 %v892, %v891
        %v966 = vpack.c.b16 %v894, %v893
        %v967 = vpack.c.b16 %v896, %v895
        %v968 = vpack.c.b16 %v898, %v897
        %v969 = vpack.c.b16 %v900, %v899
        %v970 = vpack.c.b16 %v902, %v901
        %v971 = vpack.c.b16 %v904, %v903
        %v972 = vpack.c.b16 %v906, %v905
        %v973 = vpack.c.b16 %v908, %v907
        %v974 = vpack.c.b16 %v910, %v909
        %v979 = vunpack.c.l.b16 %v651
        %v980 = vunpack.c.l.b16 %v652
        %v981 = vunpack.c.l.b16 %v653
        %v982 = vunpack.c.l.b16 %v654
        %v983 = vpack.c.b16 %v980, %v979
        %v984 = vpack.c.b16 %v982, %v981
        %vm986 = vcmask 220160
        %v988 = vsel %vm986, %v911, 0
        %v991 = vsel %vm986, %v912, 0
        %v994 = vsel %vm986, %v913, 0
        %v997 = vsel %vm986, %v914, 0
        %v1000 = vsel %vm986, %v915, 0
        %v1003 = vsel %vm986, %v916, 0
        %v1006 = vsel %vm986, %v917, 0
        %v1009 = vsel %vm986, %v918, 0
        %v1012 = vsel %vm986, %v919, 0
        %v1015 = vsel %vm986, %v920, 0
        %v1018 = vsel %vm986, %v921, 0
        %v1021 = vsel %vm986, %v922, 0
        %v1024 = vsel %vm986, %v923, 0
        %v1027 = vsel %vm986, %v924, 0
        %v1030 = vsel %vm986, %v925, 0
        %v1033 = vsel %vm986, %v926, 0
        %v1036 = vsel %vm986, %v927, 0
        %v1039 = vsel %vm986, %v928, 0
        %v1042 = vsel %vm986, %v929, 0
        %v1045 = vsel %vm986, %v930, 0
        %v1048 = vsel %vm986, %v931, 0
        %v1051 = vsel %vm986, %v932, 0
        %v1054 = vsel %vm986, %v933, 0
        %v1057 = vsel %vm986, %v934, 0
        %v1060 = vsel %vm986, %v935, 0
        %v1063 = vsel %vm986, %v936, 0
        %v1066 = vsel %vm986, %v937, 0
        %v1069 = vsel %vm986, %v938, 0
        %v1072 = vsel %vm986, %v939, 0
        %v1075 = vsel %vm986, %v940, 0
        %v1078 = vsel %vm986, %v941, 0
        %v1081 = vsel %vm986, %v942, 0
        %v1084 = vsel %vm986, %v943, 0
        %v1087 = vsel %vm986, %v944, 0
        %v1090 = vsel %vm986, %v945, 0
        %v1093 = vsel %vm986, %v946, 0
        %v1096 = vsel %vm986, %v947, 0
        %v1099 = vsel %vm986, %v948, 0
        %v1102 = vsel %vm986, %v949, 0
        %v1105 = vsel %vm986, %v950, 0
        %v1108 = vsel %vm986, %v951, 0
        %v1111 = vsel %vm986, %v952, 0
        %v1114 = vsel %vm986, %v953, 0
        %v1117 = vsel %vm986, %v954, 0
        %v1120 = vsel %vm986, %v955, 0
        %v1123 = vsel %vm986, %v956, 0
        %v1126 = vsel %vm986, %v957, 0
        %v1129 = vsel %vm986, %v958, 0
        %v1132 = vsel %vm986, %v959, 0
        %v1135 = vsel %vm986, %v960, 0
        %v1138 = vsel %vm986, %v961, 0
        %v1141 = vsel %vm986, %v962, 0
        %v1144 = vsel %vm986, %v963, 0
        %v1147 = vsel %vm986, %v964, 0
        %v1150 = vsel %vm986, %v965, 0
        %v1153 = vsel %vm986, %v966, 0
        %v1156 = vsel %vm986, %v967, 0
        %v1159 = vsel %vm986, %v968, 0
        %v1162 = vsel %vm986, %v969, 0
        %v1165 = vsel %vm986, %v970, 0
        %v1168 = vsel %vm986, %v971, 0
        %v1171 = vsel %vm986, %v972, 0
        %v1174 = vsel %vm986, %v973, 0
        %v1177 = vsel %vm986, %v974, 0
        %vm1179 = vcmask 1044480
        %vm1180 = vcmask 1045504
        %v1181 = vsel %vm1179, 4294967295, 65535
        %v1182 = vsel %vm1180, %v1181, 0
        %v1184 = vand.u32 %v984, %v1182
        %1186 = vmatprep.subr.bf16.mxu0 0
        %1187 = vmatpush1.bf16.msra.mxu0 %v983
        %1188 = vmatprep.subr.bf16.mxu0 0
        %1189 = vmatpush1.bf16.msra.mxu0 %v1184
        %1190 = vmatprep.subr.bf16.mxu0 0
        %1191 = vmatpush1.bf16.msra.mxu0 0
        %1192 = vmatprep.subr.bf16.mxu0 0
        %1193 = vmatpush1.bf16.msra.mxu0 0
        %1194 = vmatprep.subr.bf16.mxu0 0
        %1195 = vmatpush1.bf16.msra.mxu0 0
        %1196 = vmatprep.subr.bf16.mxu0 0
        %1197 = vmatpush1.bf16.msra.mxu0 0
        %1198 = vmatprep.subr.bf16.mxu0 0
        %1199 = vmatpush1.bf16.msra.mxu0 0
        %1200 = vmatprep.subr.bf16.mxu0 0
        %1201 = vmatpush1.bf16.msra.mxu0 0
        %1202 = vmatprep.subr.bf16.mxu0 0
        %1203 = vmatpush1.bf16.msra.mxu0 0
        %1204 = vmatprep.subr.bf16.mxu0 0
        %1205 = vmatpush1.bf16.msra.mxu0 0
        %1206 = vmatprep.subr.bf16.mxu0 0
        %1207 = vmatpush1.bf16.msra.mxu0 0
        %1208 = vmatprep.subr.bf16.mxu0 0
        %1209 = vmatpush1.bf16.msra.mxu0 0
        %1210 = vmatprep.subr.bf16.mxu0 0
        %1211 = vmatpush1.bf16.msra.mxu0 0
        %1212 = vmatprep.subr.bf16.mxu0 0
        %1213 = vmatpush1.bf16.msra.mxu0 0
        %1214 = vmatprep.subr.bf16.mxu0 0
        %1215 = vmatpush1.bf16.msra.mxu0 0
        %1216 = vmatprep.subr.bf16.mxu0 0
        %1217 = vmatpush1.bf16.msra.mxu0 0
        %1218 = vmatprep.mubr.bf16.mxu0 0
        %1219 = vmatmul.mubr.bf16.gmra.mrb[0].mxu0 %v988
        %v1220 = vpop.f32.mrb[0].mxu0
        %v1221 = vadd.f32 0.0, %v1220
        %v1222 = vpop.f32.mrb[0].mxu0
        %v1223 = vpop.f32.mrb[0].mxu0
        %v1224 = vadd.f32 0.0, %v1223
        %v1225 = vpop.f32.mrb[0].mxu0
        %1226 = vmatprep.mubr.bf16.mxu0 0
        %1227 = vmatmul.mubr.bf16.gmra.mrb[0].mxu0 %v991
        %v1228 = vpop.f32.mrb[0].mxu0
        %v1229 = vadd.f32 0.0, %v1228
        %v1230 = vpop.f32.mrb[0].mxu0
        %v1231 = vpop.f32.mrb[0].mxu0
        %v1232 = vadd.f32 0.0, %v1231
        %v1233 = vpop.f32.mrb[0].mxu0
        %1234 = vmatprep.mubr.bf16.mxu0 0
        %1235 = vmatmul.mubr.bf16.gmra.mrb[0].mxu0 %v994
        %v1236 = vpop.f32.mrb[0].mxu0
        %v1237 = vadd.f32 0.0, %v1236
        %v1238 = vpop.f32.mrb[0].mxu0
        %v1239 = vpop.f32.mrb[0].mxu0
        %v1240 = vadd.f32 0.0, %v1239
        %v1241 = vpop.f32.mrb[0].mxu0
        %1242 = vmatprep.mubr.bf16.mxu0 0
        %1243 = vmatmul.mubr.bf16.gmra.mrb[0].mxu0 %v997
        %v1244 = vpop.f32.mrb[0].mxu0
        %v1245 = vadd.f32 0.0, %v1244
        %v1246 = vpop.f32.mrb[0].mxu0
        %v1247 = vpop.f32.mrb[0].mxu0
        %v1248 = vadd.f32 0.0, %v1247
        %v1249 = vpop.f32.mrb[0].mxu0
        %1250 = vmatprep.mubr.bf16.mxu0 0
        %1251 = vmatmul.mubr.bf16.gmra.mrb[0].mxu0 %v1000
        %v1252 = vpop.f32.mrb[0].mxu0
        %v1253 = vadd.f32 0.0, %v1252
        %v1254 = vpop.f32.mrb[0].mxu0
        %v1255 = vpop.f32.mrb[0].mxu0
        %v1256 = vadd.f32 0.0, %v1255
        %v1257 = vpop.f32.mrb[0].mxu0
        %1258 = vmatprep.mubr.bf16.mxu0 0
        %1259 = vmatmul.mubr.bf16.gmra.mrb[0].mxu0 %v1003
        %v1260 = vpop.f32.mrb[0].mxu0
        %v1261 = vadd.f32 0.0, %v1260
        %v1262 = vpop.f32.mrb[0].mxu0
        %v1263 = vpop.f32.mrb[0].mxu0
        %v1264 = vadd.f32 0.0, %v1263
        %v1265 = vpop.f32.mrb[0].mxu0
        %1266 = vmatprep.mubr.bf16.mxu0 0
        %1267 = vmatmul.mubr.bf16.gmra.mrb[0].mxu0 %v1006
        %v1268 = vpop.f32.mrb[0].mxu0
        %v1269 = vadd.f32 0.0, %v1268
        %v1270 = vpop.f32.mrb[0].mxu0
        %v1271 = vpop.f32.mrb[0].mxu0
        %v1272 = vadd.f32 0.0, %v1271
        %v1273 = vpop.f32.mrb[0].mxu0
        %1274 = vmatprep.mubr.bf16.mxu0 0
        %1275 = vmatmul.mubr.bf16.gmra.mrb[0].mxu0 %v1009
        %v1276 = vpop.f32.mrb[0].mxu0
        %v1277 = vadd.f32 0.0, %v1276
        %v1278 = vpop.f32.mrb[0].mxu0
        %v1279 = vpop.f32.mrb[0].mxu0
        %v1280 = vadd.f32 0.0, %v1279
        %v1281 = vpop.f32.mrb[0].mxu0
        %1282 = vmatprep.mubr.bf16.mxu0 0
        %1283 = vmatmul.mubr.bf16.gmra.mrb[0].mxu0 %v1012
        %v1284 = vpop.f32.mrb[0].mxu0
        %v1285 = vadd.f32 0.0, %v1284
        %v1286 = vpop.f32.mrb[0].mxu0
        %v1287 = vpop.f32.mrb[0].mxu0
        %v1288 = vadd.f32 0.0, %v1287
        %v1289 = vpop.f32.mrb[0].mxu0
        %1290 = vmatprep.mubr.bf16.mxu0 0
        %1291 = vmatmul.mubr.bf16.gmra.mrb[0].mxu0 %v1015
        %v1292 = vpop.f32.mrb[0].mxu0
        %v1293 = vadd.f32 0.0, %v1292
        %v1294 = vpop.f32.mrb[0].mxu0
        %v1295 = vpop.f32.mrb[0].mxu0
        %v1296 = vadd.f32 0.0, %v1295
        %v1297 = vpop.f32.mrb[0].mxu0
        %1298 = vmatprep.mubr.bf16.mxu0 0
        %1299 = vmatmul.mubr.bf16.gmra.mrb[0].mxu0 %v1018
        %v1300 = vpop.f32.mrb[0].mxu0
        %v1301 = vadd.f32 0.0, %v1300
        %v1302 = vpop.f32.mrb[0].mxu0
        %v1303 = vpop.f32.mrb[0].mxu0
        %v1304 = vadd.f32 0.0, %v1303
        %v1305 = vpop.f32.mrb[0].mxu0
        %1306 = vmatprep.mubr.bf16.mxu0 0
        %1307 = vmatmul.mubr.bf16.gmra.mrb[0].mxu0 %v1021
        %v1308 = vpop.f32.mrb[0].mxu0
        %v1309 = vadd.f32 0.0, %v1308
        %v1310 = vpop.f32.mrb[0].mxu0
        %v1311 = vpop.f32.mrb[0].mxu0
        %v1312 = vadd.f32 0.0, %v1311
        %v1313 = vpop.f32.mrb[0].mxu0
        %1314 = vmatprep.mubr.bf16.mxu0 0
        %1315 = vmatmul.mubr.bf16.gmra.mrb[0].mxu0 %v1024
        %v1316 = vpop.f32.mrb[0].mxu0
        %v1317 = vadd.f32 0.0, %v1316
        %v1318 = vpop.f32.mrb[0].mxu0
        %v1319 = vpop.f32.mrb[0].mxu0
        %v1320 = vadd.f32 0.0, %v1319
        %v1321 = vpop.f32.mrb[0].mxu0
        %1322 = vmatprep.mubr.bf16.mxu0 0
        %1323 = vmatmul.mubr.bf16.gmra.mrb[0].mxu0 %v1027
        %v1324 = vpop.f32.mrb[0].mxu0
        %v1325 = vadd.f32 0.0, %v1324
        %v1326 = vpop.f32.mrb[0].mxu0
        %v1327 = vpop.f32.mrb[0].mxu0
        %v1328 = vadd.f32 0.0, %v1327
        %v1329 = vpop.f32.mrb[0].mxu0
        %1330 = vmatprep.mubr.bf16.mxu0 0
        %1331 = vmatmul.mubr.bf16.gmra.mrb[0].mxu0 %v1030
        %v1332 = vpop.f32.mrb[0].mxu0
        %v1333 = vadd.f32 0.0, %v1332
        %v1334 = vpop.f32.mrb[0].mxu0
        %v1335 = vpop.f32.mrb[0].mxu0
        %v1336 = vadd.f32 0.0, %v1335
        %v1337 = vpop.f32.mrb[0].mxu0
        %1338 = vmatprep.mubr.bf16.mxu0 0
        %1339 = vmatmul.mubr.bf16.gmra.mrb[0].mxu0 %v1033
        %v1340 = vpop.f32.mrb[0].mxu0
        %v1341 = vadd.f32 0.0, %v1340
        %v1342 = vpop.f32.mrb[0].mxu0
        %v1343 = vpop.f32.mrb[0].mxu0
        %v1344 = vadd.f32 0.0, %v1343
        %v1345 = vpop.f32.mrb[0].mxu0
        %1346 = vmatprep.mubr.bf16.mxu0 0
        %1347 = vmatmul.mubr.bf16.gmra.mrb[0].mxu0 %v1036
        %v1348 = vpop.f32.mrb[0].mxu0
        %v1349 = vadd.f32 0.0, %v1348
        %v1350 = vpop.f32.mrb[0].mxu0
        %v1351 = vpop.f32.mrb[0].mxu0
        %v1352 = vadd.f32 0.0, %v1351
        %v1353 = vpop.f32.mrb[0].mxu0
        %1354 = vmatprep.mubr.bf16.mxu0 0
        %1355 = vmatmul.mubr.bf16.gmra.mrb[0].mxu0 %v1039
        %v1356 = vpop.f32.mrb[0].mxu0
        %v1357 = vadd.f32 0.0, %v1356
        %v1358 = vpop.f32.mrb[0].mxu0
        %v1359 = vpop.f32.mrb[0].mxu0
        %v1360 = vadd.f32 0.0, %v1359
        %v1361 = vpop.f32.mrb[0].mxu0
        %1362 = vmatprep.mubr.bf16.mxu0 0
        %1363 = vmatmul.mubr.bf16.gmra.mrb[0].mxu0 %v1042
        %v1364 = vpop.f32.mrb[0].mxu0
        %v1365 = vadd.f32 0.0, %v1364
        %v1366 = vpop.f32.mrb[0].mxu0
        %v1367 = vpop.f32.mrb[0].mxu0
        %v1368 = vadd.f32 0.0, %v1367
        %v1369 = vpop.f32.mrb[0].mxu0
        %1370 = vmatprep.mubr.bf16.mxu0 0
        %1371 = vmatmul.mubr.bf16.gmra.mrb[0].mxu0 %v1045
        %v1372 = vpop.f32.mrb[0].mxu0
        %v1373 = vadd.f32 0.0, %v1372
        %v1374 = vpop.f32.mrb[0].mxu0
        %v1375 = vpop.f32.mrb[0].mxu0
        %v1376 = vadd.f32 0.0, %v1375
        %v1377 = vpop.f32.mrb[0].mxu0
        %1378 = vmatprep.mubr.bf16.mxu0 0
        %1379 = vmatmul.mubr.bf16.gmra.mrb[0].mxu0 %v1048
        %v1380 = vpop.f32.mrb[0].mxu0
        %v1381 = vadd.f32 0.0, %v1380
        %v1382 = vpop.f32.mrb[0].mxu0
        %v1383 = vpop.f32.mrb[0].mxu0
        %v1384 = vadd.f32 0.0, %v1383
        %v1385 = vpop.f32.mrb[0].mxu0
        %1386 = vmatprep.mubr.bf16.mxu0 0
        %1387 = vmatmul.mubr.bf16.gmra.mrb[0].mxu0 %v1051
        %v1388 = vpop.f32.mrb[0].mxu0
        %v1389 = vadd.f32 0.0, %v1388
        %v1390 = vpop.f32.mrb[0].mxu0
        %v1391 = vpop.f32.mrb[0].mxu0
        %v1392 = vadd.f32 0.0, %v1391
        %v1393 = vpop.f32.mrb[0].mxu0
        %1394 = vmatprep.mubr.bf16.mxu0 0
        %1395 = vmatmul.mubr.bf16.gmra.mrb[0].mxu0 %v1054
        %v1396 = vpop.f32.mrb[0].mxu0
        %v1397 = vadd.f32 0.0, %v1396
        %v1398 = vpop.f32.mrb[0].mxu0
        %v1399 = vpop.f32.mrb[0].mxu0
        %v1400 = vadd.f32 0.0, %v1399
        %v1401 = vpop.f32.mrb[0].mxu0
        %1402 = vmatprep.mubr.bf16.mxu0 0
        %1403 = vmatmul.mubr.bf16.gmra.mrb[0].mxu0 %v1057
        %v1404 = vpop.f32.mrb[0].mxu0
        %v1405 = vadd.f32 0.0, %v1404
        %v1406 = vpop.f32.mrb[0].mxu0
        %v1407 = vpop.f32.mrb[0].mxu0
        %v1408 = vadd.f32 0.0, %v1407
        %v1409 = vpop.f32.mrb[0].mxu0
        %1410 = vmatprep.mubr.bf16.mxu0 0
        %1411 = vmatmul.mubr.bf16.gmra.mrb[0].mxu0 %v1060
        %v1412 = vpop.f32.mrb[0].mxu0
        %v1413 = vadd.f32 0.0, %v1412
        %v1414 = vpop.f32.mrb[0].mxu0
        %v1415 = vpop.f32.mrb[0].mxu0
        %v1416 = vadd.f32 0.0, %v1415
        %v1417 = vpop.f32.mrb[0].mxu0
        %1418 = vmatprep.mubr.bf16.mxu0 0
        %1419 = vmatmul.mubr.bf16.gmra.mrb[0].mxu0 %v1063
        %v1420 = vpop.f32.mrb[0].mxu0
        %v1421 = vadd.f32 0.0, %v1420
        %v1422 = vpop.f32.mrb[0].mxu0
        %v1423 = vpop.f32.mrb[0].mxu0
        %v1424 = vadd.f32 0.0, %v1423
        %v1425 = vpop.f32.mrb[0].mxu0
        %1426 = vmatprep.mubr.bf16.mxu0 0
        %1427 = vmatmul.mubr.bf16.gmra.mrb[0].mxu0 %v1066
        %v1428 = vpop.f32.mrb[0].mxu0
        %v1429 = vadd.f32 0.0, %v1428
        %v1430 = vpop.f32.mrb[0].mxu0
        %v1431 = vpop.f32.mrb[0].mxu0
        %v1432 = vadd.f32 0.0, %v1431
        %v1433 = vpop.f32.mrb[0].mxu0
        %1434 = vmatprep.mubr.bf16.mxu0 0
        %1435 = vmatmul.mubr.bf16.gmra.mrb[0].mxu0 %v1069
        %v1436 = vpop.f32.mrb[0].mxu0
        %v1437 = vadd.f32 0.0, %v1436
        %v1438 = vpop.f32.mrb[0].mxu0
        %v1439 = vpop.f32.mrb[0].mxu0
        %v1440 = vadd.f32 0.0, %v1439
        %v1441 = vpop.f32.mrb[0].mxu0
        %1442 = vmatprep.mubr.bf16.mxu0 0
        %1443 = vmatmul.mubr.bf16.gmra.mrb[0].mxu0 %v1072
        %v1444 = vpop.f32.mrb[0].mxu0
        %v1445 = vadd.f32 0.0, %v1444
        %v1446 = vpop.f32.mrb[0].mxu0
        %v1447 = vpop.f32.mrb[0].mxu0
        %v1448 = vadd.f32 0.0, %v1447
        %v1449 = vpop.f32.mrb[0].mxu0
        %1450 = vmatprep.mubr.bf16.mxu0 0
        %1451 = vmatmul.mubr.bf16.gmra.mrb[0].mxu0 %v1075
        %v1452 = vpop.f32.mrb[0].mxu0
        %v1453 = vadd.f32 0.0, %v1452
        %v1454 = vpop.f32.mrb[0].mxu0
        %v1455 = vpop.f32.mrb[0].mxu0
        %v1456 = vadd.f32 0.0, %v1455
        %v1457 = vpop.f32.mrb[0].mxu0
        %1458 = vmatprep.mubr.bf16.mxu0 0
        %1459 = vmatmul.mubr.bf16.gmra.mrb[0].mxu0 %v1078
        %v1460 = vpop.f32.mrb[0].mxu0
        %v1461 = vadd.f32 0.0, %v1460
        %v1462 = vpop.f32.mrb[0].mxu0
        %v1463 = vpop.f32.mrb[0].mxu0
        %v1464 = vadd.f32 0.0, %v1463
        %v1465 = vpop.f32.mrb[0].mxu0
        %1466 = vmatprep.mubr.bf16.mxu0 0
        %1467 = vmatmul.mubr.bf16.gmra.mrb[0].mxu0 %v1081
        %v1468 = vpop.f32.mrb[0].mxu0
        %v1469 = vadd.f32 0.0, %v1468
        %v1470 = vpop.f32.mrb[0].mxu0
        %v1471 = vpop.f32.mrb[0].mxu0
        %v1472 = vadd.f32 0.0, %v1471
        %v1473 = vpop.f32.mrb[0].mxu0
        %1474 = vmatprep.mubr.bf16.mxu0 0
        %1475 = vmatmul.mubr.bf16.gmra.mrb[0].mxu0 %v1084
        %v1476 = vpop.f32.mrb[0].mxu0
        %v1477 = vadd.f32 0.0, %v1476
        %v1478 = vpop.f32.mrb[0].mxu0
        %v1479 = vpop.f32.mrb[0].mxu0
        %v1480 = vadd.f32 0.0, %v1479
        %v1481 = vpop.f32.mrb[0].mxu0
        %1482 = vmatprep.mubr.bf16.mxu0 0
        %1483 = vmatmul.mubr.bf16.gmra.mrb[0].mxu0 %v1087
        %v1484 = vpop.f32.mrb[0].mxu0
        %v1485 = vadd.f32 0.0, %v1484
        %v1486 = vpop.f32.mrb[0].mxu0
        %v1487 = vpop.f32.mrb[0].mxu0
        %v1488 = vadd.f32 0.0, %v1487
        %v1489 = vpop.f32.mrb[0].mxu0
        %1490 = vmatprep.mubr.bf16.mxu0 0
        %1491 = vmatmul.mubr.bf16.gmra.mrb[0].mxu0 %v1090
        %v1492 = vpop.f32.mrb[0].mxu0
        %v1493 = vadd.f32 0.0, %v1492
        %v1494 = vpop.f32.mrb[0].mxu0
        %v1495 = vpop.f32.mrb[0].mxu0
        %v1496 = vadd.f32 0.0, %v1495
        %v1497 = vpop.f32.mrb[0].mxu0
        %1498 = vmatprep.mubr.bf16.mxu0 0
        %1499 = vmatmul.mubr.bf16.gmra.mrb[0].mxu0 %v1093
        %v1500 = vpop.f32.mrb[0].mxu0
        %v1501 = vadd.f32 0.0, %v1500
        %v1502 = vpop.f32.mrb[0].mxu0
        %v1503 = vpop.f32.mrb[0].mxu0
        %v1504 = vadd.f32 0.0, %v1503
        %v1505 = vpop.f32.mrb[0].mxu0
        %1506 = vmatprep.mubr.bf16.mxu0 0
        %1507 = vmatmul.mubr.bf16.gmra.mrb[0].mxu0 %v1096
        %v1508 = vpop.f32.mrb[0].mxu0
        %v1509 = vadd.f32 0.0, %v1508
        %v1510 = vpop.f32.mrb[0].mxu0
        %v1511 = vpop.f32.mrb[0].mxu0
        %v1512 = vadd.f32 0.0, %v1511
        %v1513 = vpop.f32.mrb[0].mxu0
        %1514 = vmatprep.mubr.bf16.mxu0 0
        %1515 = vmatmul.mubr.bf16.gmra.mrb[0].mxu0 %v1099
        %v1516 = vpop.f32.mrb[0].mxu0
        %v1517 = vadd.f32 0.0, %v1516
        %v1518 = vpop.f32.mrb[0].mxu0
        %v1519 = vpop.f32.mrb[0].mxu0
        %v1520 = vadd.f32 0.0, %v1519
        %v1521 = vpop.f32.mrb[0].mxu0
        %1522 = vmatprep.mubr.bf16.mxu0 0
        %1523 = vmatmul.mubr.bf16.gmra.mrb[0].mxu0 %v1102
        %v1524 = vpop.f32.mrb[0].mxu0
        %v1525 = vadd.f32 0.0, %v1524
        %v1526 = vpop.f32.mrb[0].mxu0
        %v1527 = vpop.f32.mrb[0].mxu0
        %v1528 = vadd.f32 0.0, %v1527
        %v1529 = vpop.f32.mrb[0].mxu0
        %1530 = vmatprep.mubr.bf16.mxu0 0
        %1531 = vmatmul.mubr.bf16.gmra.mrb[0].mxu0 %v1105
        %v1532 = vpop.f32.mrb[0].mxu0
        %v1533 = vadd.f32 0.0, %v1532
        %v1534 = vpop.f32.mrb[0].mxu0
        %v1535 = vpop.f32.mrb[0].mxu0
        %v1536 = vadd.f32 0.0, %v1535
        %v1537 = vpop.f32.mrb[0].mxu0
        %1538 = vmatprep.mubr.bf16.mxu0 0
        %1539 = vmatmul.mubr.bf16.gmra.mrb[0].mxu0 %v1108
        %v1540 = vpop.f32.mrb[0].mxu0
        %v1541 = vadd.f32 0.0, %v1540
        %v1542 = vpop.f32.mrb[0].mxu0
        %v1543 = vpop.f32.mrb[0].mxu0
        %v1544 = vadd.f32 0.0, %v1543
        %v1545 = vpop.f32.mrb[0].mxu0
        %1546 = vmatprep.mubr.bf16.mxu0 0
        %1547 = vmatmul.mubr.bf16.gmra.mrb[0].mxu0 %v1111
        %v1548 = vpop.f32.mrb[0].mxu0
        %v1549 = vadd.f32 0.0, %v1548
        %v1550 = vpop.f32.mrb[0].mxu0
        %v1551 = vpop.f32.mrb[0].mxu0
        %v1552 = vadd.f32 0.0, %v1551
        %v1553 = vpop.f32.mrb[0].mxu0
        %1554 = vmatprep.mubr.bf16.mxu0 0
        %1555 = vmatmul.mubr.bf16.gmra.mrb[0].mxu0 %v1114
        %v1556 = vpop.f32.mrb[0].mxu0
        %v1557 = vadd.f32 0.0, %v1556
        %v1558 = vpop.f32.mrb[0].mxu0
        %v1559 = vpop.f32.mrb[0].mxu0
        %v1560 = vadd.f32 0.0, %v1559
        %v1561 = vpop.f32.mrb[0].mxu0
        %1562 = vmatprep.mubr.bf16.mxu0 0
        %1563 = vmatmul.mubr.bf16.gmra.mrb[0].mxu0 %v1117
        %v1564 = vpop.f32.mrb[0].mxu0
        %v1565 = vadd.f32 0.0, %v1564
        %v1566 = vpop.f32.mrb[0].mxu0
        %v1567 = vpop.f32.mrb[0].mxu0
        %v1568 = vadd.f32 0.0, %v1567
        %v1569 = vpop.f32.mrb[0].mxu0
        %1570 = vmatprep.mubr.bf16.mxu0 0
        %1571 = vmatmul.mubr.bf16.gmra.mrb[0].mxu0 %v1120
        %v1572 = vpop.f32.mrb[0].mxu0
        %v1573 = vadd.f32 0.0, %v1572
        %v1574 = vpop.f32.mrb[0].mxu0
        %v1575 = vpop.f32.mrb[0].mxu0
        %v1576 = vadd.f32 0.0, %v1575
        %v1577 = vpop.f32.mrb[0].mxu0
        %1578 = vmatprep.mubr.bf16.mxu0 0
        %1579 = vmatmul.mubr.bf16.gmra.mrb[0].mxu0 %v1123
        %v1580 = vpop.f32.mrb[0].mxu0
        %v1581 = vadd.f32 0.0, %v1580
        %v1582 = vpop.f32.mrb[0].mxu0
        %v1583 = vpop.f32.mrb[0].mxu0
        %v1584 = vadd.f32 0.0, %v1583
        %v1585 = vpop.f32.mrb[0].mxu0
        %1586 = vmatprep.mubr.bf16.mxu0 0
        %1587 = vmatmul.mubr.bf16.gmra.mrb[0].mxu0 %v1126
        %v1588 = vpop.f32.mrb[0].mxu0
        %v1589 = vadd.f32 0.0, %v1588
        %v1590 = vpop.f32.mrb[0].mxu0
        %v1591 = vpop.f32.mrb[0].mxu0
        %v1592 = vadd.f32 0.0, %v1591
        %v1593 = vpop.f32.mrb[0].mxu0
        %1594 = vmatprep.mubr.bf16.mxu0 0
        %1595 = vmatmul.mubr.bf16.gmra.mrb[0].mxu0 %v1129
        %v1596 = vpop.f32.mrb[0].mxu0
        %v1597 = vadd.f32 0.0, %v1596
        %v1598 = vpop.f32.mrb[0].mxu0
        %v1599 = vpop.f32.mrb[0].mxu0
        %v1600 = vadd.f32 0.0, %v1599
        %v1601 = vpop.f32.mrb[0].mxu0
        %1602 = vmatprep.mubr.bf16.mxu0 0
        %1603 = vmatmul.mubr.bf16.gmra.mrb[0].mxu0 %v1132
        %v1604 = vpop.f32.mrb[0].mxu0
        %v1605 = vadd.f32 0.0, %v1604
        %v1606 = vpop.f32.mrb[0].mxu0
        %v1607 = vpop.f32.mrb[0].mxu0
        %v1608 = vadd.f32 0.0, %v1607
        %v1609 = vpop.f32.mrb[0].mxu0
        %1610 = vmatprep.mubr.bf16.mxu0 0
        %1611 = vmatmul.mubr.bf16.gmra.mrb[0].mxu0 %v1135
        %v1612 = vpop.f32.mrb[0].mxu0
        %v1613 = vadd.f32 0.0, %v1612
        %v1614 = vpop.f32.mrb[0].mxu0
        %v1615 = vpop.f32.mrb[0].mxu0
        %v1616 = vadd.f32 0.0, %v1615
        %v1617 = vpop.f32.mrb[0].mxu0
        %1618 = vmatprep.mubr.bf16.mxu0 0
        %1619 = vmatmul.mubr.bf16.gmra.mrb[0].mxu0 %v1138
        %v1620 = vpop.f32.mrb[0].mxu0
        %v1621 = vadd.f32 0.0, %v1620
        %v1622 = vpop.f32.mrb[0].mxu0
        %v1623 = vpop.f32.mrb[0].mxu0
        %v1624 = vadd.f32 0.0, %v1623
        %v1625 = vpop.f32.mrb[0].mxu0
        %1626 = vmatprep.mubr.bf16.mxu0 0
        %1627 = vmatmul.mubr.bf16.gmra.mrb[0].mxu0 %v1141
        %v1628 = vpop.f32.mrb[0].mxu0
        %v1629 = vadd.f32 0.0, %v1628
        %v1630 = vpop.f32.mrb[0].mxu0
        %v1631 = vpop.f32.mrb[0].mxu0
        %v1632 = vadd.f32 0.0, %v1631
        %v1633 = vpop.f32.mrb[0].mxu0
        %1634 = vmatprep.mubr.bf16.mxu0 0
        %1635 = vmatmul.mubr.bf16.gmra.mrb[0].mxu0 %v1144
        %v1636 = vpop.f32.mrb[0].mxu0
        %v1637 = vadd.f32 0.0, %v1636
        %v1638 = vpop.f32.mrb[0].mxu0
        %v1639 = vpop.f32.mrb[0].mxu0
        %v1640 = vadd.f32 0.0, %v1639
        %v1641 = vpop.f32.mrb[0].mxu0
        %1642 = vmatprep.mubr.bf16.mxu0 0
        %1643 = vmatmul.mubr.bf16.gmra.mrb[0].mxu0 %v1147
        %v1644 = vpop.f32.mrb[0].mxu0
        %v1645 = vadd.f32 0.0, %v1644
        %v1646 = vpop.f32.mrb[0].mxu0
        %v1647 = vpop.f32.mrb[0].mxu0
        %v1648 = vadd.f32 0.0, %v1647
        %v1649 = vpop.f32.mrb[0].mxu0
        %1650 = vmatprep.mubr.bf16.mxu0 0
        %1651 = vmatmul.mubr.bf16.gmra.mrb[0].mxu0 %v1150
        %v1652 = vpop.f32.mrb[0].mxu0
        %v1653 = vadd.f32 0.0, %v1652
        %v1654 = vpop.f32.mrb[0].mxu0
        %v1655 = vpop.f32.mrb[0].mxu0
        %v1656 = vadd.f32 0.0, %v1655
        %v1657 = vpop.f32.mrb[0].mxu0
        %1658 = vmatprep.mubr.bf16.mxu0 0
        %1659 = vmatmul.mubr.bf16.gmra.mrb[0].mxu0 %v1153
        %v1660 = vpop.f32.mrb[0].mxu0
        %v1661 = vadd.f32 0.0, %v1660
        %v1662 = vpop.f32.mrb[0].mxu0
        %v1663 = vpop.f32.mrb[0].mxu0
        %v1664 = vadd.f32 0.0, %v1663
        %v1665 = vpop.f32.mrb[0].mxu0
        %1666 = vmatprep.mubr.bf16.mxu0 0
        %1667 = vmatmul.mubr.bf16.gmra.mrb[0].mxu0 %v1156
        %v1668 = vpop.f32.mrb[0].mxu0
        %v1669 = vadd.f32 0.0, %v1668
        %v1670 = vpop.f32.mrb[0].mxu0
        %v1671 = vpop.f32.mrb[0].mxu0
        %v1672 = vadd.f32 0.0, %v1671
        %v1673 = vpop.f32.mrb[0].mxu0
        %1674 = vmatprep.mubr.bf16.mxu0 0
        %1675 = vmatmul.mubr.bf16.gmra.mrb[0].mxu0 %v1159
        %v1676 = vpop.f32.mrb[0].mxu0
        %v1677 = vadd.f32 0.0, %v1676
        %v1678 = vpop.f32.mrb[0].mxu0
        %v1679 = vpop.f32.mrb[0].mxu0
        %v1680 = vadd.f32 0.0, %v1679
        %v1681 = vpop.f32.mrb[0].mxu0
        %1682 = vmatprep.mubr.bf16.mxu0 0
        %1683 = vmatmul.mubr.bf16.gmra.mrb[0].mxu0 %v1162
        %v1684 = vpop.f32.mrb[0].mxu0
        %v1685 = vadd.f32 0.0, %v1684
        %v1686 = vpop.f32.mrb[0].mxu0
        %v1687 = vpop.f32.mrb[0].mxu0
        %v1688 = vadd.f32 0.0, %v1687
        %v1689 = vpop.f32.mrb[0].mxu0
        %1690 = vmatprep.mubr.bf16.mxu0 0
        %1691 = vmatmul.mubr.bf16.gmra.mrb[0].mxu0 %v1165
        %v1692 = vpop.f32.mrb[0].mxu0
        %v1693 = vadd.f32 0.0, %v1692
        %v1694 = vpop.f32.mrb[0].mxu0
        %v1695 = vpop.f32.mrb[0].mxu0
        %v1696 = vadd.f32 0.0, %v1695
        %v1697 = vpop.f32.mrb[0].mxu0
        %1698 = vmatprep.mubr.bf16.mxu0 0
        %1699 = vmatmul.mubr.bf16.gmra.mrb[0].mxu0 %v1168
        %v1700 = vpop.f32.mrb[0].mxu0
        %v1701 = vadd.f32 0.0, %v1700
        %v1702 = vpop.f32.mrb[0].mxu0
        %v1703 = vpop.f32.mrb[0].mxu0
        %v1704 = vadd.f32 0.0, %v1703
        %v1705 = vpop.f32.mrb[0].mxu0
        %1706 = vmatprep.mubr.bf16.mxu0 0
        %1707 = vmatmul.mubr.bf16.gmra.mrb[0].mxu0 %v1171
        %v1708 = vpop.f32.mrb[0].mxu0
        %v1709 = vadd.f32 0.0, %v1708
        %v1710 = vpop.f32.mrb[0].mxu0
        %v1711 = vpop.f32.mrb[0].mxu0
        %v1712 = vadd.f32 0.0, %v1711
        %v1713 = vpop.f32.mrb[0].mxu0
        %1714 = vmatprep.mubr.bf16.mxu0 0
        %1715 = vmatmul.mubr.bf16.gmra.mrb[0].mxu0 %v1174
        %v1716 = vpop.f32.mrb[0].mxu0
        %v1717 = vadd.f32 0.0, %v1716
        %v1718 = vpop.f32.mrb[0].mxu0
        %v1719 = vpop.f32.mrb[0].mxu0
        %v1720 = vadd.f32 0.0, %v1719
        %v1721 = vpop.f32.mrb[0].mxu0
        %1722 = vmatprep.mubr.bf16.mxu0 0
        %1723 = vmatmul.mubr.bf16.gmra.mrb[0].mxu0 %v1177
        %v1724 = vpop.f32.mrb[0].mxu0
        %v1725 = vadd.f32 0.0, %v1724
        %v1726 = vpop.f32.mrb[0].mxu0
        %v1727 = vpop.f32.mrb[0].mxu0
        %v1728 = vadd.f32 0.0, %v1727
        %v1729 = vpop.f32.mrb[0].mxu0
        %1730 = vdwg.mxu0
        %v1731 = vadd.f32 %v395, %v1221
        %v1732 = vadd.f32 %v396, %v1224
        %v1733 = vadd.f32 %v397, %v1229
        %v1734 = vadd.f32 %v398, %v1232
        %v1735 = vadd.f32 %v399, %v1237
        %v1736 = vadd.f32 %v400, %v1240
        %v1737 = vadd.f32 %v401, %v1245
        %v1738 = vadd.f32 %v402, %v1248
        %v1739 = vadd.f32 %v403, %v1253
        %v1740 = vadd.f32 %v404, %v1256
        %v1741 = vadd.f32 %v405, %v1261
        %v1742 = vadd.f32 %v406, %v1264
        %v1743 = vadd.f32 %v407, %v1269
        %v1744 = vadd.f32 %v408, %v1272
        %v1745 = vadd.f32 %v409, %v1277
        %v1746 = vadd.f32 %v410, %v1280
        %v1747 = vadd.f32 %v411, %v1285
        %v1748 = vadd.f32 %v412, %v1288
        %v1749 = vadd.f32 %v413, %v1293
        %v1750 = vadd.f32 %v414, %v1296
        %v1751 = vadd.f32 %v415, %v1301
        %v1752 = vadd.f32 %v416, %v1304
        %v1753 = vadd.f32 %v417, %v1309
        %v1754 = vadd.f32 %v418, %v1312
        %v1755 = vadd.f32 %v419, %v1317
        %v1756 = vadd.f32 %v420, %v1320
        %v1757 = vadd.f32 %v421, %v1325
        %v1758 = vadd.f32 %v422, %v1328
        %v1759 = vadd.f32 %v423, %v1333
        %v1760 = vadd.f32 %v424, %v1336
        %v1761 = vadd.f32 %v425, %v1341
        %v1762 = vadd.f32 %v426, %v1344
        %v1763 = vadd.f32 %v427, %v1349
        %v1764 = vadd.f32 %v428, %v1352
        %v1765 = vadd.f32 %v429, %v1357
        %v1766 = vadd.f32 %v430, %v1360
        %v1767 = vadd.f32 %v431, %v1365
        %v1768 = vadd.f32 %v432, %v1368
        %v1769 = vadd.f32 %v433, %v1373
        %v1770 = vadd.f32 %v434, %v1376
        %v1771 = vadd.f32 %v435, %v1381
        %v1772 = vadd.f32 %v436, %v1384
        %v1773 = vadd.f32 %v437, %v1389
        %v1774 = vadd.f32 %v438, %v1392
        %v1775 = vadd.f32 %v439, %v1397
        %v1776 = vadd.f32 %v440, %v1400
        %v1777 = vadd.f32 %v441, %v1405
        %v1778 = vadd.f32 %v442, %v1408
        %v1779 = vadd.f32 %v443, %v1413
        %v1780 = vadd.f32 %v444, %v1416
        %v1781 = vadd.f32 %v445, %v1421
        %v1782 = vadd.f32 %v446, %v1424
        %v1783 = vadd.f32 %v447, %v1429
        %v1784 = vadd.f32 %v448, %v1432
        %v1785 = vadd.f32 %v449, %v1437
        %v1786 = vadd.f32 %v450, %v1440
        %v1787 = vadd.f32 %v451, %v1445
        %v1788 = vadd.f32 %v452, %v1448
        %v1789 = vadd.f32 %v453, %v1453
        %v1790 = vadd.f32 %v454, %v1456
        %v1791 = vadd.f32 %v455, %v1461
        %v1792 = vadd.f32 %v456, %v1464
        %v1793 = vadd.f32 %v457, %v1469
        %v1794 = vadd.f32 %v458, %v1472
        %v1795 = vadd.f32 %v459, %v1477
        %v1796 = vadd.f32 %v460, %v1480
        %v1797 = vadd.f32 %v461, %v1485
        %v1798 = vadd.f32 %v462, %v1488
        %v1799 = vadd.f32 %v463, %v1493
        %v1800 = vadd.f32 %v464, %v1496
        %v1801 = vadd.f32 %v465, %v1501
        %v1802 = vadd.f32 %v466, %v1504
        %v1803 = vadd.f32 %v467, %v1509
        %v1804 = vadd.f32 %v468, %v1512
        %v1805 = vadd.f32 %v469, %v1517
        %v1806 = vadd.f32 %v470, %v1520
        %v1807 = vadd.f32 %v471, %v1525
        %v1808 = vadd.f32 %v472, %v1528
        %v1809 = vadd.f32 %v473, %v1533
        %v1810 = vadd.f32 %v474, %v1536
        %v1811 = vadd.f32 %v475, %v1541
        %v1812 = vadd.f32 %v476, %v1544
        %v1813 = vadd.f32 %v477, %v1549
        %v1814 = vadd.f32 %v478, %v1552
        %v1815 = vadd.f32 %v479, %v1557
        %v1816 = vadd.f32 %v480, %v1560
        %v1817 = vadd.f32 %v481, %v1565
        %v1818 = vadd.f32 %v482, %v1568
        %v1819 = vadd.f32 %v483, %v1573
        %v1820 = vadd.f32 %v484, %v1576
        %v1821 = vadd.f32 %v485, %v1581
        %v1822 = vadd.f32 %v486, %v1584
        %v1823 = vadd.f32 %v487, %v1589
        %v1824 = vadd.f32 %v488, %v1592
        %v1825 = vadd.f32 %v489, %v1597
        %v1826 = vadd.f32 %v490, %v1600
        %v1827 = vadd.f32 %v491, %v1605
        %v1828 = vadd.f32 %v492, %v1608
        %v1829 = vadd.f32 %v493, %v1613
        %v1830 = vadd.f32 %v494, %v1616
        %v1831 = vadd.f32 %v495, %v1621
        %v1832 = vadd.f32 %v496, %v1624
        %v1833 = vadd.f32 %v497, %v1629
        %v1834 = vadd.f32 %v498, %v1632
        %v1835 = vadd.f32 %v499, %v1637
        %v1836 = vadd.f32 %v500, %v1640
        %v1837 = vadd.f32 %v501, %v1645
        %v1838 = vadd.f32 %v502, %v1648
        %v1839 = vadd.f32 %v503, %v1653
        %v1840 = vadd.f32 %v504, %v1656
        %v1841 = vadd.f32 %v505, %v1661
        %v1842 = vadd.f32 %v506, %v1664
        %v1843 = vadd.f32 %v507, %v1669
        %v1844 = vadd.f32 %v508, %v1672
        %v1845 = vadd.f32 %v509, %v1677
        %v1846 = vadd.f32 %v510, %v1680
        %v1847 = vadd.f32 %v511, %v1685
        %v1848 = vadd.f32 %v512, %v1688
        %v1849 = vadd.f32 %v513, %v1693
        %v1850 = vadd.f32 %v514, %v1696
        %v1851 = vadd.f32 %v515, %v1701
        %v1852 = vadd.f32 %v516, %v1704
        %v1853 = vadd.f32 %v517, %v1709
        %v1854 = vadd.f32 %v518, %v1712
        %v1855 = vadd.f32 %v519, %v1717
        %v1856 = vadd.f32 %v520, %v1720
        %v1857 = vadd.f32 %v521, %v1725
        %v1858 = vadd.f32 %v522, %v1728
        %vm1859 = vcmask 261120
        %1860 = vst.msk [vmem:[#allocation2] sm:$0xff] %vm1859, %v1731
        %1861 = vst.msk [vmem:[#allocation2 + $0x8] sm:$0xff] %vm1859, %v1732
        %1862 = vst.msk [vmem:[#allocation2 + $0x10] sm:$0xff] %vm1859, %v1733
        %1863 = vst.msk [vmem:[#allocation2 + $0x18] sm:$0xff] %vm1859, %v1734
        %1864 = vst.msk [vmem:[#allocation2 + $0x20] sm:$0xff] %vm1859, %v1735
        %1865 = vst.msk [vmem:[#allocation2 + $0x28] sm:$0xff] %vm1859, %v1736
        %1866 = vst.msk [vmem:[#allocation2 + $0x30] sm:$0xff] %vm1859, %v1737
        %1867 = vst.msk [vmem:[#allocation2 + $0x38] sm:$0xff] %vm1859, %v1738
        %1868 = vst.msk [vmem:[#allocation2 + $0x40] sm:$0xff] %vm1859, %v1739
        %1869 = vst.msk [vmem:[#allocation2 + $0x48] sm:$0xff] %vm1859, %v1740
        %1870 = vst.msk [vmem:[#allocation2 + $0x50] sm:$0xff] %vm1859, %v1741
        %1871 = vst.msk [vmem:[#allocation2 + $0x58] sm:$0xff] %vm1859, %v1742
        %1872 = vst.msk [vmem:[#allocation2 + $0x60] sm:$0xff] %vm1859, %v1743
        %1873 = vst.msk [vmem:[#allocation2 + $0x68] sm:$0xff] %vm1859, %v1744
        %1874 = vst.msk [vmem:[#allocation2 + $0x70] sm:$0xff] %vm1859, %v1745
        %1875 = vst.msk [vmem:[#allocation2 + $0x78] sm:$0xff] %vm1859, %v1746
        %1876 = vst.msk [vmem:[#allocation2 + $0x80] sm:$0xff] %vm1859, %v1747
        %1877 = vst.msk [vmem:[#allocation2 + $0x88] sm:$0xff] %vm1859, %v1748
        %1878 = vst.msk [vmem:[#allocation2 + $0x90] sm:$0xff] %vm1859, %v1749
        %1879 = vst.msk [vmem:[#allocation2 + $0x98] sm:$0xff] %vm1859, %v1750
        %1880 = vst.msk [vmem:[#allocation2 + $0xa0] sm:$0xff] %vm1859, %v1751
        %1881 = vst.msk [vmem:[#allocation2 + $0xa8] sm:$0xff] %vm1859, %v1752
        %1882 = vst.msk [vmem:[#allocation2 + $0xb0] sm:$0xff] %vm1859, %v1753
        %1883 = vst.msk [vmem:[#allocation2 + $0xb8] sm:$0xff] %vm1859, %v1754
        %1884 = vst.msk [vmem:[#allocation2 + $0xc0] sm:$0xff] %vm1859, %v1755
        %1885 = vst.msk [vmem:[#allocation2 + $0xc8] sm:$0xff] %vm1859, %v1756
        %1886 = vst.msk [vmem:[#allocation2 + $0xd0] sm:$0xff] %vm1859, %v1757
        %1887 = vst.msk [vmem:[#allocation2 + $0xd8] sm:$0xff] %vm1859, %v1758
        %1888 = vst.msk [vmem:[#allocation2 + $0xe0] sm:$0xff] %vm1859, %v1759
        %1889 = vst.msk [vmem:[#allocation2 + $0xe8] sm:$0xff] %vm1859, %v1760
        %1890 = vst.msk [vmem:[#allocation2 + $0xf0] sm:$0xff] %vm1859, %v1761
        %1891 = vst.msk [vmem:[#allocation2 + $0xf8] sm:$0xff] %vm1859, %v1762
        %1892 = vst.msk [vmem:[#allocation2 + $0x100] sm:$0xff] %vm1859, %v1763
        %1893 = vst.msk [vmem:[#allocation2 + $0x108] sm:$0xff] %vm1859, %v1764
        %1894 = vst.msk [vmem:[#allocation2 + $0x110] sm:$0xff] %vm1859, %v1765
        %1895 = vst.msk [vmem:[#allocation2 + $0x118] sm:$0xff] %vm1859, %v1766
        %1896 = vst.msk [vmem:[#allocation2 + $0x120] sm:$0xff] %vm1859, %v1767
        %1897 = vst.msk [vmem:[#allocation2 + $0x128] sm:$0xff] %vm1859, %v1768
        %1898 = vst.msk [vmem:[#allocation2 + $0x130] sm:$0xff] %vm1859, %v1769
        %1899 = vst.msk [vmem:[#allocation2 + $0x138] sm:$0xff] %vm1859, %v1770
        %1900 = vst.msk [vmem:[#allocation2 + $0x140] sm:$0xff] %vm1859, %v1771
        %1901 = vst.msk [vmem:[#allocation2 + $0x148] sm:$0xff] %vm1859, %v1772
        %1902 = vst.msk [vmem:[#allocation2 + $0x150] sm:$0xff] %vm1859, %v1773
        %1903 = vst.msk [vmem:[#allocation2 + $0x158] sm:$0xff] %vm1859, %v1774
        %1904 = vst.msk [vmem:[#allocation2 + $0x160] sm:$0xff] %vm1859, %v1775
        %1905 = vst.msk [vmem:[#allocation2 + $0x168] sm:$0xff] %vm1859, %v1776
        %1906 = vst.msk [vmem:[#allocation2 + $0x170] sm:$0xff] %vm1859, %v1777
        %1907 = vst.msk [vmem:[#allocation2 + $0x178] sm:$0xff] %vm1859, %v1778
        %1908 = vst.msk [vmem:[#allocation2 + $0x180] sm:$0xff] %vm1859, %v1779
        %1909 = vst.msk [vmem:[#allocation2 + $0x188] sm:$0xff] %vm1859, %v1780
        %1910 = vst.msk [vmem:[#allocation2 + $0x190] sm:$0xff] %vm1859, %v1781
        %1911 = vst.msk [vmem:[#allocation2 + $0x198] sm:$0xff] %vm1859, %v1782
        %1912 = vst.msk [vmem:[#allocation2 + $0x1a0] sm:$0xff] %vm1859, %v1783
        %1913 = vst.msk [vmem:[#allocation2 + $0x1a8] sm:$0xff] %vm1859, %v1784
        %1914 = vst.msk [vmem:[#allocation2 + $0x1b0] sm:$0xff] %vm1859, %v1785
        %1915 = vst.msk [vmem:[#allocation2 + $0x1b8] sm:$0xff] %vm1859, %v1786
        %1916 = vst.msk [vmem:[#allocation2 + $0x1c0] sm:$0xff] %vm1859, %v1787
        %1917 = vst.msk [vmem:[#allocation2 + $0x1c8] sm:$0xff] %vm1859, %v1788
        %1918 = vst.msk [vmem:[#allocation2 + $0x1d0] sm:$0xff] %vm1859, %v1789
        %1919 = vst.msk [vmem:[#allocation2 + $0x1d8] sm:$0xff] %vm1859, %v1790
        %1920 = vst.msk [vmem:[#allocation2 + $0x1e0] sm:$0xff] %vm1859, %v1791
        %1921 = vst.msk [vmem:[#allocation2 + $0x1e8] sm:$0xff] %vm1859, %v1792
        %1922 = vst.msk [vmem:[#allocation2 + $0x1f0] sm:$0xff] %vm1859, %v1793
        %1923 = vst.msk [vmem:[#allocation2 + $0x1f8] sm:$0xff] %vm1859, %v1794
        %1924 = vst.msk [vmem:[#allocation2 + $0x200] sm:$0xff] %vm1859, %v1795
        %1925 = vst.msk [vmem:[#allocation2 + $0x208] sm:$0xff] %vm1859, %v1796
        %1926 = vst.msk [vmem:[#allocation2 + $0x210] sm:$0xff] %vm1859, %v1797
        %1927 = vst.msk [vmem:[#allocation2 + $0x218] sm:$0xff] %vm1859, %v1798
        %1928 = vst.msk [vmem:[#allocation2 + $0x220] sm:$0xff] %vm1859, %v1799
        %1929 = vst.msk [vmem:[#allocation2 + $0x228] sm:$0xff] %vm1859, %v1800
        %1930 = vst.msk [vmem:[#allocation2 + $0x230] sm:$0xff] %vm1859, %v1801
        %1931 = vst.msk [vmem:[#allocation2 + $0x238] sm:$0xff] %vm1859, %v1802
        %1932 = vst.msk [vmem:[#allocation2 + $0x240] sm:$0xff] %vm1859, %v1803
        %1933 = vst.msk [vmem:[#allocation2 + $0x248] sm:$0xff] %vm1859, %v1804
        %1934 = vst.msk [vmem:[#allocation2 + $0x250] sm:$0xff] %vm1859, %v1805
        %1935 = vst.msk [vmem:[#allocation2 + $0x258] sm:$0xff] %vm1859, %v1806
        %1936 = vst.msk [vmem:[#allocation2 + $0x260] sm:$0xff] %vm1859, %v1807
        %1937 = vst.msk [vmem:[#allocation2 + $0x268] sm:$0xff] %vm1859, %v1808
        %1938 = vst.msk [vmem:[#allocation2 + $0x270] sm:$0xff] %vm1859, %v1809
        %1939 = vst.msk [vmem:[#allocation2 + $0x278] sm:$0xff] %vm1859, %v1810
        %1940 = vst.msk [vmem:[#allocation2 + $0x280] sm:$0xff] %vm1859, %v1811
        %1941 = vst.msk [vmem:[#allocation2 + $0x288] sm:$0xff] %vm1859, %v1812
        %1942 = vst.msk [vmem:[#allocation2 + $0x290] sm:$0xff] %vm1859, %v1813
        %1943 = vst.msk [vmem:[#allocation2 + $0x298] sm:$0xff] %vm1859, %v1814
        %1944 = vst.msk [vmem:[#allocation2 + $0x2a0] sm:$0xff] %vm1859, %v1815
        %1945 = vst.msk [vmem:[#allocation2 + $0x2a8] sm:$0xff] %vm1859, %v1816
        %1946 = vst.msk [vmem:[#allocation2 + $0x2b0] sm:$0xff] %vm1859, %v1817
        %1947 = vst.msk [vmem:[#allocation2 + $0x2b8] sm:$0xff] %vm1859, %v1818
        %1948 = vst.msk [vmem:[#allocation2 + $0x2c0] sm:$0xff] %vm1859, %v1819
        %1949 = vst.msk [vmem:[#allocation2 + $0x2c8] sm:$0xff] %vm1859, %v1820
        %1950 = vst.msk [vmem:[#allocation2 + $0x2d0] sm:$0xff] %vm1859, %v1821
        %1951 = vst.msk [vmem:[#allocation2 + $0x2d8] sm:$0xff] %vm1859, %v1822
        %1952 = vst.msk [vmem:[#allocation2 + $0x2e0] sm:$0xff] %vm1859, %v1823
        %1953 = vst.msk [vmem:[#allocation2 + $0x2e8] sm:$0xff] %vm1859, %v1824
        %1954 = vst.msk [vmem:[#allocation2 + $0x2f0] sm:$0xff] %vm1859, %v1825
        %1955 = vst.msk [vmem:[#allocation2 + $0x2f8] sm:$0xff] %vm1859, %v1826
        %1956 = vst.msk [vmem:[#allocation2 + $0x300] sm:$0xff] %vm1859, %v1827
        %1957 = vst.msk [vmem:[#allocation2 + $0x308] sm:$0xff] %vm1859, %v1828
        %1958 = vst.msk [vmem:[#allocation2 + $0x310] sm:$0xff] %vm1859, %v1829
        %1959 = vst.msk [vmem:[#allocation2 + $0x318] sm:$0xff] %vm1859, %v1830
        %1960 = vst.msk [vmem:[#allocation2 + $0x320] sm:$0xff] %vm1859, %v1831
        %1961 = vst.msk [vmem:[#allocation2 + $0x328] sm:$0xff] %vm1859, %v1832
        %1962 = vst.msk [vmem:[#allocation2 + $0x330] sm:$0xff] %vm1859, %v1833
        %1963 = vst.msk [vmem:[#allocation2 + $0x338] sm:$0xff] %vm1859, %v1834
        %1964 = vst.msk [vmem:[#allocation2 + $0x340] sm:$0xff] %vm1859, %v1835
        %1965 = vst.msk [vmem:[#allocation2 + $0x348] sm:$0xff] %vm1859, %v1836
        %1966 = vst.msk [vmem:[#allocation2 + $0x350] sm:$0xff] %vm1859, %v1837
        %1967 = vst.msk [vmem:[#allocation2 + $0x358] sm:$0xff] %vm1859, %v1838
        %1968 = vst.msk [vmem:[#allocation2 + $0x360] sm:$0xff] %vm1859, %v1839
        %1969 = vst.msk [vmem:[#allocation2 + $0x368] sm:$0xff] %vm1859, %v1840
        %1970 = vst.msk [vmem:[#allocation2 + $0x370] sm:$0xff] %vm1859, %v1841
        %1971 = vst.msk [vmem:[#allocation2 + $0x378] sm:$0xff] %vm1859, %v1842
        %1972 = vst.msk [vmem:[#allocation2 + $0x380] sm:$0xff] %vm1859, %v1843
        %1973 = vst.msk [vmem:[#allocation2 + $0x388] sm:$0xff] %vm1859, %v1844
        %1974 = vst.msk [vmem:[#allocation2 + $0x390] sm:$0xff] %vm1859, %v1845
        %1975 = vst.msk [vmem:[#allocation2 + $0x398] sm:$0xff] %vm1859, %v1846
        %1976 = vst.msk [vmem:[#allocation2 + $0x3a0] sm:$0xff] %vm1859, %v1847
        %1977 = vst.msk [vmem:[#allocation2 + $0x3a8] sm:$0xff] %vm1859, %v1848
        %1978 = vst.msk [vmem:[#allocation2 + $0x3b0] sm:$0xff] %vm1859, %v1849
        %1979 = vst.msk [vmem:[#allocation2 + $0x3b8] sm:$0xff] %vm1859, %v1850
        %1980 = vst.msk [vmem:[#allocation2 + $0x3c0] sm:$0xff] %vm1859, %v1851
        %1981 = vst.msk [vmem:[#allocation2 + $0x3c8] sm:$0xff] %vm1859, %v1852
        %1982 = vst.msk [vmem:[#allocation2 + $0x3d0] sm:$0xff] %vm1859, %v1853
        %1983 = vst.msk [vmem:[#allocation2 + $0x3d8] sm:$0xff] %vm1859, %v1854
        %1984 = vst.msk [vmem:[#allocation2 + $0x3e0] sm:$0xff] %vm1859, %v1855
        %1985 = vst.msk [vmem:[#allocation2 + $0x3e8] sm:$0xff] %vm1859, %v1856
        %1986 = vst.msk [vmem:[#allocation2 + $0x3f0] sm:$0xff] %vm1859, %v1857
        %1987 = vst.msk [vmem:[#allocation2 + $0x3f8] sm:$0xff] %vm1859, %v1858
        // Predicated region
        $region49: #{tpu_custom_call.1} parent=31 // pred_check
          %p1988 = pneg %p262
        $region50: #{tpu_custom_call.1} parent=31 // pred_check_branch
          %1990 = sbr.rel (%p1988) target = $region52
        $region51: #{tpu_custom_call.1} parent=31 // pred_region
          %v1991 = vld [vmem:[#allocation2] sm:$0xff]
          %v1992 = vld [vmem:[#allocation2 + $0x8] sm:$0xff]
          %v1993 = vld [vmem:[#allocation2 + $0x10] sm:$0xff]
          %v1994 = vld [vmem:[#allocation2 + $0x18] sm:$0xff]
          %v1995 = vld [vmem:[#allocation2 + $0x20] sm:$0xff]
          %v1996 = vld [vmem:[#allocation2 + $0x28] sm:$0xff]
          %v1997 = vld [vmem:[#allocation2 + $0x30] sm:$0xff]
          %v1998 = vld [vmem:[#allocation2 + $0x38] sm:$0xff]
          %v1999 = vld [vmem:[#allocation2 + $0x40] sm:$0xff]
          %v2000 = vld [vmem:[#allocation2 + $0x48] sm:$0xff]
          %v2001 = vld [vmem:[#allocation2 + $0x50] sm:$0xff]
          %v2002 = vld [vmem:[#allocation2 + $0x58] sm:$0xff]
          %v2003 = vld [vmem:[#allocation2 + $0x60] sm:$0xff]
          %v2004 = vld [vmem:[#allocation2 + $0x68] sm:$0xff]
          %v2005 = vld [vmem:[#allocation2 + $0x70] sm:$0xff]
          %v2006 = vld [vmem:[#allocation2 + $0x78] sm:$0xff]
          %v2007 = vld [vmem:[#allocation2 + $0x80] sm:$0xff]
          %v2008 = vld [vmem:[#allocation2 + $0x88] sm:$0xff]
          %v2009 = vld [vmem:[#allocation2 + $0x90] sm:$0xff]
          %v2010 = vld [vmem:[#allocation2 + $0x98] sm:$0xff]
          %v2011 = vld [vmem:[#allocation2 + $0xa0] sm:$0xff]
          %v2012 = vld [vmem:[#allocation2 + $0xa8] sm:$0xff]
          %v2013 = vld [vmem:[#allocation2 + $0xb0] sm:$0xff]
          %v2014 = vld [vmem:[#allocation2 + $0xb8] sm:$0xff]
          %v2015 = vld [vmem:[#allocation2 + $0xc0] sm:$0xff]
          %v2016 = vld [vmem:[#allocation2 + $0xc8] sm:$0xff]
          %v2017 = vld [vmem:[#allocation2 + $0xd0] sm:$0xff]
          %v2018 = vld [vmem:[#allocation2 + $0xd8] sm:$0xff]
          %v2019 = vld [vmem:[#allocation2 + $0xe0] sm:$0xff]
          %v2020 = vld [vmem:[#allocation2 + $0xe8] sm:$0xff]
          %v2021 = vld [vmem:[#allocation2 + $0xf0] sm:$0xff]
          %v2022 = vld [vmem:[#allocation2 + $0xf8] sm:$0xff]
          %v2023 = vld [vmem:[#allocation2 + $0x100] sm:$0xff]
          %v2024 = vld [vmem:[#allocation2 + $0x108] sm:$0xff]
          %v2025 = vld [vmem:[#allocation2 + $0x110] sm:$0xff]
          %v2026 = vld [vmem:[#allocation2 + $0x118] sm:$0xff]
          %v2027 = vld [vmem:[#allocation2 + $0x120] sm:$0xff]
          %v2028 = vld [vmem:[#allocation2 + $0x128] sm:$0xff]
          %v2029 = vld [vmem:[#allocation2 + $0x130] sm:$0xff]
          %v2030 = vld [vmem:[#allocation2 + $0x138] sm:$0xff]
          %v2031 = vld [vmem:[#allocation2 + $0x140] sm:$0xff]
          %v2032 = vld [vmem:[#allocation2 + $0x148] sm:$0xff]
          %v2033 = vld [vmem:[#allocation2 + $0x150] sm:$0xff]
          %v2034 = vld [vmem:[#allocation2 + $0x158] sm:$0xff]
          %v2035 = vld [vmem:[#allocation2 + $0x160] sm:$0xff]
          %v2036 = vld [vmem:[#allocation2 + $0x168] sm:$0xff]
          %v2037 = vld [vmem:[#allocation2 + $0x170] sm:$0xff]
          %v2038 = vld [vmem:[#allocation2 + $0x178] sm:$0xff]
          %v2039 = vld [vmem:[#allocation2 + $0x180] sm:$0xff]
          %v2040 = vld [vmem:[#allocation2 + $0x188] sm:$0xff]
          %v2041 = vld [vmem:[#allocation2 + $0x190] sm:$0xff]
          %v2042 = vld [vmem:[#allocation2 + $0x198] sm:$0xff]
          %v2043 = vld [vmem:[#allocation2 + $0x1a0] sm:$0xff]
          %v2044 = vld [vmem:[#allocation2 + $0x1a8] sm:$0xff]
          %v2045 = vld [vmem:[#allocation2 + $0x1b0] sm:$0xff]
          %v2046 = vld [vmem:[#allocation2 + $0x1b8] sm:$0xff]
          %v2047 = vld [vmem:[#allocation2 + $0x1c0] sm:$0xff]
          %v2048 = vld [vmem:[#allocation2 + $0x1c8] sm:$0xff]
          %v2049 = vld [vmem:[#allocation2 + $0x1d0] sm:$0xff]
          %v2050 = vld [vmem:[#allocation2 + $0x1d8] sm:$0xff]
          %v2051 = vld [vmem:[#allocation2 + $0x1e0] sm:$0xff]
          %v2052 = vld [vmem:[#allocation2 + $0x1e8] sm:$0xff]
          %v2053 = vld [vmem:[#allocation2 + $0x1f0] sm:$0xff]
          %v2054 = vld [vmem:[#allocation2 + $0x1f8] sm:$0xff]
          %v2055 = vld [vmem:[#allocation2 + $0x200] sm:$0xff]
          %v2056 = vld [vmem:[#allocation2 + $0x208] sm:$0xff]
          %v2057 = vld [vmem:[#allocation2 + $0x210] sm:$0xff]
          %v2058 = vld [vmem:[#allocation2 + $0x218] sm:$0xff]
          %v2059 = vld [vmem:[#allocation2 + $0x220] sm:$0xff]
          %v2060 = vld [vmem:[#allocation2 + $0x228] sm:$0xff]
          %v2061 = vld [vmem:[#allocation2 + $0x230] sm:$0xff]
          %v2062 = vld [vmem:[#allocation2 + $0x238] sm:$0xff]
          %v2063 = vld [vmem:[#allocation2 + $0x240] sm:$0xff]
          %v2064 = vld [vmem:[#allocation2 + $0x248] sm:$0xff]
          %v2065 = vld [vmem:[#allocation2 + $0x250] sm:$0xff]
          %v2066 = vld [vmem:[#allocation2 + $0x258] sm:$0xff]
          %v2067 = vld [vmem:[#allocation2 + $0x260] sm:$0xff]
          %v2068 = vld [vmem:[#allocation2 + $0x268] sm:$0xff]
          %v2069 = vld [vmem:[#allocation2 + $0x270] sm:$0xff]
          %v2070 = vld [vmem:[#allocation2 + $0x278] sm:$0xff]
          %v2071 = vld [vmem:[#allocation2 + $0x280] sm:$0xff]
          %v2072 = vld [vmem:[#allocation2 + $0x288] sm:$0xff]
          %v2073 = vld [vmem:[#allocation2 + $0x290] sm:$0xff]
          %v2074 = vld [vmem:[#allocation2 + $0x298] sm:$0xff]
          %v2075 = vld [vmem:[#allocation2 + $0x2a0] sm:$0xff]
          %v2076 = vld [vmem:[#allocation2 + $0x2a8] sm:$0xff]
          %v2077 = vld [vmem:[#allocation2 + $0x2b0] sm:$0xff]
          %v2078 = vld [vmem:[#allocation2 + $0x2b8] sm:$0xff]
          %v2079 = vld [vmem:[#allocation2 + $0x2c0] sm:$0xff]
          %v2080 = vld [vmem:[#allocation2 + $0x2c8] sm:$0xff]
          %v2081 = vld [vmem:[#allocation2 + $0x2d0] sm:$0xff]
          %v2082 = vld [vmem:[#allocation2 + $0x2d8] sm:$0xff]
          %v2083 = vld [vmem:[#allocation2 + $0x2e0] sm:$0xff]
          %v2084 = vld [vmem:[#allocation2 + $0x2e8] sm:$0xff]
          %v2085 = vld [vmem:[#allocation2 + $0x2f0] sm:$0xff]
          %v2086 = vld [vmem:[#allocation2 + $0x2f8] sm:$0xff]
          %v2087 = vld [vmem:[#allocation2 + $0x300] sm:$0xff]
          %v2088 = vld [vmem:[#allocation2 + $0x308] sm:$0xff]
          %v2089 = vld [vmem:[#allocation2 + $0x310] sm:$0xff]
          %v2090 = vld [vmem:[#allocation2 + $0x318] sm:$0xff]
          %v2091 = vld [vmem:[#allocation2 + $0x320] sm:$0xff]
          %v2092 = vld [vmem:[#allocation2 + $0x328] sm:$0xff]
          %v2093 = vld [vmem:[#allocation2 + $0x330] sm:$0xff]
          %v2094 = vld [vmem:[#allocation2 + $0x338] sm:$0xff]
          %v2095 = vld [vmem:[#allocation2 + $0x340] sm:$0xff]
          %v2096 = vld [vmem:[#allocation2 + $0x348] sm:$0xff]
          %v2097 = vld [vmem:[#allocation2 + $0x350] sm:$0xff]
          %v2098 = vld [vmem:[#allocation2 + $0x358] sm:$0xff]
          %v2099 = vld [vmem:[#allocation2 + $0x360] sm:$0xff]
          %v2100 = vld [vmem:[#allocation2 + $0x368] sm:$0xff]
          %v2101 = vld [vmem:[#allocation2 + $0x370] sm:$0xff]
          %v2102 = vld [vmem:[#allocation2 + $0x378] sm:$0xff]
          %v2103 = vld [vmem:[#allocation2 + $0x380] sm:$0xff]
          %v2104 = vld [vmem:[#allocation2 + $0x388] sm:$0xff]
          %v2105 = vld [vmem:[#allocation2 + $0x390] sm:$0xff]
          %v2106 = vld [vmem:[#allocation2 + $0x398] sm:$0xff]
          %v2107 = vld [vmem:[#allocation2 + $0x3a0] sm:$0xff]
          %v2108 = vld [vmem:[#allocation2 + $0x3a8] sm:$0xff]
          %v2109 = vld [vmem:[#allocation2 + $0x3b0] sm:$0xff]
          %v2110 = vld [vmem:[#allocation2 + $0x3b8] sm:$0xff]
          %v2111 = vld [vmem:[#allocation2 + $0x3c0] sm:$0xff]
          %v2112 = vld [vmem:[#allocation2 + $0x3c8] sm:$0xff]
          %v2113 = vld [vmem:[#allocation2 + $0x3d0] sm:$0xff]
          %v2114 = vld [vmem:[#allocation2 + $0x3d8] sm:$0xff]
          %v2115 = vld [vmem:[#allocation2 + $0x3e0] sm:$0xff]
          %v2116 = vld [vmem:[#allocation2 + $0x3e8] sm:$0xff]
          %v2117 = vld [vmem:[#allocation2 + $0x3f0] sm:$0xff]
          %v2118 = vld [vmem:[#allocation2 + $0x3f8] sm:$0xff]
          %v2119 = vld [vmem:[#allocation8] sm:$0x1]
          %v2121 = vlaneseq
          %v2122 = vshrl.u32 %v2121, 7
          %v2123 = vsub.s32 0, %v2122
          %v2124 = vrot.slane %v2119, %v2123
          %v2126 = vadd.f32 %v1991, %v2124
          %v2127 = vadd.f32 %v1992, %v2124
          %v2128 = vadd.f32 %v1993, %v2124
          %v2129 = vadd.f32 %v1994, %v2124
          %v2130 = vadd.f32 %v1995, %v2124
          %v2131 = vadd.f32 %v1996, %v2124
          %v2132 = vadd.f32 %v1997, %v2124
          %v2133 = vadd.f32 %v1998, %v2124
          %v2134 = vadd.f32 %v1999, %v2124
          %v2135 = vadd.f32 %v2000, %v2124
          %v2136 = vadd.f32 %v2001, %v2124
          %v2137 = vadd.f32 %v2002, %v2124
          %v2138 = vadd.f32 %v2003, %v2124
          %v2139 = vadd.f32 %v2004, %v2124
          %v2140 = vadd.f32 %v2005, %v2124
          %v2141 = vadd.f32 %v2006, %v2124
          %v2142 = vadd.f32 %v2007, %v2124
          %v2143 = vadd.f32 %v2008, %v2124
          %v2144 = vadd.f32 %v2009, %v2124
          %v2145 = vadd.f32 %v2010, %v2124
          %v2146 = vadd.f32 %v2011, %v2124
          %v2147 = vadd.f32 %v2012, %v2124
          %v2148 = vadd.f32 %v2013, %v2124
          %v2149 = vadd.f32 %v2014, %v2124
          %v2150 = vadd.f32 %v2015, %v2124
          %v2151 = vadd.f32 %v2016, %v2124
          %v2152 = vadd.f32 %v2017, %v2124
          %v2153 = vadd.f32 %v2018, %v2124
          %v2154 = vadd.f32 %v2019, %v2124
          %v2155 = vadd.f32 %v2020, %v2124
          %v2156 = vadd.f32 %v2021, %v2124
          %v2157 = vadd.f32 %v2022, %v2124
          %v2158 = vadd.f32 %v2023, %v2124
          %v2159 = vadd.f32 %v2024, %v2124
          %v2160 = vadd.f32 %v2025, %v2124
          %v2161 = vadd.f32 %v2026, %v2124
          %v2162 = vadd.f32 %v2027, %v2124
          %v2163 = vadd.f32 %v2028, %v2124
          %v2164 = vadd.f32 %v2029, %v2124
          %v2165 = vadd.f32 %v2030, %v2124
          %v2166 = vadd.f32 %v2031, %v2124
          %v2167 = vadd.f32 %v2032, %v2124
          %v2168 = vadd.f32 %v2033, %v2124
          %v2169 = vadd.f32 %v2034, %v2124
          %v2170 = vadd.f32 %v2035, %v2124
          %v2171 = vadd.f32 %v2036, %v2124
          %v2172 = vadd.f32 %v2037, %v2124
          %v2173 = vadd.f32 %v2038, %v2124
          %v2174 = vadd.f32 %v2039, %v2124
          %v2175 = vadd.f32 %v2040, %v2124
          %v2176 = vadd.f32 %v2041, %v2124
          %v2177 = vadd.f32 %v2042, %v2124
          %v2178 = vadd.f32 %v2043, %v2124
          %v2179 = vadd.f32 %v2044, %v2124
          %v2180 = vadd.f32 %v2045, %v2124
          %v2181 = vadd.f32 %v2046, %v2124
          %v2182 = vadd.f32 %v2047, %v2124
          %v2183 = vadd.f32 %v2048, %v2124
          %v2184 = vadd.f32 %v2049, %v2124
          %v2185 = vadd.f32 %v2050, %v2124
          %v2186 = vadd.f32 %v2051, %v2124
          %v2187 = vadd.f32 %v2052, %v2124
          %v2188 = vadd.f32 %v2053, %v2124
          %v2189 = vadd.f32 %v2054, %v2124
          %v2190 = vadd.f32 %v2055, %v2124
          %v2191 = vadd.f32 %v2056, %v2124
          %v2192 = vadd.f32 %v2057, %v2124
          %v2193 = vadd.f32 %v2058, %v2124
          %v2194 = vadd.f32 %v2059, %v2124
          %v2195 = vadd.f32 %v2060, %v2124
          %v2196 = vadd.f32 %v2061, %v2124
          %v2197 = vadd.f32 %v2062, %v2124
          %v2198 = vadd.f32 %v2063, %v2124
          %v2199 = vadd.f32 %v2064, %v2124
          %v2200 = vadd.f32 %v2065, %v2124
          %v2201 = vadd.f32 %v2066, %v2124
          %v2202 = vadd.f32 %v2067, %v2124
          %v2203 = vadd.f32 %v2068, %v2124
          %v2204 = vadd.f32 %v2069, %v2124
          %v2205 = vadd.f32 %v2070, %v2124
          %v2206 = vadd.f32 %v2071, %v2124
          %v2207 = vadd.f32 %v2072, %v2124
          %v2208 = vadd.f32 %v2073, %v2124
          %v2209 = vadd.f32 %v2074, %v2124
          %v2210 = vadd.f32 %v2075, %v2124
          %v2211 = vadd.f32 %v2076, %v2124
          %v2212 = vadd.f32 %v2077, %v2124
          %v2213 = vadd.f32 %v2078, %v2124
          %v2214 = vadd.f32 %v2079, %v2124
          %v2215 = vadd.f32 %v2080, %v2124
          %v2216 = vadd.f32 %v2081, %v2124
          %v2217 = vadd.f32 %v2082, %v2124
          %v2218 = vadd.f32 %v2083, %v2124
          %v2219 = vadd.f32 %v2084, %v2124
          %v2220 = vadd.f32 %v2085, %v2124
          %v2221 = vadd.f32 %v2086, %v2124
          %v2222 = vadd.f32 %v2087, %v2124
          %v2223 = vadd.f32 %v2088, %v2124
          %v2224 = vadd.f32 %v2089, %v2124
          %v2225 = vadd.f32 %v2090, %v2124
          %v2226 = vadd.f32 %v2091, %v2124
          %v2227 = vadd.f32 %v2092, %v2124
          %v2228 = vadd.f32 %v2093, %v2124
          %v2229 = vadd.f32 %v2094, %v2124
          %v2230 = vadd.f32 %v2095, %v2124
          %v2231 = vadd.f32 %v2096, %v2124
          %v2232 = vadd.f32 %v2097, %v2124
          %v2233 = vadd.f32 %v2098, %v2124
          %v2234 = vadd.f32 %v2099, %v2124
          %v2235 = vadd.f32 %v2100, %v2124
          %v2236 = vadd.f32 %v2101, %v2124
          %v2237 = vadd.f32 %v2102, %v2124
          %v2238 = vadd.f32 %v2103, %v2124
          %v2239 = vadd.f32 %v2104, %v2124
          %v2240 = vadd.f32 %v2105, %v2124
          %v2241 = vadd.f32 %v2106, %v2124
          %v2242 = vadd.f32 %v2107, %v2124
          %v2243 = vadd.f32 %v2108, %v2124
          %v2244 = vadd.f32 %v2109, %v2124
          %v2245 = vadd.f32 %v2110, %v2124
          %v2246 = vadd.f32 %v2111, %v2124
          %v2247 = vadd.f32 %v2112, %v2124
          %v2248 = vadd.f32 %v2113, %v2124
          %v2249 = vadd.f32 %v2114, %v2124
          %v2250 = vadd.f32 %v2115, %v2124
          %v2251 = vadd.f32 %v2116, %v2124
          %v2252 = vadd.f32 %v2117, %v2124
          %v2253 = vadd.f32 %v2118, %v2124
          %vm2254 = vcmp.gt.f32.partialorder %v2126, 0.0
          %vm2255 = vcmp.gt.f32.partialorder %v2127, 0.0
          %vm2256 = vcmp.gt.f32.partialorder %v2128, 0.0
          %vm2257 = vcmp.gt.f32.partialorder %v2129, 0.0
          %vm2258 = vcmp.gt.f32.partialorder %v2130, 0.0
          %vm2259 = vcmp.gt.f32.partialorder %v2131, 0.0
          %vm2260 = vcmp.gt.f32.partialorder %v2132, 0.0
          %vm2261 = vcmp.gt.f32.partialorder %v2133, 0.0
          %vm2262 = vcmp.gt.f32.partialorder %v2134, 0.0
          %vm2263 = vcmp.gt.f32.partialorder %v2135, 0.0
          %vm2264 = vcmp.gt.f32.partialorder %v2136, 0.0
          %vm2265 = vcmp.gt.f32.partialorder %v2137, 0.0
          %vm2266 = vcmp.gt.f32.partialorder %v2138, 0.0
          %vm2267 = vcmp.gt.f32.partialorder %v2139, 0.0
          %vm2268 = vcmp.gt.f32.partialorder %v2140, 0.0
          %vm2269 = vcmp.gt.f32.partialorder %v2141, 0.0
          %vm2270 = vcmp.gt.f32.partialorder %v2142, 0.0
          %vm2271 = vcmp.gt.f32.partialorder %v2143, 0.0
          %vm2272 = vcmp.gt.f32.partialorder %v2144, 0.0
          %vm2273 = vcmp.gt.f32.partialorder %v2145, 0.0
          %vm2274 = vcmp.gt.f32.partialorder %v2146, 0.0
          %vm2275 = vcmp.gt.f32.partialorder %v2147, 0.0
          %vm2276 = vcmp.gt.f32.partialorder %v2148, 0.0
          %vm2277 = vcmp.gt.f32.partialorder %v2149, 0.0
          %vm2278 = vcmp.gt.f32.partialorder %v2150, 0.0
          %vm2279 = vcmp.gt.f32.partialorder %v2151, 0.0
          %vm2280 = vcmp.gt.f32.partialorder %v2152, 0.0
          %vm2281 = vcmp.gt.f32.partialorder %v2153, 0.0
          %vm2282 = vcmp.gt.f32.partialorder %v2154, 0.0
          %vm2283 = vcmp.gt.f32.partialorder %v2155, 0.0
          %vm2284 = vcmp.gt.f32.partialorder %v2156, 0.0
          %vm2285 = vcmp.gt.f32.partialorder %v2157, 0.0
          %vm2286 = vcmp.gt.f32.partialorder %v2158, 0.0
          %vm2287 = vcmp.gt.f32.partialorder %v2159, 0.0
          %vm2288 = vcmp.gt.f32.partialorder %v2160, 0.0
          %vm2289 = vcmp.gt.f32.partialorder %v2161, 0.0
          %vm2290 = vcmp.gt.f32.partialorder %v2162, 0.0
          %vm2291 = vcmp.gt.f32.partialorder %v2163, 0.0
          %vm2292 = vcmp.gt.f32.partialorder %v2164, 0.0
          %vm2293 = vcmp.gt.f32.partialorder %v2165, 0.0
          %vm2294 = vcmp.gt.f32.partialorder %v2166, 0.0
          %vm2295 = vcmp.gt.f32.partialorder %v2167, 0.0
          %vm2296 = vcmp.gt.f32.partialorder %v2168, 0.0
          %vm2297 = vcmp.gt.f32.partialorder %v2169, 0.0
          %vm2298 = vcmp.gt.f32.partialorder %v2170, 0.0
          %vm2299 = vcmp.gt.f32.partialorder %v2171, 0.0
          %vm2300 = vcmp.gt.f32.partialorder %v2172, 0.0
          %vm2301 = vcmp.gt.f32.partialorder %v2173, 0.0
          %vm2302 = vcmp.gt.f32.partialorder %v2174, 0.0
          %vm2303 = vcmp.gt.f32.partialorder %v2175, 0.0
          %vm2304 = vcmp.gt.f32.partialorder %v2176, 0.0
          %vm2305 = vcmp.gt.f32.partialorder %v2177, 0.0
          %vm2306 = vcmp.gt.f32.partialorder %v2178, 0.0
          %vm2307 = vcmp.gt.f32.partialorder %v2179, 0.0
          %vm2308 = vcmp.gt.f32.partialorder %v2180, 0.0
          %vm2309 = vcmp.gt.f32.partialorder %v2181, 0.0
          %vm2310 = vcmp.gt.f32.partialorder %v2182, 0.0
          %vm2311 = vcmp.gt.f32.partialorder %v2183, 0.0
          %vm2312 = vcmp.gt.f32.partialorder %v2184, 0.0
          %vm2313 = vcmp.gt.f32.partialorder %v2185, 0.0
          %vm2314 = vcmp.gt.f32.partialorder %v2186, 0.0
          %vm2315 = vcmp.gt.f32.partialorder %v2187, 0.0
          %vm2316 = vcmp.gt.f32.partialorder %v2188, 0.0
          %vm2317 = vcmp.gt.f32.partialorder %v2189, 0.0
          %vm2318 = vcmp.gt.f32.partialorder %v2190, 0.0
          %vm2319 = vcmp.gt.f32.partialorder %v2191, 0.0
          %vm2320 = vcmp.gt.f32.partialorder %v2192, 0.0
          %vm2321 = vcmp.gt.f32.partialorder %v2193, 0.0
          %vm2322 = vcmp.gt.f32.partialorder %v2194, 0.0
          %vm2323 = vcmp.gt.f32.partialorder %v2195, 0.0
          %vm2324 = vcmp.gt.f32.partialorder %v2196, 0.0
          %vm2325 = vcmp.gt.f32.partialorder %v2197, 0.0
          %vm2326 = vcmp.gt.f32.partialorder %v2198, 0.0
          %vm2327 = vcmp.gt.f32.partialorder %v2199, 0.0
          %vm2328 = vcmp.gt.f32.partialorder %v2200, 0.0
          %vm2329 = vcmp.gt.f32.partialorder %v2201, 0.0
          %vm2330 = vcmp.gt.f32.partialorder %v2202, 0.0
          %vm2331 = vcmp.gt.f32.partialorder %v2203, 0.0
          %vm2332 = vcmp.gt.f32.partialorder %v2204, 0.0
          %vm2333 = vcmp.gt.f32.partialorder %v2205, 0.0
          %vm2334 = vcmp.gt.f32.partialorder %v2206, 0.0
          %vm2335 = vcmp.gt.f32.partialorder %v2207, 0.0
          %vm2336 = vcmp.gt.f32.partialorder %v2208, 0.0
          %vm2337 = vcmp.gt.f32.partialorder %v2209, 0.0
          %vm2338 = vcmp.gt.f32.partialorder %v2210, 0.0
          %vm2339 = vcmp.gt.f32.partialorder %v2211, 0.0
          %vm2340 = vcmp.gt.f32.partialorder %v2212, 0.0
          %vm2341 = vcmp.gt.f32.partialorder %v2213, 0.0
          %vm2342 = vcmp.gt.f32.partialorder %v2214, 0.0
          %vm2343 = vcmp.gt.f32.partialorder %v2215, 0.0
          %vm2344 = vcmp.gt.f32.partialorder %v2216, 0.0
          %vm2345 = vcmp.gt.f32.partialorder %v2217, 0.0
          %vm2346 = vcmp.gt.f32.partialorder %v2218, 0.0
          %vm2347 = vcmp.gt.f32.partialorder %v2219, 0.0
          %vm2348 = vcmp.gt.f32.partialorder %v2220, 0.0
          %vm2349 = vcmp.gt.f32.partialorder %v2221, 0.0
          %vm2350 = vcmp.gt.f32.partialorder %v2222, 0.0
          %vm2351 = vcmp.gt.f32.partialorder %v2223, 0.0
          %vm2352 = vcmp.gt.f32.partialorder %v2224, 0.0
          %vm2353 = vcmp.gt.f32.partialorder %v2225, 0.0
          %vm2354 = vcmp.gt.f32.partialorder %v2226, 0.0
          %vm2355 = vcmp.gt.f32.partialorder %v2227, 0.0
          %vm2356 = vcmp.gt.f32.partialorder %v2228, 0.0
          %vm2357 = vcmp.gt.f32.partialorder %v2229, 0.0
          %vm2358 = vcmp.gt.f32.partialorder %v2230, 0.0
          %vm2359 = vcmp.gt.f32.partialorder %v2231, 0.0
          %vm2360 = vcmp.gt.f32.partialorder %v2232, 0.0
          %vm2361 = vcmp.gt.f32.partialorder %v2233, 0.0
          %vm2362 = vcmp.gt.f32.partialorder %v2234, 0.0
          %vm2363 = vcmp.gt.f32.partialorder %v2235, 0.0
          %vm2364 = vcmp.gt.f32.partialorder %v2236, 0.0
          %vm2365 = vcmp.gt.f32.partialorder %v2237, 0.0
          %vm2366 = vcmp.gt.f32.partialorder %v2238, 0.0
          %vm2367 = vcmp.gt.f32.partialorder %v2239, 0.0
          %vm2368 = vcmp.gt.f32.partialorder %v2240, 0.0
          %vm2369 = vcmp.gt.f32.partialorder %v2241, 0.0
          %vm2370 = vcmp.gt.f32.partialorder %v2242, 0.0
          %vm2371 = vcmp.gt.f32.partialorder %v2243, 0.0
          %vm2372 = vcmp.gt.f32.partialorder %v2244, 0.0
          %vm2373 = vcmp.gt.f32.partialorder %v2245, 0.0
          %vm2374 = vcmp.gt.f32.partialorder %v2246, 0.0
          %vm2375 = vcmp.gt.f32.partialorder %v2247, 0.0
          %vm2376 = vcmp.gt.f32.partialorder %v2248, 0.0
          %vm2377 = vcmp.gt.f32.partialorder %v2249, 0.0
          %vm2378 = vcmp.gt.f32.partialorder %v2250, 0.0
          %vm2379 = vcmp.gt.f32.partialorder %v2251, 0.0
          %vm2380 = vcmp.gt.f32.partialorder %v2252, 0.0
          %vm2381 = vcmp.gt.f32.partialorder %v2253, 0.0
          %v2382 = vmul.f32 %v2126, 0.1
          %v2383 = vmul.f32 %v2127, 0.1
          %v2384 = vmul.f32 %v2128, 0.1
          %v2385 = vmul.f32 %v2129, 0.1
          %v2386 = vmul.f32 %v2130, 0.1
          %v2387 = vmul.f32 %v2131, 0.1
          %v2388 = vmul.f32 %v2132, 0.1
          %v2389 = vmul.f32 %v2133, 0.1
          %v2390 = vmul.f32 %v2134, 0.1
          %v2391 = vmul.f32 %v2135, 0.1
          %v2392 = vmul.f32 %v2136, 0.1
          %v2393 = vmul.f32 %v2137, 0.1
          %v2394 = vmul.f32 %v2138, 0.1
          %v2395 = vmul.f32 %v2139, 0.1
          %v2396 = vmul.f32 %v2140, 0.1
          %v2397 = vmul.f32 %v2141, 0.1
          %v2398 = vmul.f32 %v2142, 0.1
          %v2399 = vmul.f32 %v2143, 0.1
          %v2400 = vmul.f32 %v2144, 0.1
          %v2401 = vmul.f32 %v2145, 0.1
          %v2402 = vmul.f32 %v2146, 0.1
          %v2403 = vmul.f32 %v2147, 0.1
          %v2404 = vmul.f32 %v2148, 0.1
          %v2405 = vmul.f32 %v2149, 0.1
          %v2406 = vmul.f32 %v2150, 0.1
          %v2407 = vmul.f32 %v2151, 0.1
          %v2408 = vmul.f32 %v2152, 0.1
          %v2409 = vmul.f32 %v2153, 0.1
          %v2410 = vmul.f32 %v2154, 0.1
          %v2411 = vmul.f32 %v2155, 0.1
          %v2412 = vmul.f32 %v2156, 0.1
          %v2413 = vmul.f32 %v2157, 0.1
          %v2414 = vmul.f32 %v2158, 0.1
          %v2415 = vmul.f32 %v2159, 0.1
          %v2416 = vmul.f32 %v2160, 0.1
          %v2417 = vmul.f32 %v2161, 0.1
          %v2418 = vmul.f32 %v2162, 0.1
          %v2419 = vmul.f32 %v2163, 0.1
          %v2420 = vmul.f32 %v2164, 0.1
          %v2421 = vmul.f32 %v2165, 0.1
          %v2422 = vmul.f32 %v2166, 0.1
          %v2423 = vmul.f32 %v2167, 0.1
          %v2424 = vmul.f32 %v2168, 0.1
          %v2425 = vmul.f32 %v2169, 0.1
          %v2426 = vmul.f32 %v2170, 0.1
          %v2427 = vmul.f32 %v2171, 0.1
          %v2428 = vmul.f32 %v2172, 0.1
          %v2429 = vmul.f32 %v2173, 0.1
          %v2430 = vmul.f32 %v2174, 0.1
          %v2431 = vmul.f32 %v2175, 0.1
          %v2432 = vmul.f32 %v2176, 0.1
          %v2433 = vmul.f32 %v2177, 0.1
          %v2434 = vmul.f32 %v2178, 0.1
          %v2435 = vmul.f32 %v2179, 0.1
          %v2436 = vmul.f32 %v2180, 0.1
          %v2437 = vmul.f32 %v2181, 0.1
          %v2438 = vmul.f32 %v2182, 0.1
          %v2439 = vmul.f32 %v2183, 0.1
          %v2440 = vmul.f32 %v2184, 0.1
          %v2441 = vmul.f32 %v2185, 0.1
          %v2442 = vmul.f32 %v2186, 0.1
          %v2443 = vmul.f32 %v2187, 0.1
          %v2444 = vmul.f32 %v2188, 0.1
          %v2445 = vmul.f32 %v2189, 0.1
          %v2446 = vmul.f32 %v2190, 0.1
          %v2447 = vmul.f32 %v2191, 0.1
          %v2448 = vmul.f32 %v2192, 0.1
          %v2449 = vmul.f32 %v2193, 0.1
          %v2450 = vmul.f32 %v2194, 0.1
          %v2451 = vmul.f32 %v2195, 0.1
          %v2452 = vmul.f32 %v2196, 0.1
          %v2453 = vmul.f32 %v2197, 0.1
          %v2454 = vmul.f32 %v2198, 0.1
          %v2455 = vmul.f32 %v2199, 0.1
          %v2456 = vmul.f32 %v2200, 0.1
          %v2457 = vmul.f32 %v2201, 0.1
          %v2458 = vmul.f32 %v2202, 0.1
          %v2459 = vmul.f32 %v2203, 0.1
          %v2460 = vmul.f32 %v2204, 0.1
          %v2461 = vmul.f32 %v2205, 0.1
          %v2462 = vmul.f32 %v2206, 0.1
          %v2463 = vmul.f32 %v2207, 0.1
          %v2464 = vmul.f32 %v2208, 0.1
          %v2465 = vmul.f32 %v2209, 0.1
          %v2466 = vmul.f32 %v2210, 0.1
          %v2467 = vmul.f32 %v2211, 0.1
          %v2468 = vmul.f32 %v2212, 0.1
          %v2469 = vmul.f32 %v2213, 0.1
          %v2470 = vmul.f32 %v2214, 0.1
          %v2471 = vmul.f32 %v2215, 0.1
          %v2472 = vmul.f32 %v2216, 0.1
          %v2473 = vmul.f32 %v2217, 0.1
          %v2474 = vmul.f32 %v2218, 0.1
          %v2475 = vmul.f32 %v2219, 0.1
          %v2476 = vmul.f32 %v2220, 0.1
          %v2477 = vmul.f32 %v2221, 0.1
          %v2478 = vmul.f32 %v2222, 0.1
          %v2479 = vmul.f32 %v2223, 0.1
          %v2480 = vmul.f32 %v2224, 0.1
          %v2481 = vmul.f32 %v2225, 0.1
          %v2482 = vmul.f32 %v2226, 0.1
          %v2483 = vmul.f32 %v2227, 0.1
          %v2484 = vmul.f32 %v2228, 0.1
          %v2485 = vmul.f32 %v2229, 0.1
          %v2486 = vmul.f32 %v2230, 0.1
          %v2487 = vmul.f32 %v2231, 0.1
          %v2488 = vmul.f32 %v2232, 0.1
          %v2489 = vmul.f32 %v2233, 0.1
          %v2490 = vmul.f32 %v2234, 0.1
          %v2491 = vmul.f32 %v2235, 0.1
          %v2492 = vmul.f32 %v2236, 0.1
          %v2493 = vmul.f32 %v2237, 0.1
          %v2494 = vmul.f32 %v2238, 0.1
          %v2495 = vmul.f32 %v2239, 0.1
          %v2496 = vmul.f32 %v2240, 0.1
          %v2497 = vmul.f32 %v2241, 0.1
          %v2498 = vmul.f32 %v2242, 0.1
          %v2499 = vmul.f32 %v2243, 0.1
          %v2500 = vmul.f32 %v2244, 0.1
          %v2501 = vmul.f32 %v2245, 0.1
          %v2502 = vmul.f32 %v2246, 0.1
          %v2503 = vmul.f32 %v2247, 0.1
          %v2504 = vmul.f32 %v2248, 0.1
          %v2505 = vmul.f32 %v2249, 0.1
          %v2506 = vmul.f32 %v2250, 0.1
          %v2507 = vmul.f32 %v2251, 0.1
          %v2508 = vmul.f32 %v2252, 0.1
          %v2509 = vmul.f32 %v2253, 0.1
          %v2510 = vsel %vm2254, %v2126, %v2382
          %v2511 = vsel %vm2255, %v2127, %v2383
          %v2512 = vsel %vm2256, %v2128, %v2384
          %v2513 = vsel %vm2257, %v2129, %v2385
          %v2514 = vsel %vm2258, %v2130, %v2386
          %v2515 = vsel %vm2259, %v2131, %v2387
          %v2516 = vsel %vm2260, %v2132, %v2388
          %v2517 = vsel %vm2261, %v2133, %v2389
          %v2518 = vsel %vm2262, %v2134, %v2390
          %v2519 = vsel %vm2263, %v2135, %v2391
          %v2520 = vsel %vm2264, %v2136, %v2392
          %v2521 = vsel %vm2265, %v2137, %v2393
          %v2522 = vsel %vm2266, %v2138, %v2394
          %v2523 = vsel %vm2267, %v2139, %v2395
          %v2524 = vsel %vm2268, %v2140, %v2396
          %v2525 = vsel %vm2269, %v2141, %v2397
          %v2526 = vsel %vm2270, %v2142, %v2398
          %v2527 = vsel %vm2271, %v2143, %v2399
          %v2528 = vsel %vm2272, %v2144, %v2400
          %v2529 = vsel %vm2273, %v2145, %v2401
          %v2530 = vsel %vm2274, %v2146, %v2402
          %v2531 = vsel %vm2275, %v2147, %v2403
          %v2532 = vsel %vm2276, %v2148, %v2404
          %v2533 = vsel %vm2277, %v2149, %v2405
          %v2534 = vsel %vm2278, %v2150, %v2406
          %v2535 = vsel %vm2279, %v2151, %v2407
          %v2536 = vsel %vm2280, %v2152, %v2408
          %v2537 = vsel %vm2281, %v2153, %v2409
          %v2538 = vsel %vm2282, %v2154, %v2410
          %v2539 = vsel %vm2283, %v2155, %v2411
          %v2540 = vsel %vm2284, %v2156, %v2412
          %v2541 = vsel %vm2285, %v2157, %v2413
          %v2542 = vsel %vm2286, %v2158, %v2414
          %v2543 = vsel %vm2287, %v2159, %v2415
          %v2544 = vsel %vm2288, %v2160, %v2416
          %v2545 = vsel %vm2289, %v2161, %v2417
          %v2546 = vsel %vm2290, %v2162, %v2418
          %v2547 = vsel %vm2291, %v2163, %v2419
          %v2548 = vsel %vm2292, %v2164, %v2420
          %v2549 = vsel %vm2293, %v2165, %v2421
          %v2550 = vsel %vm2294, %v2166, %v2422
          %v2551 = vsel %vm2295, %v2167, %v2423
          %v2552 = vsel %vm2296, %v2168, %v2424
          %v2553 = vsel %vm2297, %v2169, %v2425
          %v2554 = vsel %vm2298, %v2170, %v2426
          %v2555 = vsel %vm2299, %v2171, %v2427
          %v2556 = vsel %vm2300, %v2172, %v2428
          %v2557 = vsel %vm2301, %v2173, %v2429
          %v2558 = vsel %vm2302, %v2174, %v2430
          %v2559 = vsel %vm2303, %v2175, %v2431
          %v2560 = vsel %vm2304, %v2176, %v2432
          %v2561 = vsel %vm2305, %v2177, %v2433
          %v2562 = vsel %vm2306, %v2178, %v2434
          %v2563 = vsel %vm2307, %v2179, %v2435
          %v2564 = vsel %vm2308, %v2180, %v2436
          %v2565 = vsel %vm2309, %v2181, %v2437
          %v2566 = vsel %vm2310, %v2182, %v2438
          %v2567 = vsel %vm2311, %v2183, %v2439
          %v2568 = vsel %vm2312, %v2184, %v2440
          %v2569 = vsel %vm2313, %v2185, %v2441
          %v2570 = vsel %vm2314, %v2186, %v2442
          %v2571 = vsel %vm2315, %v2187, %v2443
          %v2572 = vsel %vm2316, %v2188, %v2444
          %v2573 = vsel %vm2317, %v2189, %v2445
          %v2574 = vsel %vm2318, %v2190, %v2446
          %v2575 = vsel %vm2319, %v2191, %v2447
          %v2576 = vsel %vm2320, %v2192, %v2448
          %v2577 = vsel %vm2321, %v2193, %v2449
          %v2578 = vsel %vm2322, %v2194, %v2450
          %v2579 = vsel %vm2323, %v2195, %v2451
          %v2580 = vsel %vm2324, %v2196, %v2452
          %v2581 = vsel %vm2325, %v2197, %v2453
          %v2582 = vsel %vm2326, %v2198, %v2454
          %v2583 = vsel %vm2327, %v2199, %v2455
          %v2584 = vsel %vm2328, %v2200, %v2456
          %v2585 = vsel %vm2329, %v2201, %v2457
          %v2586 = vsel %vm2330, %v2202, %v2458
          %v2587 = vsel %vm2331, %v2203, %v2459
          %v2588 = vsel %vm2332, %v2204, %v2460
          %v2589 = vsel %vm2333, %v2205, %v2461
          %v2590 = vsel %vm2334, %v2206, %v2462
          %v2591 = vsel %vm2335, %v2207, %v2463
          %v2592 = vsel %vm2336, %v2208, %v2464
          %v2593 = vsel %vm2337, %v2209, %v2465
          %v2594 = vsel %vm2338, %v2210, %v2466
          %v2595 = vsel %vm2339, %v2211, %v2467
          %v2596 = vsel %vm2340, %v2212, %v2468
          %v2597 = vsel %vm2341, %v2213, %v2469
          %v2598 = vsel %vm2342, %v2214, %v2470
          %v2599 = vsel %vm2343, %v2215, %v2471
          %v2600 = vsel %vm2344, %v2216, %v2472
          %v2601 = vsel %vm2345, %v2217, %v2473
          %v2602 = vsel %vm2346, %v2218, %v2474
          %v2603 = vsel %vm2347, %v2219, %v2475
          %v2604 = vsel %vm2348, %v2220, %v2476
          %v2605 = vsel %vm2349, %v2221, %v2477
          %v2606 = vsel %vm2350, %v2222, %v2478
          %v2607 = vsel %vm2351, %v2223, %v2479
          %v2608 = vsel %vm2352, %v2224, %v2480
          %v2609 = vsel %vm2353, %v2225, %v2481
          %v2610 = vsel %vm2354, %v2226, %v2482
          %v2611 = vsel %vm2355, %v2227, %v2483
          %v2612 = vsel %vm2356, %v2228, %v2484
          %v2613 = vsel %vm2357, %v2229, %v2485
          %v2614 = vsel %vm2358, %v2230, %v2486
          %v2615 = vsel %vm2359, %v2231, %v2487
          %v2616 = vsel %vm2360, %v2232, %v2488
          %v2617 = vsel %vm2361, %v2233, %v2489
          %v2618 = vsel %vm2362, %v2234, %v2490
          %v2619 = vsel %vm2363, %v2235, %v2491
          %v2620 = vsel %vm2364, %v2236, %v2492
          %v2621 = vsel %vm2365, %v2237, %v2493
          %v2622 = vsel %vm2366, %v2238, %v2494
          %v2623 = vsel %vm2367, %v2239, %v2495
          %v2624 = vsel %vm2368, %v2240, %v2496
          %v2625 = vsel %vm2369, %v2241, %v2497
          %v2626 = vsel %vm2370, %v2242, %v2498
          %v2627 = vsel %vm2371, %v2243, %v2499
          %v2628 = vsel %vm2372, %v2244, %v2500
          %v2629 = vsel %vm2373, %v2245, %v2501
          %v2630 = vsel %vm2374, %v2246, %v2502
          %v2631 = vsel %vm2375, %v2247, %v2503
          %v2632 = vsel %vm2376, %v2248, %v2504
          %v2633 = vsel %vm2377, %v2249, %v2505
          %v2634 = vsel %vm2378, %v2250, %v2506
          %v2635 = vsel %vm2379, %v2251, %v2507
          %v2636 = vsel %vm2380, %v2252, %v2508
          %v2637 = vsel %vm2381, %v2253, %v2509
          %v2638 = vpack.c.bf16 %v2511, %v2510
          %v2639 = vpack.c.bf16 %v2513, %v2512
          %v2640 = vpack.c.bf16 %v2515, %v2514
          %v2641 = vpack.c.bf16 %v2517, %v2516
          %v2642 = vpack.c.bf16 %v2519, %v2518
          %v2643 = vpack.c.bf16 %v2521, %v2520
          %v2644 = vpack.c.bf16 %v2523, %v2522
          %v2645 = vpack.c.bf16 %v2525, %v2524
          %v2646 = vpack.c.bf16 %v2527, %v2526
          %v2647 = vpack.c.bf16 %v2529, %v2528
          %v2648 = vpack.c.bf16 %v2531, %v2530
          %v2649 = vpack.c.bf16 %v2533, %v2532
          %v2650 = vpack.c.bf16 %v2535, %v2534
          %v2651 = vpack.c.bf16 %v2537, %v2536
          %v2652 = vpack.c.bf16 %v2539, %v2538
          %v2653 = vpack.c.bf16 %v2541, %v2540
          %v2654 = vpack.c.bf16 %v2543, %v2542
          %v2655 = vpack.c.bf16 %v2545, %v2544
          %v2656 = vpack.c.bf16 %v2547, %v2546
          %v2657 = vpack.c.bf16 %v2549, %v2548
          %v2658 = vpack.c.bf16 %v2551, %v2550
          %v2659 = vpack.c.bf16 %v2553, %v2552
          %v2660 = vpack.c.bf16 %v2555, %v2554
          %v2661 = vpack.c.bf16 %v2557, %v2556
          %v2662 = vpack.c.bf16 %v2559, %v2558
          %v2663 = vpack.c.bf16 %v2561, %v2560
          %v2664 = vpack.c.bf16 %v2563, %v2562
          %v2665 = vpack.c.bf16 %v2565, %v2564
          %v2666 = vpack.c.bf16 %v2567, %v2566
          %v2667 = vpack.c.bf16 %v2569, %v2568
          %v2668 = vpack.c.bf16 %v2571, %v2570
          %v2669 = vpack.c.bf16 %v2573, %v2572
          %v2670 = vpack.c.bf16 %v2575, %v2574
          %v2671 = vpack.c.bf16 %v2577, %v2576
          %v2672 = vpack.c.bf16 %v2579, %v2578
          %v2673 = vpack.c.bf16 %v2581, %v2580
          %v2674 = vpack.c.bf16 %v2583, %v2582
          %v2675 = vpack.c.bf16 %v2585, %v2584
          %v2676 = vpack.c.bf16 %v2587, %v2586
          %v2677 = vpack.c.bf16 %v2589, %v2588
          %v2678 = vpack.c.bf16 %v2591, %v2590
          %v2679 = vpack.c.bf16 %v2593, %v2592
          %v2680 = vpack.c.bf16 %v2595, %v2594
          %v2681 = vpack.c.bf16 %v2597, %v2596
          %v2682 = vpack.c.bf16 %v2599, %v2598
          %v2683 = vpack.c.bf16 %v2601, %v2600
          %v2684 = vpack.c.bf16 %v2603, %v2602
          %v2685 = vpack.c.bf16 %v2605, %v2604
          %v2686 = vpack.c.bf16 %v2607, %v2606
          %v2687 = vpack.c.bf16 %v2609, %v2608
          %v2688 = vpack.c.bf16 %v2611, %v2610
          %v2689 = vpack.c.bf16 %v2613, %v2612
          %v2690 = vpack.c.bf16 %v2615, %v2614
          %v2691 = vpack.c.bf16 %v2617, %v2616
          %v2692 = vpack.c.bf16 %v2619, %v2618
          %v2693 = vpack.c.bf16 %v2621, %v2620
          %v2694 = vpack.c.bf16 %v2623, %v2622
          %v2695 = vpack.c.bf16 %v2625, %v2624
          %v2696 = vpack.c.bf16 %v2627, %v2626
          %v2697 = vpack.c.bf16 %v2629, %v2628
          %v2698 = vpack.c.bf16 %v2631, %v2630
          %v2699 = vpack.c.bf16 %v2633, %v2632
          %v2700 = vpack.c.bf16 %v2635, %v2634
          %v2701 = vpack.c.bf16 %v2637, %v2636
          %v2766 = vunpack.c.l.b16 %v2638
          %v2767 = vunpack.c.h.b16 %v2638
          %v2768 = vunpack.c.l.b16 %v2639
          %v2769 = vunpack.c.h.b16 %v2639
          %v2770 = vunpack.c.l.b16 %v2640
          %v2771 = vunpack.c.h.b16 %v2640
          %v2772 = vunpack.c.l.b16 %v2641
          %v2773 = vunpack.c.h.b16 %v2641
          %v2774 = vunpack.c.l.b16 %v2642
          %v2775 = vunpack.c.h.b16 %v2642
          %v2776 = vunpack.c.l.b16 %v2643
          %v2777 = vunpack.c.h.b16 %v2643
          %v2778 = vunpack.c.l.b16 %v2644
          %v2779 = vunpack.c.h.b16 %v2644
          %v2780 = vunpack.c.l.b16 %v2645
          %v2781 = vunpack.c.h.b16 %v2645
          %v2782 = vunpack.c.l.b16 %v2646
          %v2783 = vunpack.c.h.b16 %v2646
          %v2784 = vunpack.c.l.b16 %v2647
          %v2785 = vunpack.c.h.b16 %v2647
          %v2786 = vunpack.c.l.b16 %v2648
          %v2787 = vunpack.c.h.b16 %v2648
          %v2788 = vunpack.c.l.b16 %v2649
          %v2789 = vunpack.c.h.b16 %v2649
          %v2790 = vunpack.c.l.b16 %v2650
          %v2791 = vunpack.c.h.b16 %v2650
          %v2792 = vunpack.c.l.b16 %v2651
          %v2793 = vunpack.c.h.b16 %v2651
          %v2794 = vunpack.c.l.b16 %v2652
          %v2795 = vunpack.c.h.b16 %v2652
          %v2796 = vunpack.c.l.b16 %v2653
          %v2797 = vunpack.c.h.b16 %v2653
          %v2798 = vunpack.c.l.b16 %v2654
          %v2799 = vunpack.c.h.b16 %v2654
          %v2800 = vunpack.c.l.b16 %v2655
          %v2801 = vunpack.c.h.b16 %v2655
          %v2802 = vunpack.c.l.b16 %v2656
          %v2803 = vunpack.c.h.b16 %v2656
          %v2804 = vunpack.c.l.b16 %v2657
          %v2805 = vunpack.c.h.b16 %v2657
          %v2806 = vunpack.c.l.b16 %v2658
          %v2807 = vunpack.c.h.b16 %v2658
          %v2808 = vunpack.c.l.b16 %v2659
          %v2809 = vunpack.c.h.b16 %v2659
          %v2810 = vunpack.c.l.b16 %v2660
          %v2811 = vunpack.c.h.b16 %v2660
          %v2812 = vunpack.c.l.b16 %v2661
          %v2813 = vunpack.c.h.b16 %v2661
          %v2814 = vunpack.c.l.b16 %v2662
          %v2815 = vunpack.c.h.b16 %v2662
          %v2816 = vunpack.c.l.b16 %v2663
          %v2817 = vunpack.c.h.b16 %v2663
          %v2818 = vunpack.c.l.b16 %v2664
          %v2819 = vunpack.c.h.b16 %v2664
          %v2820 = vunpack.c.l.b16 %v2665
          %v2821 = vunpack.c.h.b16 %v2665
          %v2822 = vunpack.c.l.b16 %v2666
          %v2823 = vunpack.c.h.b16 %v2666
          %v2824 = vunpack.c.l.b16 %v2667
          %v2825 = vunpack.c.h.b16 %v2667
          %v2826 = vunpack.c.l.b16 %v2668
          %v2827 = vunpack.c.h.b16 %v2668
          %v2828 = vunpack.c.l.b16 %v2669
          %v2829 = vunpack.c.h.b16 %v2669
          %v2830 = vunpack.c.l.b16 %v2670
          %v2831 = vunpack.c.h.b16 %v2670
          %v2832 = vunpack.c.l.b16 %v2671
          %v2833 = vunpack.c.h.b16 %v2671
          %v2834 = vunpack.c.l.b16 %v2672
          %v2835 = vunpack.c.h.b16 %v2672
          %v2836 = vunpack.c.l.b16 %v2673
          %v2837 = vunpack.c.h.b16 %v2673
          %v2838 = vunpack.c.l.b16 %v2674
          %v2839 = vunpack.c.h.b16 %v2674
          %v2840 = vunpack.c.l.b16 %v2675
          %v2841 = vunpack.c.h.b16 %v2675
          %v2842 = vunpack.c.l.b16 %v2676
          %v2843 = vunpack.c.h.b16 %v2676
          %v2844 = vunpack.c.l.b16 %v2677
          %v2845 = vunpack.c.h.b16 %v2677
          %v2846 = vunpack.c.l.b16 %v2678
          %v2847 = vunpack.c.h.b16 %v2678
          %v2848 = vunpack.c.l.b16 %v2679
          %v2849 = vunpack.c.h.b16 %v2679
          %v2850 = vunpack.c.l.b16 %v2680
          %v2851 = vunpack.c.h.b16 %v2680
          %v2852 = vunpack.c.l.b16 %v2681
          %v2853 = vunpack.c.h.b16 %v2681
          %v2854 = vunpack.c.l.b16 %v2682
          %v2855 = vunpack.c.h.b16 %v2682
          %v2856 = vunpack.c.l.b16 %v2683
          %v2857 = vunpack.c.h.b16 %v2683
          %v2858 = vunpack.c.l.b16 %v2684
          %v2859 = vunpack.c.h.b16 %v2684
          %v2860 = vunpack.c.l.b16 %v2685
          %v2861 = vunpack.c.h.b16 %v2685
          %v2862 = vunpack.c.l.b16 %v2686
          %v2863 = vunpack.c.h.b16 %v2686
          %v2864 = vunpack.c.l.b16 %v2687
          %v2865 = vunpack.c.h.b16 %v2687
          %v2866 = vunpack.c.l.b16 %v2688
          %v2867 = vunpack.c.h.b16 %v2688
          %v2868 = vunpack.c.l.b16 %v2689
          %v2869 = vunpack.c.h.b16 %v2689
          %v2870 = vunpack.c.l.b16 %v2690
          %v2871 = vunpack.c.h.b16 %v2690
          %v2872 = vunpack.c.l.b16 %v2691
          %v2873 = vunpack.c.h.b16 %v2691
          %v2874 = vunpack.c.l.b16 %v2692
          %v2875 = vunpack.c.h.b16 %v2692
          %v2876 = vunpack.c.l.b16 %v2693
          %v2877 = vunpack.c.h.b16 %v2693
          %v2878 = vunpack.c.l.b16 %v2694
          %v2879 = vunpack.c.h.b16 %v2694
          %v2880 = vunpack.c.l.b16 %v2695
          %v2881 = vunpack.c.h.b16 %v2695
          %v2882 = vunpack.c.l.b16 %v2696
          %v2883 = vunpack.c.h.b16 %v2696
          %v2884 = vunpack.c.l.b16 %v2697
          %v2885 = vunpack.c.h.b16 %v2697
          %v2886 = vunpack.c.l.b16 %v2698
          %v2887 = vunpack.c.h.b16 %v2698
          %v2888 = vunpack.c.l.b16 %v2699
          %v2889 = vunpack.c.h.b16 %v2699
          %v2890 = vunpack.c.l.b16 %v2700
          %v2891 = vunpack.c.h.b16 %v2700
          %v2892 = vunpack.c.l.b16 %v2701
          %v2893 = vunpack.c.h.b16 %v2701
          %v2894 = vpack.c.b16 %v2766, %v2766
          %v2895 = vpack.c.b16 %v2767, %v2767
          %v2896 = vpack.c.b16 %v2768, %v2768
          %v2897 = vpack.c.b16 %v2769, %v2769
          %v2898 = vpack.c.b16 %v2770, %v2770
          %v2899 = vpack.c.b16 %v2771, %v2771
          %v2900 = vpack.c.b16 %v2772, %v2772
          %v2901 = vpack.c.b16 %v2773, %v2773
          %v2902 = vpack.c.b16 %v2774, %v2774
          %v2903 = vpack.c.b16 %v2775, %v2775
          %v2904 = vpack.c.b16 %v2776, %v2776
          %v2905 = vpack.c.b16 %v2777, %v2777
          %v2906 = vpack.c.b16 %v2778, %v2778
          %v2907 = vpack.c.b16 %v2779, %v2779
          %v2908 = vpack.c.b16 %v2780, %v2780
          %v2909 = vpack.c.b16 %v2781, %v2781
          %v2910 = vpack.c.b16 %v2782, %v2782
          %v2911 = vpack.c.b16 %v2783, %v2783
          %v2912 = vpack.c.b16 %v2784, %v2784
          %v2913 = vpack.c.b16 %v2785, %v2785
          %v2914 = vpack.c.b16 %v2786, %v2786
          %v2915 = vpack.c.b16 %v2787, %v2787
          %v2916 = vpack.c.b16 %v2788, %v2788
          %v2917 = vpack.c.b16 %v2789, %v2789
          %v2918 = vpack.c.b16 %v2790, %v2790
          %v2919 = vpack.c.b16 %v2791, %v2791
          %v2920 = vpack.c.b16 %v2792, %v2792
          %v2921 = vpack.c.b16 %v2793, %v2793
          %v2922 = vpack.c.b16 %v2794, %v2794
          %v2923 = vpack.c.b16 %v2795, %v2795
          %v2924 = vpack.c.b16 %v2796, %v2796
          %v2925 = vpack.c.b16 %v2797, %v2797
          %v2926 = vpack.c.b16 %v2798, %v2798
          %v2927 = vpack.c.b16 %v2799, %v2799
          %v2928 = vpack.c.b16 %v2800, %v2800
          %v2929 = vpack.c.b16 %v2801, %v2801
          %v2930 = vpack.c.b16 %v2802, %v2802
          %v2931 = vpack.c.b16 %v2803, %v2803
          %v2932 = vpack.c.b16 %v2804, %v2804
          %v2933 = vpack.c.b16 %v2805, %v2805
          %v2934 = vpack.c.b16 %v2806, %v2806
          %v2935 = vpack.c.b16 %v2807, %v2807
          %v2936 = vpack.c.b16 %v2808, %v2808
          %v2937 = vpack.c.b16 %v2809, %v2809
          %v2938 = vpack.c.b16 %v2810, %v2810
          %v2939 = vpack.c.b16 %v2811, %v2811
          %v2940 = vpack.c.b16 %v2812, %v2812
          %v2941 = vpack.c.b16 %v2813, %v2813
          %v2942 = vpack.c.b16 %v2814, %v2814
          %v2943 = vpack.c.b16 %v2815, %v2815
          %v2944 = vpack.c.b16 %v2816, %v2816
          %v2945 = vpack.c.b16 %v2817, %v2817
          %v2946 = vpack.c.b16 %v2818, %v2818
          %v2947 = vpack.c.b16 %v2819, %v2819
          %v2948 = vpack.c.b16 %v2820, %v2820
          %v2949 = vpack.c.b16 %v2821, %v2821
          %v2950 = vpack.c.b16 %v2822, %v2822
          %v2951 = vpack.c.b16 %v2823, %v2823
          %v2952 = vpack.c.b16 %v2824, %v2824
          %v2953 = vpack.c.b16 %v2825, %v2825
          %v2954 = vpack.c.b16 %v2826, %v2826
          %v2955 = vpack.c.b16 %v2827, %v2827
          %v2956 = vpack.c.b16 %v2828, %v2828
          %v2957 = vpack.c.b16 %v2829, %v2829
          %v2958 = vpack.c.b16 %v2830, %v2830
          %v2959 = vpack.c.b16 %v2831, %v2831
          %v2960 = vpack.c.b16 %v2832, %v2832
          %v2961 = vpack.c.b16 %v2833, %v2833
          %v2962 = vpack.c.b16 %v2834, %v2834
          %v2963 = vpack.c.b16 %v2835, %v2835
          %v2964 = vpack.c.b16 %v2836, %v2836
          %v2965 = vpack.c.b16 %v2837, %v2837
          %v2966 = vpack.c.b16 %v2838, %v2838
          %v2967 = vpack.c.b16 %v2839, %v2839
          %v2968 = vpack.c.b16 %v2840, %v2840
          %v2969 = vpack.c.b16 %v2841, %v2841
          %v2970 = vpack.c.b16 %v2842, %v2842
          %v2971 = vpack.c.b16 %v2843, %v2843
          %v2972 = vpack.c.b16 %v2844, %v2844
          %v2973 = vpack.c.b16 %v2845, %v2845
          %v2974 = vpack.c.b16 %v2846, %v2846
          %v2975 = vpack.c.b16 %v2847, %v2847
          %v2976 = vpack.c.b16 %v2848, %v2848
          %v2977 = vpack.c.b16 %v2849, %v2849
          %v2978 = vpack.c.b16 %v2850, %v2850
          %v2979 = vpack.c.b16 %v2851, %v2851
          %v2980 = vpack.c.b16 %v2852, %v2852
          %v2981 = vpack.c.b16 %v2853, %v2853
          %v2982 = vpack.c.b16 %v2854, %v2854
          %v2983 = vpack.c.b16 %v2855, %v2855
          %v2984 = vpack.c.b16 %v2856, %v2856
          %v2985 = vpack.c.b16 %v2857, %v2857
          %v2986 = vpack.c.b16 %v2858, %v2858
          %v2987 = vpack.c.b16 %v2859, %v2859
          %v2988 = vpack.c.b16 %v2860, %v2860
          %v2989 = vpack.c.b16 %v2861, %v2861
          %v2990 = vpack.c.b16 %v2862, %v2862
          %v2991 = vpack.c.b16 %v2863, %v2863
          %v2992 = vpack.c.b16 %v2864, %v2864
          %v2993 = vpack.c.b16 %v2865, %v2865
          %v2994 = vpack.c.b16 %v2866, %v2866
          %v2995 = vpack.c.b16 %v2867, %v2867
          %v2996 = vpack.c.b16 %v2868, %v2868
          %v2997 = vpack.c.b16 %v2869, %v2869
          %v2998 = vpack.c.b16 %v2870, %v2870
          %v2999 = vpack.c.b16 %v2871, %v2871
          %v3000 = vpack.c.b16 %v2872, %v2872
          %v3001 = vpack.c.b16 %v2873, %v2873
          %v3002 = vpack.c.b16 %v2874, %v2874
          %v3003 = vpack.c.b16 %v2875, %v2875
          %v3004 = vpack.c.b16 %v2876, %v2876
          %v3005 = vpack.c.b16 %v2877, %v2877
          %v3006 = vpack.c.b16 %v2878, %v2878
          %v3007 = vpack.c.b16 %v2879, %v2879
          %v3008 = vpack.c.b16 %v2880, %v2880
          %v3009 = vpack.c.b16 %v2881, %v2881
          %v3010 = vpack.c.b16 %v2882, %v2882
          %v3011 = vpack.c.b16 %v2883, %v2883
          %v3012 = vpack.c.b16 %v2884, %v2884
          %v3013 = vpack.c.b16 %v2885, %v2885
          %v3014 = vpack.c.b16 %v2886, %v2886
          %v3015 = vpack.c.b16 %v2887, %v2887
          %v3016 = vpack.c.b16 %v2888, %v2888
          %v3017 = vpack.c.b16 %v2889, %v2889
          %v3018 = vpack.c.b16 %v2890, %v2890
          %v3019 = vpack.c.b16 %v2891, %v2891
          %v3020 = vpack.c.b16 %v2892, %v2892
          %v3021 = vpack.c.b16 %v2893, %v2893
          %vm3150 = vcmask 257024
          %3151 = vst.msk [vmem:[%s257] sm:$0xf] %vm3150, %v2894
          %3152 = vst.msk [vmem:[%s257 + $0x4] sm:$0xf] %vm3150, %v2895
          %3153 = vst.msk [vmem:[%s257 + $0x8] sm:$0xf] %vm3150, %v2896
          %3154 = vst.msk [vmem:[%s257 + $0xc] sm:$0xf] %vm3150, %v2897
          %3155 = vst.msk [vmem:[%s257 + $0x10] sm:$0xf] %vm3150, %v2898
          %3156 = vst.msk [vmem:[%s257 + $0x14] sm:$0xf] %vm3150, %v2899
          %3157 = vst.msk [vmem:[%s257 + $0x18] sm:$0xf] %vm3150, %v2900
          %3158 = vst.msk [vmem:[%s257 + $0x1c] sm:$0xf] %vm3150, %v2901
          %3159 = vst.msk [vmem:[%s257 + $0x20] sm:$0xf] %vm3150, %v2902
          %3160 = vst.msk [vmem:[%s257 + $0x24] sm:$0xf] %vm3150, %v2903
          %3161 = vst.msk [vmem:[%s257 + $0x28] sm:$0xf] %vm3150, %v2904
          %3162 = vst.msk [vmem:[%s257 + $0x2c] sm:$0xf] %vm3150, %v2905
          %3163 = vst.msk [vmem:[%s257 + $0x30] sm:$0xf] %vm3150, %v2906
          %3164 = vst.msk [vmem:[%s257 + $0x34] sm:$0xf] %vm3150, %v2907
          %3165 = vst.msk [vmem:[%s257 + $0x38] sm:$0xf] %vm3150, %v2908
          %3166 = vst.msk [vmem:[%s257 + $0x3c] sm:$0xf] %vm3150, %v2909
          %3167 = vst.msk [vmem:[%s257 + $0x40] sm:$0xf] %vm3150, %v2910
          %3168 = vst.msk [vmem:[%s257 + $0x44] sm:$0xf] %vm3150, %v2911
          %3169 = vst.msk [vmem:[%s257 + $0x48] sm:$0xf] %vm3150, %v2912
          %3170 = vst.msk [vmem:[%s257 + $0x4c] sm:$0xf] %vm3150, %v2913
          %3171 = vst.msk [vmem:[%s257 + $0x50] sm:$0xf] %vm3150, %v2914
          %3172 = vst.msk [vmem:[%s257 + $0x54] sm:$0xf] %vm3150, %v2915
          %3173 = vst.msk [vmem:[%s257 + $0x58] sm:$0xf] %vm3150, %v2916
          %3174 = vst.msk [vmem:[%s257 + $0x5c] sm:$0xf] %vm3150, %v2917
          %3175 = vst.msk [vmem:[%s257 + $0x60] sm:$0xf] %vm3150, %v2918
          %3176 = vst.msk [vmem:[%s257 + $0x64] sm:$0xf] %vm3150, %v2919
          %3177 = vst.msk [vmem:[%s257 + $0x68] sm:$0xf] %vm3150, %v2920
          %3178 = vst.msk [vmem:[%s257 + $0x6c] sm:$0xf] %vm3150, %v2921
          %3179 = vst.msk [vmem:[%s257 + $0x70] sm:$0xf] %vm3150, %v2922
          %3180 = vst.msk [vmem:[%s257 + $0x74] sm:$0xf] %vm3150, %v2923
          %3181 = vst.msk [vmem:[%s257 + $0x78] sm:$0xf] %vm3150, %v2924
          %3182 = vst.msk [vmem:[%s257 + $0x7c] sm:$0xf] %vm3150, %v2925
          %3183 = vst.msk [vmem:[%s257 + $0x80] sm:$0xf] %vm3150, %v2926
          %3184 = vst.msk [vmem:[%s257 + $0x84] sm:$0xf] %vm3150, %v2927
          %3185 = vst.msk [vmem:[%s257 + $0x88] sm:$0xf] %vm3150, %v2928
          %3186 = vst.msk [vmem:[%s257 + $0x8c] sm:$0xf] %vm3150, %v2929
          %3187 = vst.msk [vmem:[%s257 + $0x90] sm:$0xf] %vm3150, %v2930
          %3188 = vst.msk [vmem:[%s257 + $0x94] sm:$0xf] %vm3150, %v2931
          %3189 = vst.msk [vmem:[%s257 + $0x98] sm:$0xf] %vm3150, %v2932
          %3190 = vst.msk [vmem:[%s257 + $0x9c] sm:$0xf] %vm3150, %v2933
          %3191 = vst.msk [vmem:[%s257 + $0xa0] sm:$0xf] %vm3150, %v2934
          %3192 = vst.msk [vmem:[%s257 + $0xa4] sm:$0xf] %vm3150, %v2935
          %3193 = vst.msk [vmem:[%s257 + $0xa8] sm:$0xf] %vm3150, %v2936
          %3194 = vst.msk [vmem:[%s257 + $0xac] sm:$0xf] %vm3150, %v2937
          %3195 = vst.msk [vmem:[%s257 + $0xb0] sm:$0xf] %vm3150, %v2938
          %3196 = vst.msk [vmem:[%s257 + $0xb4] sm:$0xf] %vm3150, %v2939
          %3197 = vst.msk [vmem:[%s257 + $0xb8] sm:$0xf] %vm3150, %v2940
          %3198 = vst.msk [vmem:[%s257 + $0xbc] sm:$0xf] %vm3150, %v2941
          %3199 = vst.msk [vmem:[%s257 + $0xc0] sm:$0xf] %vm3150, %v2942
          %3200 = vst.msk [vmem:[%s257 + $0xc4] sm:$0xf] %vm3150, %v2943
          %3201 = vst.msk [vmem:[%s257 + $0xc8] sm:$0xf] %vm3150, %v2944
          %3202 = vst.msk [vmem:[%s257 + $0xcc] sm:$0xf] %vm3150, %v2945
          %3203 = vst.msk [vmem:[%s257 + $0xd0] sm:$0xf] %vm3150, %v2946
          %3204 = vst.msk [vmem:[%s257 + $0xd4] sm:$0xf] %vm3150, %v2947
          %3205 = vst.msk [vmem:[%s257 + $0xd8] sm:$0xf] %vm3150, %v2948
          %3206 = vst.msk [vmem:[%s257 + $0xdc] sm:$0xf] %vm3150, %v2949
          %3207 = vst.msk [vmem:[%s257 + $0xe0] sm:$0xf] %vm3150, %v2950
          %3208 = vst.msk [vmem:[%s257 + $0xe4] sm:$0xf] %vm3150, %v2951
          %3209 = vst.msk [vmem:[%s257 + $0xe8] sm:$0xf] %vm3150, %v2952
          %3210 = vst.msk [vmem:[%s257 + $0xec] sm:$0xf] %vm3150, %v2953
          %3211 = vst.msk [vmem:[%s257 + $0xf0] sm:$0xf] %vm3150, %v2954
          %3212 = vst.msk [vmem:[%s257 + $0xf4] sm:$0xf] %vm3150, %v2955
          %3213 = vst.msk [vmem:[%s257 + $0xf8] sm:$0xf] %vm3150, %v2956
          %3214 = vst.msk [vmem:[%s257 + $0xfc] sm:$0xf] %vm3150, %v2957
          %3215 = vst.msk [vmem:[%s257 + $0x100] sm:$0xf] %vm3150, %v2958
          %3216 = vst.msk [vmem:[%s257 + $0x104] sm:$0xf] %vm3150, %v2959
          %3217 = vst.msk [vmem:[%s257 + $0x108] sm:$0xf] %vm3150, %v2960
          %3218 = vst.msk [vmem:[%s257 + $0x10c] sm:$0xf] %vm3150, %v2961
          %3219 = vst.msk [vmem:[%s257 + $0x110] sm:$0xf] %vm3150, %v2962
          %3220 = vst.msk [vmem:[%s257 + $0x114] sm:$0xf] %vm3150, %v2963
          %3221 = vst.msk [vmem:[%s257 + $0x118] sm:$0xf] %vm3150, %v2964
          %3222 = vst.msk [vmem:[%s257 + $0x11c] sm:$0xf] %vm3150, %v2965
          %3223 = vst.msk [vmem:[%s257 + $0x120] sm:$0xf] %vm3150, %v2966
          %3224 = vst.msk [vmem:[%s257 + $0x124] sm:$0xf] %vm3150, %v2967
          %3225 = vst.msk [vmem:[%s257 + $0x128] sm:$0xf] %vm3150, %v2968
          %3226 = vst.msk [vmem:[%s257 + $0x12c] sm:$0xf] %vm3150, %v2969
          %3227 = vst.msk [vmem:[%s257 + $0x130] sm:$0xf] %vm3150, %v2970
          %3228 = vst.msk [vmem:[%s257 + $0x134] sm:$0xf] %vm3150, %v2971
          %3229 = vst.msk [vmem:[%s257 + $0x138] sm:$0xf] %vm3150, %v2972
          %3230 = vst.msk [vmem:[%s257 + $0x13c] sm:$0xf] %vm3150, %v2973
          %3231 = vst.msk [vmem:[%s257 + $0x140] sm:$0xf] %vm3150, %v2974
          %3232 = vst.msk [vmem:[%s257 + $0x144] sm:$0xf] %vm3150, %v2975
          %3233 = vst.msk [vmem:[%s257 + $0x148] sm:$0xf] %vm3150, %v2976
          %3234 = vst.msk [vmem:[%s257 + $0x14c] sm:$0xf] %vm3150, %v2977
          %3235 = vst.msk [vmem:[%s257 + $0x150] sm:$0xf] %vm3150, %v2978
          %3236 = vst.msk [vmem:[%s257 + $0x154] sm:$0xf] %vm3150, %v2979
          %3237 = vst.msk [vmem:[%s257 + $0x158] sm:$0xf] %vm3150, %v2980
          %3238 = vst.msk [vmem:[%s257 + $0x15c] sm:$0xf] %vm3150, %v2981
          %3239 = vst.msk [vmem:[%s257 + $0x160] sm:$0xf] %vm3150, %v2982
          %3240 = vst.msk [vmem:[%s257 + $0x164] sm:$0xf] %vm3150, %v2983
          %3241 = vst.msk [vmem:[%s257 + $0x168] sm:$0xf] %vm3150, %v2984
          %3242 = vst.msk [vmem:[%s257 + $0x16c] sm:$0xf] %vm3150, %v2985
          %3243 = vst.msk [vmem:[%s257 + $0x170] sm:$0xf] %vm3150, %v2986
          %3244 = vst.msk [vmem:[%s257 + $0x174] sm:$0xf] %vm3150, %v2987
          %3245 = vst.msk [vmem:[%s257 + $0x178] sm:$0xf] %vm3150, %v2988
          %3246 = vst.msk [vmem:[%s257 + $0x17c] sm:$0xf] %vm3150, %v2989
          %3247 = vst.msk [vmem:[%s257 + $0x180] sm:$0xf] %vm3150, %v2990
          %3248 = vst.msk [vmem:[%s257 + $0x184] sm:$0xf] %vm3150, %v2991
          %3249 = vst.msk [vmem:[%s257 + $0x188] sm:$0xf] %vm3150, %v2992
          %3250 = vst.msk [vmem:[%s257 + $0x18c] sm:$0xf] %vm3150, %v2993
          %3251 = vst.msk [vmem:[%s257 + $0x190] sm:$0xf] %vm3150, %v2994
          %3252 = vst.msk [vmem:[%s257 + $0x194] sm:$0xf] %vm3150, %v2995
          %3253 = vst.msk [vmem:[%s257 + $0x198] sm:$0xf] %vm3150, %v2996
          %3254 = vst.msk [vmem:[%s257 + $0x19c] sm:$0xf] %vm3150, %v2997
          %3255 = vst.msk [vmem:[%s257 + $0x1a0] sm:$0xf] %vm3150, %v2998
          %3256 = vst.msk [vmem:[%s257 + $0x1a4] sm:$0xf] %vm3150, %v2999
          %3257 = vst.msk [vmem:[%s257 + $0x1a8] sm:$0xf] %vm3150, %v3000
          %3258 = vst.msk [vmem:[%s257 + $0x1ac] sm:$0xf] %vm3150, %v3001
          %3259 = vst.msk [vmem:[%s257 + $0x1b0] sm:$0xf] %vm3150, %v3002
          %3260 = vst.msk [vmem:[%s257 + $0x1b4] sm:$0xf] %vm3150, %v3003
          %3261 = vst.msk [vmem:[%s257 + $0x1b8] sm:$0xf] %vm3150, %v3004
          %3262 = vst.msk [vmem:[%s257 + $0x1bc] sm:$0xf] %vm3150, %v3005
          %3263 = vst.msk [vmem:[%s257 + $0x1c0] sm:$0xf] %vm3150, %v3006
          %3264 = vst.msk [vmem:[%s257 + $0x1c4] sm:$0xf] %vm3150, %v3007
          %3265 = vst.msk [vmem:[%s257 + $0x1c8] sm:$0xf] %vm3150, %v3008
          %3266 = vst.msk [vmem:[%s257 + $0x1cc] sm:$0xf] %vm3150, %v3009
          %3267 = vst.msk [vmem:[%s257 + $0x1d0] sm:$0xf] %vm3150, %v3010
          %3268 = vst.msk [vmem:[%s257 + $0x1d4] sm:$0xf] %vm3150, %v3011
          %3269 = vst.msk [vmem:[%s257 + $0x1d8] sm:$0xf] %vm3150, %v3012
          %3270 = vst.msk [vmem:[%s257 + $0x1dc] sm:$0xf] %vm3150, %v3013
          %3271 = vst.msk [vmem:[%s257 + $0x1e0] sm:$0xf] %vm3150, %v3014
          %3272 = vst.msk [vmem:[%s257 + $0x1e4] sm:$0xf] %vm3150, %v3015
          %3273 = vst.msk [vmem:[%s257 + $0x1e8] sm:$0xf] %vm3150, %v3016
          %3274 = vst.msk [vmem:[%s257 + $0x1ec] sm:$0xf] %vm3150, %v3017
          %3275 = vst.msk [vmem:[%s257 + $0x1f0] sm:$0xf] %vm3150, %v3018
          %3276 = vst.msk [vmem:[%s257 + $0x1f4] sm:$0xf] %vm3150, %v3019
          %3277 = vst.msk [vmem:[%s257 + $0x1f8] sm:$0xf] %vm3150, %v3020
          %3278 = vst.msk [vmem:[%s257 + $0x1fc] sm:$0xf] %vm3150, %v3021
        $region52: #{tpu_custom_call.1} parent=31 // pred_fallthru
          _
        %s3279 = sand.u32 %s132, 1
        %s3280 = scalar_lea.sflag [#allocation5], %s3279
        %s3281 = sand.u32 %s132, 1
        %s3282 = smul.addr %s3281, 512
        %s3283 = scalar_lea.vmem [#allocation9], %s3282
        // Predicated region
        $region53: #{tpu_custom_call.1} parent=31 // pred_check
          %p3284 = pneg %p142
        $region54: #{tpu_custom_call.1} parent=31 // pred_check_branch
          %3286 = sbr.rel (%p3284) target = $region56
        $region55: #{tpu_custom_call.1} parent=31 // pred_region
          %s3287 = smul.u32 128, %s26
          %s3289 = ssub.s32 8192, 8192
          %3290 = vsyncadd %s3280, %s3289
          %s3291 = sadd.s32 %s27, %s3287
          %s3292 = smul.addr %s3291, 64
          %s3293 = scalar_lea.hbm %s3, %s3292
          %s3294 = sshll.u32 %s3283, 4
          %s3295 = int_to_ptr.vmem [resolvable:$true] %s3294
          %3300 = dma.vmem_to_hbm [thread:$0]  %s3295, 8192, %s3293, %s3280, 64, 64, 4
        $region56: #{tpu_custom_call.1} parent=31 // pred_fallthru
          _
      $region32: #{tpu_custom_call.1} parent=5 // pred_fallthru
        _
      %p3301 = scmp.le.s32.totalorder 2, %s16
      // Predicated region
      $region57: #{tpu_custom_call.1} parent=5 // pred_check
        %p3302 = pneg %p3301
      $region58: #{tpu_custom_call.1} parent=5 // pred_check_branch
        %3304 = sbr.rel (%p3302) target = $region60
      $region59: #{tpu_custom_call.1} parent=5 // pred_region
        %s3305 = ssub.s32 %s16, 2
        // Predicated region
        $region61: #{tpu_custom_call.1} parent=59 // pred_check
          %p3306 = pneg %p148
        $region62: #{tpu_custom_call.1} parent=59 // pred_check_branch
          %3308 = sbr.rel (%p3306) target = $region64
        $region63: #{tpu_custom_call.1} parent=59 // pred_region
          %s3309 = sand.u32 %s133, 1
          %s3310 = scalar_lea.sflag [#allocation5], %s3309
          %s3311 = sand.u32 %s133, 1
          %s3312 = smul.addr %s3311, 512
          %s3313 = scalar_lea.vmem [#allocation9], %s3312
          %3314 = dma.done %s3310, 8192
        $region64: #{tpu_custom_call.1} parent=59 // pred_fallthru
          _
      $region60: #{tpu_custom_call.1} parent=5 // pred_fallthru
        _
    $region6: #{tpu_custom_call.1} parent=1 // loop_footer
      %s20 = sadd.s32 1, %s16
    $region7: #{tpu_custom_call.1} parent=1 // loop_footer_branch
      %15 = sbr.rel target = $region3
    $region8: #{tpu_custom_call.1} parent=1 // loop_exit
      _
    %3315 = vsyncpa [#allocation4], 1
    %s3316 = scalar_lea.sflag [#allocation4], 1
    %3317 = vsyncpa %s3316, 1
    %3318 = vsyncpa [#allocation7], 1
    %3319 = vsyncpa [#allocation5], 1
    %s3320 = scalar_lea.sflag [#allocation5], 1
    %3321 = vsyncpa %s3320, 1

</llo_original>
